<compile_context>
chip_gen: v7x
topology: tpu7x:2x2x1
jax: 0.10.0
libtpu: 0.0.40
codegen_flags: <defaults>
</compile_context>

<pallas_src>
import functools

import jax
import jax.numpy as jnp
from jax.experimental import pallas as pl
from jax.experimental.pallas import tpu as pltpu


def _round_up(x, m):
    return (x + m - 1) // m * m


# ----------------------------------------------------------------------------
# Fused kernel: CAM (max-pool + MLP) -> x*Mc -> SAM (pools + 7x7 conv) -> apply
# ----------------------------------------------------------------------------
def _attention_kernel(x_ref, w1_ref, b1_ref, w2t_ref, b2_ref, wb_ref, o_ref,
                      pmax_ref, pmean_ref, *, H, W, PADL):
    S = H * W

    # ---- ChannelAttention: spatial max (lane reduce) + 2-layer MLP (VPU, f32)
    mx = jnp.max(x_ref[0], axis=1, keepdims=True)                    # (C, 1)
    # layer 1: h[j] = relu(sum_c W1[c, j] * mx[c] + b1[j])   -> row (1, hid)
    h = jnp.maximum(
        jnp.sum(w1_ref[...] * mx, axis=0, keepdims=True) + b1_ref[...], 0.0)
    # layer 2: s[c] = sigmoid(sum_j W2t[c, j] * h[j] + b2[c]) -> col (C, 1)
    sig = jax.nn.sigmoid(
        jnp.sum(w2t_ref[...] * h, axis=1, keepdims=True) + b2_ref[...])
    # both branches of the PyTorch forward use the same max pool + fc:
    mc = jax.nn.sigmoid(sig + sig)                                    # (C, 1)

    # ---- CAM apply + SAM channel pools (C on sublanes, S on lanes) ----------
    y = x_ref[0] * mc                                                 # (C, S)
    cmax = jnp.max(y, axis=0, keepdims=True)                          # (1, S)
    cmean = jnp.mean(y, axis=0, keepdims=True)                        # (1, S)

    # ---- 7x7 conv (2->1) on the pooled maps, in the flattened-S domain ------
    # Zero-padded flat buffers handle vertical (row) out-of-range taps; the
    # horizontal (column) boundary is enforced with per-dx lane masks.
    pmax_ref[...] = jnp.zeros_like(pmax_ref)
    pmean_ref[...] = jnp.zeros_like(pmean_ref)
    pmax_ref[:, PADL:PADL + S] = cmax
    pmean_ref[:, PADL:PADL + S] = cmean

    col = jax.lax.broadcasted_iota(jnp.int32, (1, S), 1) % W          # x coord
    acc = jnp.full((1, S), wb_ref[98], jnp.float32)                   # conv bias
    for dy in range(7):
        for dx in range(7):
            start = PADL + (dy - 3) * W + (dx - 3)
            tap = (pmax_ref[:, start:start + S] * wb_ref[(dy * 7 + dx) * 2]
                   + pmean_ref[:, start:start + S] * wb_ref[(dy * 7 + dx) * 2 + 1])
            valid = (col >= 3 - dx) & (col < W + 3 - dx)
            acc = acc + jnp.where(valid, tap, 0.0)
    ms = jax.nn.sigmoid(acc)                                          # (1, S)

    # ---- final apply: out = (x * Mc) * Ms -----------------------------------
    o_ref[0] = y * ms


def attention_module(x_nchw, p):
    """Full AttentionModule forward.  NCHW in / NCHW out, like PyTorch."""
    x = x_nchw.astype(jnp.float32)
    n, c, h, w = x.shape
    s = h * w
    x3 = x.reshape(n, c, s)                  # free reshape: keep NCHW, S on lanes

    hid = p["fc1_w"].shape[1]
    w1 = p["fc1_w"]                          # (C, hid)
    b1 = p["fc1_b"].reshape(1, hid)          # row
    w2t = p["fc2_w"].T                       # (C, hid)
    b2 = p["fc2_b"].reshape(c, 1)            # col
    # conv weights + bias as 99 scalars in SMEM, ordered [dy, dx, in_ch], bias
    wb = jnp.concatenate(
        [p["sam_w"].reshape(-1), jnp.reshape(p["sam_b"], (1,))]).astype(jnp.float32)

    padl = _round_up(3 * w + 3, 128)         # flat zero margin (>= 3*W + 3)
    padw = s + 2 * padl

    blk_bytes = c * s * 4
    vmem_need = 4 * blk_bytes + 2 * 8 * padw * 4 + (1 << 21)
    kern = functools.partial(_attention_kernel, H=h, W=w, PADL=padl)
    out3 = pl.pallas_call(
        kern,
        out_shape=jax.ShapeDtypeStruct((n, c, s), jnp.float32),
        grid=(n,),
        in_specs=[
            pl.BlockSpec((1, c, s), lambda i: (i, 0, 0)),
            pl.BlockSpec((c, hid), lambda i: (0, 0)),
            pl.BlockSpec((1, hid), lambda i: (0, 0)),
            pl.BlockSpec((c, hid), lambda i: (0, 0)),
            pl.BlockSpec((c, 1), lambda i: (0, 0)),
            pl.BlockSpec(memory_space=pltpu.MemorySpace.SMEM),
        ],
        out_specs=pl.BlockSpec((1, c, s), lambda i: (i, 0, 0)),
        scratch_shapes=[pltpu.VMEM((1, padw), jnp.float32),
                        pltpu.VMEM((1, padw), jnp.float32)],
        compiler_params=pltpu.CompilerParams(
            dimension_semantics=("parallel",),
            vmem_limit_bytes=int(min(max(vmem_need, 16 * 2**20), 100 * 2**20))),
    )(x3, w1, b1, w2t, b2, wb)
    return out3.reshape(n, c, h, w)


# ----------------------------------------------------------------------------
# Pure-JAX reference (mirrors the PyTorch forward exactly) and synthetic params
# ----------------------------------------------------------------------------
def attention_module_reference(x_nchw, p):
    x = x_nchw.astype(jnp.float32)
    n, c, h, w = x.shape
    hp = jax.lax.Precision.HIGHEST
    mx = jnp.max(x, axis=(2, 3))                                      # (N, C)
    hh = jnp.maximum(jnp.dot(mx, p["fc1_w"], precision=hp) + p["fc1_b"], 0.0)
    s = jax.nn.sigmoid(jnp.dot(hh, p["fc2_w"], precision=hp) + p["fc2_b"])
    wgt = jax.nn.sigmoid(s + s)                                       # both branches = max
    y = x * wgt[:, :, None, None]
    cmax = jnp.max(y, axis=1, keepdims=True)
    cmean = jnp.mean(y, axis=1, keepdims=True)
    catp = jnp.pad(jnp.concatenate([cmax, cmean], axis=1),
                   ((0, 0), (0, 0), (3, 3), (3, 3)))
    acc = jnp.zeros((n, 1, h, w), jnp.float32) + p["sam_b"]
    for dy in range(7):
        for dx in range(7):
            for ci in range(2):
                acc = acc + catp[:, ci:ci + 1, dy:dy + h, dx:dx + w] * p["sam_w"][dy, dx, ci]
    return y * jax.nn.sigmoid(acc)


def build_params(key, c=64, r=0.5):
    hid = int(c * r)
    ks = jax.random.split(key, 6)

    def u(k, shape, fan_in):
        lim = 1.0 / float(fan_in) ** 0.5
        return jax.random.uniform(k, shape, jnp.float32, -lim, lim)

    # fc_AvgPool of the PyTorch module is never used in forward -> not built.
    return {
        "fc1_w": u(ks[0], (c, hid), c),
        "fc1_b": u(ks[1], (hid,), c),
        "fc2_w": u(ks[2], (hid, c), hid),
        "fc2_b": u(ks[3], (c,), hid),
        "sam_w": u(ks[4], (7, 7, 2), 7 * 7 * 2),   # [dy, dx, in_channel]
        "sam_b": u(ks[5], (), 7 * 7 * 2),
    }


# ----------------------------------------------------------------------------
if __name__ == "__main__":
    N, C, H, W = 2, 64, 16, 16          # module hard-codes 64 channels
    key = jax.random.PRNGKey(0)
    kx, kp = jax.random.split(key)
    x = jax.random.normal(kx, (N, C, H, W), dtype=jnp.float32)
    params = build_params(kp, c=C, r=0.5)

    fwd = jax.jit(lambda inp: attention_module(inp, params))
    out = jax.block_until_ready(fwd(x))

    assert out.shape == (N, C, H, W), out.shape
    assert bool(jnp.all(jnp.isfinite(out)))

    ref = attention_module_reference(x, params)
    err = float(jnp.max(jnp.abs(out - ref)))
    assert err < 1e-4, f"max abs err vs reference = {err}"
    print("KERNEL_OK")
</pallas_src>

<mosaic_0001>
module attributes {stable_mosaic.version = 11 : i64} {
  func.func @_attention_kernel(%arg0: i32, %arg1: memref<1x64x256xf32, #tpu.memory_space<vmem>>, %arg2: memref<64x32xf32, #tpu.memory_space<vmem>>, %arg3: memref<1x32xf32, #tpu.memory_space<vmem>>, %arg4: memref<64x32xf32, #tpu.memory_space<vmem>>, %arg5: memref<64x1xf32, #tpu.memory_space<vmem>>, %arg6: memref<99xf32, #tpu.memory_space<smem>>, %arg7: memref<1x64x256xf32, #tpu.memory_space<vmem>>, %arg8: memref<1x512xf32, #tpu.memory_space<vmem>>, %arg9: memref<1x512xf32, #tpu.memory_space<vmem>>) attributes {dimension_semantics = [#tpu.dimension_semantics<parallel>], iteration_bounds = array<i64: 2>, scalar_prefetch = 0 : i64, scratch_operands = 2 : i64, tpu.core_type = #tpu.core_type<tc>, window_params = [{transform_indices = @transform_0, window_bounds = array<i64: 1, 64, 256>}, {pipeline_mode = #tpu.pipeline_mode<synchronous>, transform_indices = @transform_1, window_bounds = array<i64: 64, 32>}, {pipeline_mode = #tpu.pipeline_mode<synchronous>, transform_indices = @transform_2, window_bounds = array<i64: 1, 32>}, {pipeline_mode = #tpu.pipeline_mode<synchronous>, transform_indices = @transform_3, window_bounds = array<i64: 64, 32>}, {pipeline_mode = #tpu.pipeline_mode<synchronous>, transform_indices = @transform_4, window_bounds = array<i64: 64, 1>}, {transform_indices = @transform_5, window_bounds = array<i64: 99>}, {transform_indices = @transform_6, window_bounds = array<i64: 1, 64, 256>}]} {
    %c0 = arith.constant 0 : index
    %c0_0 = arith.constant 0 : index
    %c0_1 = arith.constant 0 : index
    %0 = vector.load %arg1[%c0, %c0_0, %c0_1] : memref<1x64x256xf32, #tpu.memory_space<vmem>>, vector<1x64x256xf32>
    %1 = vector.shape_cast %0 : vector<1x64x256xf32> to vector<64x256xf32>
    %cst = arith.constant dense<0xFF800000> : vector<64xf32>
    %2 = vector.multi_reduction <maximumf>, %1, %cst [1] : vector<64x256xf32> to vector<64xf32>
    %3 = vector.shape_cast %2 : vector<64xf32> to vector<64x1xf32>
    %c0_2 = arith.constant 0 : index
    %c0_3 = arith.constant 0 : index
    %4 = vector.load %arg2[%c0_2, %c0_3] : memref<64x32xf32, #tpu.memory_space<vmem>>, vector<64x32xf32>
    %5 = vector.broadcast %3 : vector<64x1xf32> to vector<64x32xf32>
    %6 = arith.mulf %4, %5 : vector<64x32xf32>
    %cst_4 = arith.constant dense<0.000000e+00> : vector<32xf32>
    %7 = vector.multi_reduction <add>, %6, %cst_4 [0] : vector<64x32xf32> to vector<32xf32>
    %8 = vector.shape_cast %7 : vector<32xf32> to vector<1x32xf32>
    %c0_5 = arith.constant 0 : index
    %c0_6 = arith.constant 0 : index
    %9 = vector.load %arg3[%c0_5, %c0_6] : memref<1x32xf32, #tpu.memory_space<vmem>>, vector<1x32xf32>
    %10 = arith.addf %8, %9 : vector<1x32xf32>
    %cst_7 = arith.constant 0.000000e+00 : f32
    %11 = vector.broadcast %cst_7 : f32 to vector<1x32xf32>
    %12 = arith.maximumf %10, %11 : vector<1x32xf32>
    %c0_8 = arith.constant 0 : index
    %c0_9 = arith.constant 0 : index
    %13 = vector.load %arg4[%c0_8, %c0_9] : memref<64x32xf32, #tpu.memory_space<vmem>>, vector<64x32xf32>
    %14 = vector.broadcast %12 : vector<1x32xf32> to vector<64x32xf32>
    %15 = arith.mulf %13, %14 : vector<64x32xf32>
    %cst_10 = arith.constant dense<0.000000e+00> : vector<64xf32>
    %16 = vector.multi_reduction <add>, %15, %cst_10 [1] : vector<64x32xf32> to vector<64xf32>
    %17 = vector.shape_cast %16 : vector<64xf32> to vector<64x1xf32>
    %c0_11 = arith.constant 0 : index
    %c0_12 = arith.constant 0 : index
    %18 = vector.load %arg5[%c0_11, %c0_12] : memref<64x1xf32, #tpu.memory_space<vmem>>, vector<64x1xf32>
    %19 = arith.addf %17, %18 : vector<64x1xf32>
    %20 = arith.negf %19 : vector<64x1xf32>
    %21 = math.exp %20 : vector<64x1xf32>
    %cst_13 = arith.constant 1.000000e+00 : f32
    %22 = vector.broadcast %cst_13 : f32 to vector<64x1xf32>
    %23 = arith.addf %22, %21 : vector<64x1xf32>
    %24 = arith.divf %22, %23 : vector<64x1xf32>
    %25 = arith.addf %24, %24 : vector<64x1xf32>
    %26 = arith.negf %25 : vector<64x1xf32>
    %27 = math.exp %26 : vector<64x1xf32>
    %cst_14 = arith.constant 1.000000e+00 : f32
    %28 = vector.broadcast %cst_14 : f32 to vector<64x1xf32>
    %29 = arith.addf %28, %27 : vector<64x1xf32>
    %30 = arith.divf %28, %29 : vector<64x1xf32>
    %c0_15 = arith.constant 0 : index
    %c0_16 = arith.constant 0 : index
    %c0_17 = arith.constant 0 : index
    %31 = vector.load %arg1[%c0_15, %c0_16, %c0_17] : memref<1x64x256xf32, #tpu.memory_space<vmem>>, vector<1x64x256xf32>
    %32 = vector.shape_cast %31 : vector<1x64x256xf32> to vector<64x256xf32>
    %33 = vector.broadcast %30 : vector<64x1xf32> to vector<64x256xf32>
    %34 = arith.mulf %32, %33 : vector<64x256xf32>
    %cst_18 = arith.constant dense<0xFF800000> : vector<256xf32>
    %35 = vector.multi_reduction <maximumf>, %34, %cst_18 [0] : vector<64x256xf32> to vector<256xf32>
    %36 = vector.shape_cast %35 : vector<256xf32> to vector<1x256xf32>
    %cst_19 = arith.constant dense<0.000000e+00> : vector<256xf32>
    %37 = vector.multi_reduction <add>, %34, %cst_19 [0] : vector<64x256xf32> to vector<256xf32>
    %38 = vector.shape_cast %37 : vector<256xf32> to vector<1x256xf32>
    %cst_20 = arith.constant 6.400000e+01 : f32
    %39 = vector.broadcast %cst_20 : f32 to vector<1x256xf32>
    %40 = arith.divf %38, %39 : vector<1x256xf32>
    %cst_21 = arith.constant 0.000000e+00 : f32
    %41 = vector.broadcast %cst_21 : f32 to vector<1x512xf32>
    %c0_22 = arith.constant 0 : index
    %c0_23 = arith.constant 0 : index
    %42 = vector.load %arg8[%c0_22, %c0_23] : memref<1x512xf32, #tpu.memory_space<vmem>>, vector<1x512xf32>
    tpu.vector_store %arg8[%c0_22, %c0_23], %41 {strides = array<i32>} : memref<1x512xf32, #tpu.memory_space<vmem>>, vector<1x512xf32>,
    %cst_24 = arith.constant 0.000000e+00 : f32
    %43 = vector.broadcast %cst_24 : f32 to vector<1x512xf32>
    %c0_25 = arith.constant 0 : index
    %c0_26 = arith.constant 0 : index
    %44 = vector.load %arg9[%c0_25, %c0_26] : memref<1x512xf32, #tpu.memory_space<vmem>>, vector<1x512xf32>
    tpu.vector_store %arg9[%c0_25, %c0_26], %43 {strides = array<i32>} : memref<1x512xf32, #tpu.memory_space<vmem>>, vector<1x512xf32>,
    %c0_27 = arith.constant 0 : index
    %c128 = arith.constant 128 : index
    %45 = vector.load %arg8[%c0_27, %c128] : memref<1x512xf32, #tpu.memory_space<vmem>>, vector<1x256xf32>
    tpu.vector_store %arg8[%c0_27, %c128], %36 {strides = array<i32>} : memref<1x512xf32, #tpu.memory_space<vmem>>, vector<1x256xf32>,
    %c0_28 = arith.constant 0 : index
    %c128_29 = arith.constant 128 : index
    %46 = vector.load %arg9[%c0_28, %c128_29] : memref<1x512xf32, #tpu.memory_space<vmem>>, vector<1x256xf32>
    tpu.vector_store %arg9[%c0_28, %c128_29], %40 {strides = array<i32>} : memref<1x512xf32, #tpu.memory_space<vmem>>, vector<1x256xf32>,
    %47 = tpu.iota {dimensions = array<i32: 1>} : vector<1x256xi32>
    %c16_i32 = arith.constant 16 : i32
    %c0_i32 = arith.constant 0 : i32
    %48 = arith.cmpi eq, %c16_i32, %c0_i32 : i32
    %c1_i32 = arith.constant 1 : i32
    %49 = arith.select %48, %c1_i32, %c16_i32 : i32
    %50 = vector.broadcast %49 : i32 to vector<1x256xi32>
    %51 = arith.remsi %47, %50 : vector<1x256xi32>
    %c0_i32_30 = arith.constant 0 : i32
    %52 = vector.broadcast %c0_i32_30 : i32 to vector<1x256xi32>
    %53 = arith.cmpi ne, %51, %52 : vector<1x256xi32>
    %c0_i32_31 = arith.constant 0 : i32
    %54 = vector.broadcast %c0_i32_31 : i32 to vector<1x256xi32>
    %55 = arith.cmpi slt, %51, %54 : vector<1x256xi32>
    %c0_i32_32 = arith.constant 0 : i32
    %56 = arith.cmpi slt, %49, %c0_i32_32 : i32
    %57 = vector.broadcast %56 : i1 to vector<1x256xi1>
    %58 = vector.broadcast %57 : vector<1x256xi1> to vector<1x256xi1>
    %59 = arith.xori %55, %58 : vector<1x256xi1>
    %60 = arith.andi %59, %53 : vector<1x256xi1>
    %61 = vector.broadcast %49 : i32 to vector<1x256xi32>
    %62 = arith.addi %51, %61 : vector<1x256xi32>
    %63 = arith.select %60, %62, %51 : vector<1x256xi1>, vector<1x256xi32>
    %c98 = arith.constant 98 : index
    %64 = memref.load %arg6[%c98] : memref<99xf32, #tpu.memory_space<smem>>
    %65 = vector.broadcast %64 : f32 to vector<1x256xf32>
    %c0_33 = arith.constant 0 : index
    %c77 = arith.constant 77 : index
    %66 = vector.load %arg8[%c0_33, %c77] : memref<1x512xf32, #tpu.memory_space<vmem>>, vector<1x256xf32>
    %c0_34 = arith.constant 0 : index
    %67 = memref.load %arg6[%c0_34] : memref<99xf32, #tpu.memory_space<smem>>
    %68 = vector.broadcast %67 : f32 to vector<1x256xf32>
    %69 = arith.mulf %66, %68 : vector<1x256xf32>
    %c0_35 = arith.constant 0 : index
    %c77_36 = arith.constant 77 : index
    %70 = vector.load %arg9[%c0_35, %c77_36] : memref<1x512xf32, #tpu.memory_space<vmem>>, vector<1x256xf32>
    %c1 = arith.constant 1 : index
    %71 = memref.load %arg6[%c1] : memref<99xf32, #tpu.memory_space<smem>>
    %72 = vector.broadcast %71 : f32 to vector<1x256xf32>
    %73 = arith.mulf %70, %72 : vector<1x256xf32>
    %74 = arith.addf %69, %73 : vector<1x256xf32>
    %c3_i32 = arith.constant 3 : i32
    %75 = vector.broadcast %c3_i32 : i32 to vector<1x256xi32>
    %76 = arith.cmpi sge, %63, %75 : vector<1x256xi32>
    %c19_i32 = arith.constant 19 : i32
    %77 = vector.broadcast %c19_i32 : i32 to vector<1x256xi32>
    %78 = arith.cmpi slt, %63, %77 : vector<1x256xi32>
    %79 = arith.andi %76, %78 : vector<1x256xi1>
    %cst_37 = arith.constant 0.000000e+00 : f32
    %80 = vector.broadcast %cst_37 : f32 to vector<1x256xf32>
    %81 = arith.select %79, %74, %80 : vector<1x256xi1>, vector<1x256xf32>
    %82 = arith.addf %65, %81 : vector<1x256xf32>
    %c0_38 = arith.constant 0 : index
    %c78 = arith.constant 78 : index
    %83 = vector.load %arg8[%c0_38, %c78] : memref<1x512xf32, #tpu.memory_space<vmem>>, vector<1x256xf32>
    %c2 = arith.constant 2 : index
    %84 = memref.load %arg6[%c2] : memref<99xf32, #tpu.memory_space<smem>>
    %85 = vector.broadcast %84 : f32 to vector<1x256xf32>
    %86 = arith.mulf %83, %85 : vector<1x256xf32>
    %c0_39 = arith.constant 0 : index
    %c78_40 = arith.constant 78 : index
    %87 = vector.load %arg9[%c0_39, %c78_40] : memref<1x512xf32, #tpu.memory_space<vmem>>, vector<1x256xf32>
    %c3 = arith.constant 3 : index
    %88 = memref.load %arg6[%c3] : memref<99xf32, #tpu.memory_space<smem>>
    %89 = vector.broadcast %88 : f32 to vector<1x256xf32>
    %90 = arith.mulf %87, %89 : vector<1x256xf32>
    %91 = arith.addf %86, %90 : vector<1x256xf32>
    %c2_i32 = arith.constant 2 : i32
    %92 = vector.broadcast %c2_i32 : i32 to vector<1x256xi32>
    %93 = arith.cmpi sge, %63, %92 : vector<1x256xi32>
    %c18_i32 = arith.constant 18 : i32
    %94 = vector.broadcast %c18_i32 : i32 to vector<1x256xi32>
    %95 = arith.cmpi slt, %63, %94 : vector<1x256xi32>
    %96 = arith.andi %93, %95 : vector<1x256xi1>
    %cst_41 = arith.constant 0.000000e+00 : f32
    %97 = vector.broadcast %cst_41 : f32 to vector<1x256xf32>
    %98 = arith.select %96, %91, %97 : vector<1x256xi1>, vector<1x256xf32>
    %99 = arith.addf %82, %98 : vector<1x256xf32>
    %c0_42 = arith.constant 0 : index
    %c79 = arith.constant 79 : index
    %100 = vector.load %arg8[%c0_42, %c79] : memref<1x512xf32, #tpu.memory_space<vmem>>, vector<1x256xf32>
    %c4 = arith.constant 4 : index
    %101 = memref.load %arg6[%c4] : memref<99xf32, #tpu.memory_space<smem>>
    %102 = vector.broadcast %101 : f32 to vector<1x256xf32>
    %103 = arith.mulf %100, %102 : vector<1x256xf32>
    %c0_43 = arith.constant 0 : index
    %c79_44 = arith.constant 79 : index
    %104 = vector.load %arg9[%c0_43, %c79_44] : memref<1x512xf32, #tpu.memory_space<vmem>>, vector<1x256xf32>
    %c5 = arith.constant 5 : index
    %105 = memref.load %arg6[%c5] : memref<99xf32, #tpu.memory_space<smem>>
    %106 = vector.broadcast %105 : f32 to vector<1x256xf32>
    %107 = arith.mulf %104, %106 : vector<1x256xf32>
    %108 = arith.addf %103, %107 : vector<1x256xf32>
    %c1_i32_45 = arith.constant 1 : i32
    %109 = vector.broadcast %c1_i32_45 : i32 to vector<1x256xi32>
    %110 = arith.cmpi sge, %63, %109 : vector<1x256xi32>
    %c17_i32 = arith.constant 17 : i32
    %111 = vector.broadcast %c17_i32 : i32 to vector<1x256xi32>
    %112 = arith.cmpi slt, %63, %111 : vector<1x256xi32>
    %113 = arith.andi %110, %112 : vector<1x256xi1>
    %cst_46 = arith.constant 0.000000e+00 : f32
    %114 = vector.broadcast %cst_46 : f32 to vector<1x256xf32>
    %115 = arith.select %113, %108, %114 : vector<1x256xi1>, vector<1x256xf32>
    %116 = arith.addf %99, %115 : vector<1x256xf32>
    %c0_47 = arith.constant 0 : index
    %c80 = arith.constant 80 : index
    %117 = vector.load %arg8[%c0_47, %c80] : memref<1x512xf32, #tpu.memory_space<vmem>>, vector<1x256xf32>
    %c6 = arith.constant 6 : index
    %118 = memref.load %arg6[%c6] : memref<99xf32, #tpu.memory_space<smem>>
    %119 = vector.broadcast %118 : f32 to vector<1x256xf32>
    %120 = arith.mulf %117, %119 : vector<1x256xf32>
    %c0_48 = arith.constant 0 : index
    %c80_49 = arith.constant 80 : index
    %121 = vector.load %arg9[%c0_48, %c80_49] : memref<1x512xf32, #tpu.memory_space<vmem>>, vector<1x256xf32>
    %c7 = arith.constant 7 : index
    %122 = memref.load %arg6[%c7] : memref<99xf32, #tpu.memory_space<smem>>
    %123 = vector.broadcast %122 : f32 to vector<1x256xf32>
    %124 = arith.mulf %121, %123 : vector<1x256xf32>
    %125 = arith.addf %120, %124 : vector<1x256xf32>
    %c0_i32_50 = arith.constant 0 : i32
    %126 = vector.broadcast %c0_i32_50 : i32 to vector<1x256xi32>
    %127 = arith.cmpi sge, %63, %126 : vector<1x256xi32>
    %c16_i32_51 = arith.constant 16 : i32
    %128 = vector.broadcast %c16_i32_51 : i32 to vector<1x256xi32>
    %129 = arith.cmpi slt, %63, %128 : vector<1x256xi32>
    %130 = arith.andi %127, %129 : vector<1x256xi1>
    %cst_52 = arith.constant 0.000000e+00 : f32
    %131 = vector.broadcast %cst_52 : f32 to vector<1x256xf32>
    %132 = arith.select %130, %125, %131 : vector<1x256xi1>, vector<1x256xf32>
    %133 = arith.addf %116, %132 : vector<1x256xf32>
    %c0_53 = arith.constant 0 : index
    %c81 = arith.constant 81 : index
    %134 = vector.load %arg8[%c0_53, %c81] : memref<1x512xf32, #tpu.memory_space<vmem>>, vector<1x256xf32>
    %c8 = arith.constant 8 : index
    %135 = memref.load %arg6[%c8] : memref<99xf32, #tpu.memory_space<smem>>
    %136 = vector.broadcast %135 : f32 to vector<1x256xf32>
    %137 = arith.mulf %134, %136 : vector<1x256xf32>
    %c0_54 = arith.constant 0 : index
    %c81_55 = arith.constant 81 : index
    %138 = vector.load %arg9[%c0_54, %c81_55] : memref<1x512xf32, #tpu.memory_space<vmem>>, vector<1x256xf32>
    %c9 = arith.constant 9 : index
    %139 = memref.load %arg6[%c9] : memref<99xf32, #tpu.memory_space<smem>>
    %140 = vector.broadcast %139 : f32 to vector<1x256xf32>
    %141 = arith.mulf %138, %140 : vector<1x256xf32>
    %142 = arith.addf %137, %141 : vector<1x256xf32>
    %c-1_i32 = arith.constant -1 : i32
    %143 = vector.broadcast %c-1_i32 : i32 to vector<1x256xi32>
    %144 = arith.cmpi sge, %63, %143 : vector<1x256xi32>
    %c15_i32 = arith.constant 15 : i32
    %145 = vector.broadcast %c15_i32 : i32 to vector<1x256xi32>
    %146 = arith.cmpi slt, %63, %145 : vector<1x256xi32>
    %147 = arith.andi %144, %146 : vector<1x256xi1>
    %cst_56 = arith.constant 0.000000e+00 : f32
    %148 = vector.broadcast %cst_56 : f32 to vector<1x256xf32>
    %149 = arith.select %147, %142, %148 : vector<1x256xi1>, vector<1x256xf32>
    %150 = arith.addf %133, %149 : vector<1x256xf32>
    %c0_57 = arith.constant 0 : index
    %c82 = arith.constant 82 : index
    %151 = vector.load %arg8[%c0_57, %c82] : memref<1x512xf32, #tpu.memory_space<vmem>>, vector<1x256xf32>
    %c10 = arith.constant 10 : index
    %152 = memref.load %arg6[%c10] : memref<99xf32, #tpu.memory_space<smem>>
    %153 = vector.broadcast %152 : f32 to vector<1x256xf32>
    %154 = arith.mulf %151, %153 : vector<1x256xf32>
    %c0_58 = arith.constant 0 : index
    %c82_59 = arith.constant 82 : index
    %155 = vector.load %arg9[%c0_58, %c82_59] : memref<1x512xf32, #tpu.memory_space<vmem>>, vector<1x256xf32>
    %c11 = arith.constant 11 : index
    %156 = memref.load %arg6[%c11] : memref<99xf32, #tpu.memory_space<smem>>
    %157 = vector.broadcast %156 : f32 to vector<1x256xf32>
    %158 = arith.mulf %155, %157 : vector<1x256xf32>
    %159 = arith.addf %154, %158 : vector<1x256xf32>
    %c-2_i32 = arith.constant -2 : i32
    %160 = vector.broadcast %c-2_i32 : i32 to vector<1x256xi32>
    %161 = arith.cmpi sge, %63, %160 : vector<1x256xi32>
    %c14_i32 = arith.constant 14 : i32
    %162 = vector.broadcast %c14_i32 : i32 to vector<1x256xi32>
    %163 = arith.cmpi slt, %63, %162 : vector<1x256xi32>
    %164 = arith.andi %161, %163 : vector<1x256xi1>
    %cst_60 = arith.constant 0.000000e+00 : f32
    %165 = vector.broadcast %cst_60 : f32 to vector<1x256xf32>
    %166 = arith.select %164, %159, %165 : vector<1x256xi1>, vector<1x256xf32>
    %167 = arith.addf %150, %166 : vector<1x256xf32>
    %c0_61 = arith.constant 0 : index
    %c83 = arith.constant 83 : index
    %168 = vector.load %arg8[%c0_61, %c83] : memref<1x512xf32, #tpu.memory_space<vmem>>, vector<1x256xf32>
    %c12 = arith.constant 12 : index
    %169 = memref.load %arg6[%c12] : memref<99xf32, #tpu.memory_space<smem>>
    %170 = vector.broadcast %169 : f32 to vector<1x256xf32>
    %171 = arith.mulf %168, %170 : vector<1x256xf32>
    %c0_62 = arith.constant 0 : index
    %c83_63 = arith.constant 83 : index
    %172 = vector.load %arg9[%c0_62, %c83_63] : memref<1x512xf32, #tpu.memory_space<vmem>>, vector<1x256xf32>
    %c13 = arith.constant 13 : index
    %173 = memref.load %arg6[%c13] : memref<99xf32, #tpu.memory_space<smem>>
    %174 = vector.broadcast %173 : f32 to vector<1x256xf32>
    %175 = arith.mulf %172, %174 : vector<1x256xf32>
    %176 = arith.addf %171, %175 : vector<1x256xf32>
    %c-3_i32 = arith.constant -3 : i32
    %177 = vector.broadcast %c-3_i32 : i32 to vector<1x256xi32>
    %178 = arith.cmpi sge, %63, %177 : vector<1x256xi32>
    %c13_i32 = arith.constant 13 : i32
    %179 = vector.broadcast %c13_i32 : i32 to vector<1x256xi32>
    %180 = arith.cmpi slt, %63, %179 : vector<1x256xi32>
    %181 = arith.andi %178, %180 : vector<1x256xi1>
    %cst_64 = arith.constant 0.000000e+00 : f32
    %182 = vector.broadcast %cst_64 : f32 to vector<1x256xf32>
    %183 = arith.select %181, %176, %182 : vector<1x256xi1>, vector<1x256xf32>
    %184 = arith.addf %167, %183 : vector<1x256xf32>
    %c0_65 = arith.constant 0 : index
    %c93 = arith.constant 93 : index
    %185 = vector.load %arg8[%c0_65, %c93] : memref<1x512xf32, #tpu.memory_space<vmem>>, vector<1x256xf32>
    %c14 = arith.constant 14 : index
    %186 = memref.load %arg6[%c14] : memref<99xf32, #tpu.memory_space<smem>>
    %187 = vector.broadcast %186 : f32 to vector<1x256xf32>
    %188 = arith.mulf %185, %187 : vector<1x256xf32>
    %c0_66 = arith.constant 0 : index
    %c93_67 = arith.constant 93 : index
    %189 = vector.load %arg9[%c0_66, %c93_67] : memref<1x512xf32, #tpu.memory_space<vmem>>, vector<1x256xf32>
    %c15 = arith.constant 15 : index
    %190 = memref.load %arg6[%c15] : memref<99xf32, #tpu.memory_space<smem>>
    %191 = vector.broadcast %190 : f32 to vector<1x256xf32>
    %192 = arith.mulf %189, %191 : vector<1x256xf32>
    %193 = arith.addf %188, %192 : vector<1x256xf32>
    %c3_i32_68 = arith.constant 3 : i32
    %194 = vector.broadcast %c3_i32_68 : i32 to vector<1x256xi32>
    %195 = arith.cmpi sge, %63, %194 : vector<1x256xi32>
    %c19_i32_69 = arith.constant 19 : i32
    %196 = vector.broadcast %c19_i32_69 : i32 to vector<1x256xi32>
    %197 = arith.cmpi slt, %63, %196 : vector<1x256xi32>
    %198 = arith.andi %195, %197 : vector<1x256xi1>
    %cst_70 = arith.constant 0.000000e+00 : f32
    %199 = vector.broadcast %cst_70 : f32 to vector<1x256xf32>
    %200 = arith.select %198, %193, %199 : vector<1x256xi1>, vector<1x256xf32>
    %201 = arith.addf %184, %200 : vector<1x256xf32>
    %c0_71 = arith.constant 0 : index
    %c94 = arith.constant 94 : index
    %202 = vector.load %arg8[%c0_71, %c94] : memref<1x512xf32, #tpu.memory_space<vmem>>, vector<1x256xf32>
    %c16 = arith.constant 16 : index
    %203 = memref.load %arg6[%c16] : memref<99xf32, #tpu.memory_space<smem>>
    %204 = vector.broadcast %203 : f32 to vector<1x256xf32>
    %205 = arith.mulf %202, %204 : vector<1x256xf32>
    %c0_72 = arith.constant 0 : index
    %c94_73 = arith.constant 94 : index
    %206 = vector.load %arg9[%c0_72, %c94_73] : memref<1x512xf32, #tpu.memory_space<vmem>>, vector<1x256xf32>
    %c17 = arith.constant 17 : index
    %207 = memref.load %arg6[%c17] : memref<99xf32, #tpu.memory_space<smem>>
    %208 = vector.broadcast %207 : f32 to vector<1x256xf32>
    %209 = arith.mulf %206, %208 : vector<1x256xf32>
    %210 = arith.addf %205, %209 : vector<1x256xf32>
    %c2_i32_74 = arith.constant 2 : i32
    %211 = vector.broadcast %c2_i32_74 : i32 to vector<1x256xi32>
    %212 = arith.cmpi sge, %63, %211 : vector<1x256xi32>
    %c18_i32_75 = arith.constant 18 : i32
    %213 = vector.broadcast %c18_i32_75 : i32 to vector<1x256xi32>
    %214 = arith.cmpi slt, %63, %213 : vector<1x256xi32>
    %215 = arith.andi %212, %214 : vector<1x256xi1>
    %cst_76 = arith.constant 0.000000e+00 : f32
    %216 = vector.broadcast %cst_76 : f32 to vector<1x256xf32>
    %217 = arith.select %215, %210, %216 : vector<1x256xi1>, vector<1x256xf32>
    %218 = arith.addf %201, %217 : vector<1x256xf32>
    %c0_77 = arith.constant 0 : index
    %c95 = arith.constant 95 : index
    %219 = vector.load %arg8[%c0_77, %c95] : memref<1x512xf32, #tpu.memory_space<vmem>>, vector<1x256xf32>
    %c18 = arith.constant 18 : index
    %220 = memref.load %arg6[%c18] : memref<99xf32, #tpu.memory_space<smem>>
    %221 = vector.broadcast %220 : f32 to vector<1x256xf32>
    %222 = arith.mulf %219, %221 : vector<1x256xf32>
    %c0_78 = arith.constant 0 : index
    %c95_79 = arith.constant 95 : index
    %223 = vector.load %arg9[%c0_78, %c95_79] : memref<1x512xf32, #tpu.memory_space<vmem>>, vector<1x256xf32>
    %c19 = arith.constant 19 : index
    %224 = memref.load %arg6[%c19] : memref<99xf32, #tpu.memory_space<smem>>
    %225 = vector.broadcast %224 : f32 to vector<1x256xf32>
    %226 = arith.mulf %223, %225 : vector<1x256xf32>
    %227 = arith.addf %222, %226 : vector<1x256xf32>
    %c1_i32_80 = arith.constant 1 : i32
    %228 = vector.broadcast %c1_i32_80 : i32 to vector<1x256xi32>
    %229 = arith.cmpi sge, %63, %228 : vector<1x256xi32>
    %c17_i32_81 = arith.constant 17 : i32
    %230 = vector.broadcast %c17_i32_81 : i32 to vector<1x256xi32>
    %231 = arith.cmpi slt, %63, %230 : vector<1x256xi32>
    %232 = arith.andi %229, %231 : vector<1x256xi1>
    %cst_82 = arith.constant 0.000000e+00 : f32
    %233 = vector.broadcast %cst_82 : f32 to vector<1x256xf32>
    %234 = arith.select %232, %227, %233 : vector<1x256xi1>, vector<1x256xf32>
    %235 = arith.addf %218, %234 : vector<1x256xf32>
    %c0_83 = arith.constant 0 : index
    %c96 = arith.constant 96 : index
    %236 = vector.load %arg8[%c0_83, %c96] : memref<1x512xf32, #tpu.memory_space<vmem>>, vector<1x256xf32>
    %c20 = arith.constant 20 : index
    %237 = memref.load %arg6[%c20] : memref<99xf32, #tpu.memory_space<smem>>
    %238 = vector.broadcast %237 : f32 to vector<1x256xf32>
    %239 = arith.mulf %236, %238 : vector<1x256xf32>
    %c0_84 = arith.constant 0 : index
    %c96_85 = arith.constant 96 : index
    %240 = vector.load %arg9[%c0_84, %c96_85] : memref<1x512xf32, #tpu.memory_space<vmem>>, vector<1x256xf32>
    %c21 = arith.constant 21 : index
    %241 = memref.load %arg6[%c21] : memref<99xf32, #tpu.memory_space<smem>>
    %242 = vector.broadcast %241 : f32 to vector<1x256xf32>
    %243 = arith.mulf %240, %242 : vector<1x256xf32>
    %244 = arith.addf %239, %243 : vector<1x256xf32>
    %c0_i32_86 = arith.constant 0 : i32
    %245 = vector.broadcast %c0_i32_86 : i32 to vector<1x256xi32>
    %246 = arith.cmpi sge, %63, %245 : vector<1x256xi32>
    %c16_i32_87 = arith.constant 16 : i32
    %247 = vector.broadcast %c16_i32_87 : i32 to vector<1x256xi32>
    %248 = arith.cmpi slt, %63, %247 : vector<1x256xi32>
    %249 = arith.andi %246, %248 : vector<1x256xi1>
    %cst_88 = arith.constant 0.000000e+00 : f32
    %250 = vector.broadcast %cst_88 : f32 to vector<1x256xf32>
    %251 = arith.select %249, %244, %250 : vector<1x256xi1>, vector<1x256xf32>
    %252 = arith.addf %235, %251 : vector<1x256xf32>
    %c0_89 = arith.constant 0 : index
    %c97 = arith.constant 97 : index
    %253 = vector.load %arg8[%c0_89, %c97] : memref<1x512xf32, #tpu.memory_space<vmem>>, vector<1x256xf32>
    %c22 = arith.constant 22 : index
    %254 = memref.load %arg6[%c22] : memref<99xf32, #tpu.memory_space<smem>>
    %255 = vector.broadcast %254 : f32 to vector<1x256xf32>
    %256 = arith.mulf %253, %255 : vector<1x256xf32>
    %c0_90 = arith.constant 0 : index
    %c97_91 = arith.constant 97 : index
    %257 = vector.load %arg9[%c0_90, %c97_91] : memref<1x512xf32, #tpu.memory_space<vmem>>, vector<1x256xf32>
    %c23 = arith.constant 23 : index
    %258 = memref.load %arg6[%c23] : memref<99xf32, #tpu.memory_space<smem>>
    %259 = vector.broadcast %258 : f32 to vector<1x256xf32>
    %260 = arith.mulf %257, %259 : vector<1x256xf32>
    %261 = arith.addf %256, %260 : vector<1x256xf32>
    %c-1_i32_92 = arith.constant -1 : i32
    %262 = vector.broadcast %c-1_i32_92 : i32 to vector<1x256xi32>
    %263 = arith.cmpi sge, %63, %262 : vector<1x256xi32>
    %c15_i32_93 = arith.constant 15 : i32
    %264 = vector.broadcast %c15_i32_93 : i32 to vector<1x256xi32>
    %265 = arith.cmpi slt, %63, %264 : vector<1x256xi32>
    %266 = arith.andi %263, %265 : vector<1x256xi1>
    %cst_94 = arith.constant 0.000000e+00 : f32
    %267 = vector.broadcast %cst_94 : f32 to vector<1x256xf32>
    %268 = arith.select %266, %261, %267 : vector<1x256xi1>, vector<1x256xf32>
    %269 = arith.addf %252, %268 : vector<1x256xf32>
    %c0_95 = arith.constant 0 : index
    %c98_96 = arith.constant 98 : index
    %270 = vector.load %arg8[%c0_95, %c98_96] : memref<1x512xf32, #tpu.memory_space<vmem>>, vector<1x256xf32>
    %c24 = arith.constant 24 : index
    %271 = memref.load %arg6[%c24] : memref<99xf32, #tpu.memory_space<smem>>
    %272 = vector.broadcast %271 : f32 to vector<1x256xf32>
    %273 = arith.mulf %270, %272 : vector<1x256xf32>
    %c0_97 = arith.constant 0 : index
    %c98_98 = arith.constant 98 : index
    %274 = vector.load %arg9[%c0_97, %c98_98] : memref<1x512xf32, #tpu.memory_space<vmem>>, vector<1x256xf32>
    %c25 = arith.constant 25 : index
    %275 = memref.load %arg6[%c25] : memref<99xf32, #tpu.memory_space<smem>>
    %276 = vector.broadcast %275 : f32 to vector<1x256xf32>
    %277 = arith.mulf %274, %276 : vector<1x256xf32>
    %278 = arith.addf %273, %277 : vector<1x256xf32>
    %c-2_i32_99 = arith.constant -2 : i32
    %279 = vector.broadcast %c-2_i32_99 : i32 to vector<1x256xi32>
    %280 = arith.cmpi sge, %63, %279 : vector<1x256xi32>
    %c14_i32_100 = arith.constant 14 : i32
    %281 = vector.broadcast %c14_i32_100 : i32 to vector<1x256xi32>
    %282 = arith.cmpi slt, %63, %281 : vector<1x256xi32>
    %283 = arith.andi %280, %282 : vector<1x256xi1>
    %cst_101 = arith.constant 0.000000e+00 : f32
    %284 = vector.broadcast %cst_101 : f32 to vector<1x256xf32>
    %285 = arith.select %283, %278, %284 : vector<1x256xi1>, vector<1x256xf32>
    %286 = arith.addf %269, %285 : vector<1x256xf32>
    %c0_102 = arith.constant 0 : index
    %c99 = arith.constant 99 : index
    %287 = vector.load %arg8[%c0_102, %c99] : memref<1x512xf32, #tpu.memory_space<vmem>>, vector<1x256xf32>
    %c26 = arith.constant 26 : index
    %288 = memref.load %arg6[%c26] : memref<99xf32, #tpu.memory_space<smem>>
    %289 = vector.broadcast %288 : f32 to vector<1x256xf32>
    %290 = arith.mulf %287, %289 : vector<1x256xf32>
    %c0_103 = arith.constant 0 : index
    %c99_104 = arith.constant 99 : index
    %291 = vector.load %arg9[%c0_103, %c99_104] : memref<1x512xf32, #tpu.memory_space<vmem>>, vector<1x256xf32>
    %c27 = arith.constant 27 : index
    %292 = memref.load %arg6[%c27] : memref<99xf32, #tpu.memory_space<smem>>
    %293 = vector.broadcast %292 : f32 to vector<1x256xf32>
    %294 = arith.mulf %291, %293 : vector<1x256xf32>
    %295 = arith.addf %290, %294 : vector<1x256xf32>
    %c-3_i32_105 = arith.constant -3 : i32
    %296 = vector.broadcast %c-3_i32_105 : i32 to vector<1x256xi32>
    %297 = arith.cmpi sge, %63, %296 : vector<1x256xi32>
    %c13_i32_106 = arith.constant 13 : i32
    %298 = vector.broadcast %c13_i32_106 : i32 to vector<1x256xi32>
    %299 = arith.cmpi slt, %63, %298 : vector<1x256xi32>
    %300 = arith.andi %297, %299 : vector<1x256xi1>
    %cst_107 = arith.constant 0.000000e+00 : f32
    %301 = vector.broadcast %cst_107 : f32 to vector<1x256xf32>
    %302 = arith.select %300, %295, %301 : vector<1x256xi1>, vector<1x256xf32>
    %303 = arith.addf %286, %302 : vector<1x256xf32>
    %c0_108 = arith.constant 0 : index
    %c109 = arith.constant 109 : index
    %304 = vector.load %arg8[%c0_108, %c109] : memref<1x512xf32, #tpu.memory_space<vmem>>, vector<1x256xf32>
    %c28 = arith.constant 28 : index
    %305 = memref.load %arg6[%c28] : memref<99xf32, #tpu.memory_space<smem>>
    %306 = vector.broadcast %305 : f32 to vector<1x256xf32>
    %307 = arith.mulf %304, %306 : vector<1x256xf32>
    %c0_109 = arith.constant 0 : index
    %c109_110 = arith.constant 109 : index
    %308 = vector.load %arg9[%c0_109, %c109_110] : memref<1x512xf32, #tpu.memory_space<vmem>>, vector<1x256xf32>
    %c29 = arith.constant 29 : index
    %309 = memref.load %arg6[%c29] : memref<99xf32, #tpu.memory_space<smem>>
    %310 = vector.broadcast %309 : f32 to vector<1x256xf32>
    %311 = arith.mulf %308, %310 : vector<1x256xf32>
    %312 = arith.addf %307, %311 : vector<1x256xf32>
    %c3_i32_111 = arith.constant 3 : i32
    %313 = vector.broadcast %c3_i32_111 : i32 to vector<1x256xi32>
    %314 = arith.cmpi sge, %63, %313 : vector<1x256xi32>
    %c19_i32_112 = arith.constant 19 : i32
    %315 = vector.broadcast %c19_i32_112 : i32 to vector<1x256xi32>
    %316 = arith.cmpi slt, %63, %315 : vector<1x256xi32>
    %317 = arith.andi %314, %316 : vector<1x256xi1>
    %cst_113 = arith.constant 0.000000e+00 : f32
    %318 = vector.broadcast %cst_113 : f32 to vector<1x256xf32>
    %319 = arith.select %317, %312, %318 : vector<1x256xi1>, vector<1x256xf32>
    %320 = arith.addf %303, %319 : vector<1x256xf32>
    %c0_114 = arith.constant 0 : index
    %c110 = arith.constant 110 : index
    %321 = vector.load %arg8[%c0_114, %c110] : memref<1x512xf32, #tpu.memory_space<vmem>>, vector<1x256xf32>
    %c30 = arith.constant 30 : index
    %322 = memref.load %arg6[%c30] : memref<99xf32, #tpu.memory_space<smem>>
    %323 = vector.broadcast %322 : f32 to vector<1x256xf32>
    %324 = arith.mulf %321, %323 : vector<1x256xf32>
    %c0_115 = arith.constant 0 : index
    %c110_116 = arith.constant 110 : index
    %325 = vector.load %arg9[%c0_115, %c110_116] : memref<1x512xf32, #tpu.memory_space<vmem>>, vector<1x256xf32>
    %c31 = arith.constant 31 : index
    %326 = memref.load %arg6[%c31] : memref<99xf32, #tpu.memory_space<smem>>
    %327 = vector.broadcast %326 : f32 to vector<1x256xf32>
    %328 = arith.mulf %325, %327 : vector<1x256xf32>
    %329 = arith.addf %324, %328 : vector<1x256xf32>
    %c2_i32_117 = arith.constant 2 : i32
    %330 = vector.broadcast %c2_i32_117 : i32 to vector<1x256xi32>
    %331 = arith.cmpi sge, %63, %330 : vector<1x256xi32>
    %c18_i32_118 = arith.constant 18 : i32
    %332 = vector.broadcast %c18_i32_118 : i32 to vector<1x256xi32>
    %333 = arith.cmpi slt, %63, %332 : vector<1x256xi32>
    %334 = arith.andi %331, %333 : vector<1x256xi1>
    %cst_119 = arith.constant 0.000000e+00 : f32
    %335 = vector.broadcast %cst_119 : f32 to vector<1x256xf32>
    %336 = arith.select %334, %329, %335 : vector<1x256xi1>, vector<1x256xf32>
    %337 = arith.addf %320, %336 : vector<1x256xf32>
    %c0_120 = arith.constant 0 : index
    %c111 = arith.constant 111 : index
    %338 = vector.load %arg8[%c0_120, %c111] : memref<1x512xf32, #tpu.memory_space<vmem>>, vector<1x256xf32>
    %c32 = arith.constant 32 : index
    %339 = memref.load %arg6[%c32] : memref<99xf32, #tpu.memory_space<smem>>
    %340 = vector.broadcast %339 : f32 to vector<1x256xf32>
    %341 = arith.mulf %338, %340 : vector<1x256xf32>
    %c0_121 = arith.constant 0 : index
    %c111_122 = arith.constant 111 : index
    %342 = vector.load %arg9[%c0_121, %c111_122] : memref<1x512xf32, #tpu.memory_space<vmem>>, vector<1x256xf32>
    %c33 = arith.constant 33 : index
    %343 = memref.load %arg6[%c33] : memref<99xf32, #tpu.memory_space<smem>>
    %344 = vector.broadcast %343 : f32 to vector<1x256xf32>
    %345 = arith.mulf %342, %344 : vector<1x256xf32>
    %346 = arith.addf %341, %345 : vector<1x256xf32>
    %c1_i32_123 = arith.constant 1 : i32
    %347 = vector.broadcast %c1_i32_123 : i32 to vector<1x256xi32>
    %348 = arith.cmpi sge, %63, %347 : vector<1x256xi32>
    %c17_i32_124 = arith.constant 17 : i32
    %349 = vector.broadcast %c17_i32_124 : i32 to vector<1x256xi32>
    %350 = arith.cmpi slt, %63, %349 : vector<1x256xi32>
    %351 = arith.andi %348, %350 : vector<1x256xi1>
    %cst_125 = arith.constant 0.000000e+00 : f32
    %352 = vector.broadcast %cst_125 : f32 to vector<1x256xf32>
    %353 = arith.select %351, %346, %352 : vector<1x256xi1>, vector<1x256xf32>
    %354 = arith.addf %337, %353 : vector<1x256xf32>
    %c0_126 = arith.constant 0 : index
    %c112 = arith.constant 112 : index
    %355 = vector.load %arg8[%c0_126, %c112] : memref<1x512xf32, #tpu.memory_space<vmem>>, vector<1x256xf32>
    %c34 = arith.constant 34 : index
    %356 = memref.load %arg6[%c34] : memref<99xf32, #tpu.memory_space<smem>>
    %357 = vector.broadcast %356 : f32 to vector<1x256xf32>
    %358 = arith.mulf %355, %357 : vector<1x256xf32>
    %c0_127 = arith.constant 0 : index
    %c112_128 = arith.constant 112 : index
    %359 = vector.load %arg9[%c0_127, %c112_128] : memref<1x512xf32, #tpu.memory_space<vmem>>, vector<1x256xf32>
    %c35 = arith.constant 35 : index
    %360 = memref.load %arg6[%c35] : memref<99xf32, #tpu.memory_space<smem>>
    %361 = vector.broadcast %360 : f32 to vector<1x256xf32>
    %362 = arith.mulf %359, %361 : vector<1x256xf32>
    %363 = arith.addf %358, %362 : vector<1x256xf32>
    %c0_i32_129 = arith.constant 0 : i32
    %364 = vector.broadcast %c0_i32_129 : i32 to vector<1x256xi32>
    %365 = arith.cmpi sge, %63, %364 : vector<1x256xi32>
    %c16_i32_130 = arith.constant 16 : i32
    %366 = vector.broadcast %c16_i32_130 : i32 to vector<1x256xi32>
    %367 = arith.cmpi slt, %63, %366 : vector<1x256xi32>
    %368 = arith.andi %365, %367 : vector<1x256xi1>
    %cst_131 = arith.constant 0.000000e+00 : f32
    %369 = vector.broadcast %cst_131 : f32 to vector<1x256xf32>
    %370 = arith.select %368, %363, %369 : vector<1x256xi1>, vector<1x256xf32>
    %371 = arith.addf %354, %370 : vector<1x256xf32>
    %c0_132 = arith.constant 0 : index
    %c113 = arith.constant 113 : index
    %372 = vector.load %arg8[%c0_132, %c113] : memref<1x512xf32, #tpu.memory_space<vmem>>, vector<1x256xf32>
    %c36 = arith.constant 36 : index
    %373 = memref.load %arg6[%c36] : memref<99xf32, #tpu.memory_space<smem>>
    %374 = vector.broadcast %373 : f32 to vector<1x256xf32>
    %375 = arith.mulf %372, %374 : vector<1x256xf32>
    %c0_133 = arith.constant 0 : index
    %c113_134 = arith.constant 113 : index
    %376 = vector.load %arg9[%c0_133, %c113_134] : memref<1x512xf32, #tpu.memory_space<vmem>>, vector<1x256xf32>
    %c37 = arith.constant 37 : index
    %377 = memref.load %arg6[%c37] : memref<99xf32, #tpu.memory_space<smem>>
    %378 = vector.broadcast %377 : f32 to vector<1x256xf32>
    %379 = arith.mulf %376, %378 : vector<1x256xf32>
    %380 = arith.addf %375, %379 : vector<1x256xf32>
    %c-1_i32_135 = arith.constant -1 : i32
    %381 = vector.broadcast %c-1_i32_135 : i32 to vector<1x256xi32>
    %382 = arith.cmpi sge, %63, %381 : vector<1x256xi32>
    %c15_i32_136 = arith.constant 15 : i32
    %383 = vector.broadcast %c15_i32_136 : i32 to vector<1x256xi32>
    %384 = arith.cmpi slt, %63, %383 : vector<1x256xi32>
    %385 = arith.andi %382, %384 : vector<1x256xi1>
    %cst_137 = arith.constant 0.000000e+00 : f32
    %386 = vector.broadcast %cst_137 : f32 to vector<1x256xf32>
    %387 = arith.select %385, %380, %386 : vector<1x256xi1>, vector<1x256xf32>
    %388 = arith.addf %371, %387 : vector<1x256xf32>
    %c0_138 = arith.constant 0 : index
    %c114 = arith.constant 114 : index
    %389 = vector.load %arg8[%c0_138, %c114] : memref<1x512xf32, #tpu.memory_space<vmem>>, vector<1x256xf32>
    %c38 = arith.constant 38 : index
    %390 = memref.load %arg6[%c38] : memref<99xf32, #tpu.memory_space<smem>>
    %391 = vector.broadcast %390 : f32 to vector<1x256xf32>
    %392 = arith.mulf %389, %391 : vector<1x256xf32>
    %c0_139 = arith.constant 0 : index
    %c114_140 = arith.constant 114 : index
    %393 = vector.load %arg9[%c0_139, %c114_140] : memref<1x512xf32, #tpu.memory_space<vmem>>, vector<1x256xf32>
    %c39 = arith.constant 39 : index
    %394 = memref.load %arg6[%c39] : memref<99xf32, #tpu.memory_space<smem>>
    %395 = vector.broadcast %394 : f32 to vector<1x256xf32>
    %396 = arith.mulf %393, %395 : vector<1x256xf32>
    %397 = arith.addf %392, %396 : vector<1x256xf32>
    %c-2_i32_141 = arith.constant -2 : i32
    %398 = vector.broadcast %c-2_i32_141 : i32 to vector<1x256xi32>
    %399 = arith.cmpi sge, %63, %398 : vector<1x256xi32>
    %c14_i32_142 = arith.constant 14 : i32
    %400 = vector.broadcast %c14_i32_142 : i32 to vector<1x256xi32>
    %401 = arith.cmpi slt, %63, %400 : vector<1x256xi32>
    %402 = arith.andi %399, %401 : vector<1x256xi1>
    %cst_143 = arith.constant 0.000000e+00 : f32
    %403 = vector.broadcast %cst_143 : f32 to vector<1x256xf32>
    %404 = arith.select %402, %397, %403 : vector<1x256xi1>, vector<1x256xf32>
    %405 = arith.addf %388, %404 : vector<1x256xf32>
    %c0_144 = arith.constant 0 : index
    %c115 = arith.constant 115 : index
    %406 = vector.load %arg8[%c0_144, %c115] : memref<1x512xf32, #tpu.memory_space<vmem>>, vector<1x256xf32>
    %c40 = arith.constant 40 : index
    %407 = memref.load %arg6[%c40] : memref<99xf32, #tpu.memory_space<smem>>
    %408 = vector.broadcast %407 : f32 to vector<1x256xf32>
    %409 = arith.mulf %406, %408 : vector<1x256xf32>
    %c0_145 = arith.constant 0 : index
    %c115_146 = arith.constant 115 : index
    %410 = vector.load %arg9[%c0_145, %c115_146] : memref<1x512xf32, #tpu.memory_space<vmem>>, vector<1x256xf32>
    %c41 = arith.constant 41 : index
    %411 = memref.load %arg6[%c41] : memref<99xf32, #tpu.memory_space<smem>>
    %412 = vector.broadcast %411 : f32 to vector<1x256xf32>
    %413 = arith.mulf %410, %412 : vector<1x256xf32>
    %414 = arith.addf %409, %413 : vector<1x256xf32>
    %c-3_i32_147 = arith.constant -3 : i32
    %415 = vector.broadcast %c-3_i32_147 : i32 to vector<1x256xi32>
    %416 = arith.cmpi sge, %63, %415 : vector<1x256xi32>
    %c13_i32_148 = arith.constant 13 : i32
    %417 = vector.broadcast %c13_i32_148 : i32 to vector<1x256xi32>
    %418 = arith.cmpi slt, %63, %417 : vector<1x256xi32>
    %419 = arith.andi %416, %418 : vector<1x256xi1>
    %cst_149 = arith.constant 0.000000e+00 : f32
    %420 = vector.broadcast %cst_149 : f32 to vector<1x256xf32>
    %421 = arith.select %419, %414, %420 : vector<1x256xi1>, vector<1x256xf32>
    %422 = arith.addf %405, %421 : vector<1x256xf32>
    %c0_150 = arith.constant 0 : index
    %c125 = arith.constant 125 : index
    %423 = vector.load %arg8[%c0_150, %c125] : memref<1x512xf32, #tpu.memory_space<vmem>>, vector<1x256xf32>
    %c42 = arith.constant 42 : index
    %424 = memref.load %arg6[%c42] : memref<99xf32, #tpu.memory_space<smem>>
    %425 = vector.broadcast %424 : f32 to vector<1x256xf32>
    %426 = arith.mulf %423, %425 : vector<1x256xf32>
    %c0_151 = arith.constant 0 : index
    %c125_152 = arith.constant 125 : index
    %427 = vector.load %arg9[%c0_151, %c125_152] : memref<1x512xf32, #tpu.memory_space<vmem>>, vector<1x256xf32>
    %c43 = arith.constant 43 : index
    %428 = memref.load %arg6[%c43] : memref<99xf32, #tpu.memory_space<smem>>
    %429 = vector.broadcast %428 : f32 to vector<1x256xf32>
    %430 = arith.mulf %427, %429 : vector<1x256xf32>
    %431 = arith.addf %426, %430 : vector<1x256xf32>
    %c3_i32_153 = arith.constant 3 : i32
    %432 = vector.broadcast %c3_i32_153 : i32 to vector<1x256xi32>
    %433 = arith.cmpi sge, %63, %432 : vector<1x256xi32>
    %c19_i32_154 = arith.constant 19 : i32
    %434 = vector.broadcast %c19_i32_154 : i32 to vector<1x256xi32>
    %435 = arith.cmpi slt, %63, %434 : vector<1x256xi32>
    %436 = arith.andi %433, %435 : vector<1x256xi1>
    %cst_155 = arith.constant 0.000000e+00 : f32
    %437 = vector.broadcast %cst_155 : f32 to vector<1x256xf32>
    %438 = arith.select %436, %431, %437 : vector<1x256xi1>, vector<1x256xf32>
    %439 = arith.addf %422, %438 : vector<1x256xf32>
    %c0_156 = arith.constant 0 : index
    %c126 = arith.constant 126 : index
    %440 = vector.load %arg8[%c0_156, %c126] : memref<1x512xf32, #tpu.memory_space<vmem>>, vector<1x256xf32>
    %c44 = arith.constant 44 : index
    %441 = memref.load %arg6[%c44] : memref<99xf32, #tpu.memory_space<smem>>
    %442 = vector.broadcast %441 : f32 to vector<1x256xf32>
    %443 = arith.mulf %440, %442 : vector<1x256xf32>
    %c0_157 = arith.constant 0 : index
    %c126_158 = arith.constant 126 : index
    %444 = vector.load %arg9[%c0_157, %c126_158] : memref<1x512xf32, #tpu.memory_space<vmem>>, vector<1x256xf32>
    %c45 = arith.constant 45 : index
    %445 = memref.load %arg6[%c45] : memref<99xf32, #tpu.memory_space<smem>>
    %446 = vector.broadcast %445 : f32 to vector<1x256xf32>
    %447 = arith.mulf %444, %446 : vector<1x256xf32>
    %448 = arith.addf %443, %447 : vector<1x256xf32>
    %c2_i32_159 = arith.constant 2 : i32
    %449 = vector.broadcast %c2_i32_159 : i32 to vector<1x256xi32>
    %450 = arith.cmpi sge, %63, %449 : vector<1x256xi32>
    %c18_i32_160 = arith.constant 18 : i32
    %451 = vector.broadcast %c18_i32_160 : i32 to vector<1x256xi32>
    %452 = arith.cmpi slt, %63, %451 : vector<1x256xi32>
    %453 = arith.andi %450, %452 : vector<1x256xi1>
    %cst_161 = arith.constant 0.000000e+00 : f32
    %454 = vector.broadcast %cst_161 : f32 to vector<1x256xf32>
    %455 = arith.select %453, %448, %454 : vector<1x256xi1>, vector<1x256xf32>
    %456 = arith.addf %439, %455 : vector<1x256xf32>
    %c0_162 = arith.constant 0 : index
    %c127 = arith.constant 127 : index
    %457 = vector.load %arg8[%c0_162, %c127] : memref<1x512xf32, #tpu.memory_space<vmem>>, vector<1x256xf32>
    %c46 = arith.constant 46 : index
    %458 = memref.load %arg6[%c46] : memref<99xf32, #tpu.memory_space<smem>>
    %459 = vector.broadcast %458 : f32 to vector<1x256xf32>
    %460 = arith.mulf %457, %459 : vector<1x256xf32>
    %c0_163 = arith.constant 0 : index
    %c127_164 = arith.constant 127 : index
    %461 = vector.load %arg9[%c0_163, %c127_164] : memref<1x512xf32, #tpu.memory_space<vmem>>, vector<1x256xf32>
    %c47 = arith.constant 47 : index
    %462 = memref.load %arg6[%c47] : memref<99xf32, #tpu.memory_space<smem>>
    %463 = vector.broadcast %462 : f32 to vector<1x256xf32>
    %464 = arith.mulf %461, %463 : vector<1x256xf32>
    %465 = arith.addf %460, %464 : vector<1x256xf32>
    %c1_i32_165 = arith.constant 1 : i32
    %466 = vector.broadcast %c1_i32_165 : i32 to vector<1x256xi32>
    %467 = arith.cmpi sge, %63, %466 : vector<1x256xi32>
    %c17_i32_166 = arith.constant 17 : i32
    %468 = vector.broadcast %c17_i32_166 : i32 to vector<1x256xi32>
    %469 = arith.cmpi slt, %63, %468 : vector<1x256xi32>
    %470 = arith.andi %467, %469 : vector<1x256xi1>
    %cst_167 = arith.constant 0.000000e+00 : f32
    %471 = vector.broadcast %cst_167 : f32 to vector<1x256xf32>
    %472 = arith.select %470, %465, %471 : vector<1x256xi1>, vector<1x256xf32>
    %473 = arith.addf %456, %472 : vector<1x256xf32>
    %c0_168 = arith.constant 0 : index
    %c128_169 = arith.constant 128 : index
    %474 = vector.load %arg8[%c0_168, %c128_169] : memref<1x512xf32, #tpu.memory_space<vmem>>, vector<1x256xf32>
    %c48 = arith.constant 48 : index
    %475 = memref.load %arg6[%c48] : memref<99xf32, #tpu.memory_space<smem>>
    %476 = vector.broadcast %475 : f32 to vector<1x256xf32>
    %477 = arith.mulf %474, %476 : vector<1x256xf32>
    %c0_170 = arith.constant 0 : index
    %c128_171 = arith.constant 128 : index
    %478 = vector.load %arg9[%c0_170, %c128_171] : memref<1x512xf32, #tpu.memory_space<vmem>>, vector<1x256xf32>
    %c49 = arith.constant 49 : index
    %479 = memref.load %arg6[%c49] : memref<99xf32, #tpu.memory_space<smem>>
    %480 = vector.broadcast %479 : f32 to vector<1x256xf32>
    %481 = arith.mulf %478, %480 : vector<1x256xf32>
    %482 = arith.addf %477, %481 : vector<1x256xf32>
    %c0_i32_172 = arith.constant 0 : i32
    %483 = vector.broadcast %c0_i32_172 : i32 to vector<1x256xi32>
    %484 = arith.cmpi sge, %63, %483 : vector<1x256xi32>
    %c16_i32_173 = arith.constant 16 : i32
    %485 = vector.broadcast %c16_i32_173 : i32 to vector<1x256xi32>
    %486 = arith.cmpi slt, %63, %485 : vector<1x256xi32>
    %487 = arith.andi %484, %486 : vector<1x256xi1>
    %cst_174 = arith.constant 0.000000e+00 : f32
    %488 = vector.broadcast %cst_174 : f32 to vector<1x256xf32>
    %489 = arith.select %487, %482, %488 : vector<1x256xi1>, vector<1x256xf32>
    %490 = arith.addf %473, %489 : vector<1x256xf32>
    %c0_175 = arith.constant 0 : index
    %c129 = arith.constant 129 : index
    %491 = vector.load %arg8[%c0_175, %c129] : memref<1x512xf32, #tpu.memory_space<vmem>>, vector<1x256xf32>
    %c50 = arith.constant 50 : index
    %492 = memref.load %arg6[%c50] : memref<99xf32, #tpu.memory_space<smem>>
    %493 = vector.broadcast %492 : f32 to vector<1x256xf32>
    %494 = arith.mulf %491, %493 : vector<1x256xf32>
    %c0_176 = arith.constant 0 : index
    %c129_177 = arith.constant 129 : index
    %495 = vector.load %arg9[%c0_176, %c129_177] : memref<1x512xf32, #tpu.memory_space<vmem>>, vector<1x256xf32>
    %c51 = arith.constant 51 : index
    %496 = memref.load %arg6[%c51] : memref<99xf32, #tpu.memory_space<smem>>
    %497 = vector.broadcast %496 : f32 to vector<1x256xf32>
    %498 = arith.mulf %495, %497 : vector<1x256xf32>
    %499 = arith.addf %494, %498 : vector<1x256xf32>
    %c-1_i32_178 = arith.constant -1 : i32
    %500 = vector.broadcast %c-1_i32_178 : i32 to vector<1x256xi32>
    %501 = arith.cmpi sge, %63, %500 : vector<1x256xi32>
    %c15_i32_179 = arith.constant 15 : i32
    %502 = vector.broadcast %c15_i32_179 : i32 to vector<1x256xi32>
    %503 = arith.cmpi slt, %63, %502 : vector<1x256xi32>
    %504 = arith.andi %501, %503 : vector<1x256xi1>
    %cst_180 = arith.constant 0.000000e+00 : f32
    %505 = vector.broadcast %cst_180 : f32 to vector<1x256xf32>
    %506 = arith.select %504, %499, %505 : vector<1x256xi1>, vector<1x256xf32>
    %507 = arith.addf %490, %506 : vector<1x256xf32>
    %c0_181 = arith.constant 0 : index
    %c130 = arith.constant 130 : index
    %508 = vector.load %arg8[%c0_181, %c130] : memref<1x512xf32, #tpu.memory_space<vmem>>, vector<1x256xf32>
    %c52 = arith.constant 52 : index
    %509 = memref.load %arg6[%c52] : memref<99xf32, #tpu.memory_space<smem>>
    %510 = vector.broadcast %509 : f32 to vector<1x256xf32>
    %511 = arith.mulf %508, %510 : vector<1x256xf32>
    %c0_182 = arith.constant 0 : index
    %c130_183 = arith.constant 130 : index
    %512 = vector.load %arg9[%c0_182, %c130_183] : memref<1x512xf32, #tpu.memory_space<vmem>>, vector<1x256xf32>
    %c53 = arith.constant 53 : index
    %513 = memref.load %arg6[%c53] : memref<99xf32, #tpu.memory_space<smem>>
    %514 = vector.broadcast %513 : f32 to vector<1x256xf32>
    %515 = arith.mulf %512, %514 : vector<1x256xf32>
    %516 = arith.addf %511, %515 : vector<1x256xf32>
    %c-2_i32_184 = arith.constant -2 : i32
    %517 = vector.broadcast %c-2_i32_184 : i32 to vector<1x256xi32>
    %518 = arith.cmpi sge, %63, %517 : vector<1x256xi32>
    %c14_i32_185 = arith.constant 14 : i32
    %519 = vector.broadcast %c14_i32_185 : i32 to vector<1x256xi32>
    %520 = arith.cmpi slt, %63, %519 : vector<1x256xi32>
    %521 = arith.andi %518, %520 : vector<1x256xi1>
    %cst_186 = arith.constant 0.000000e+00 : f32
    %522 = vector.broadcast %cst_186 : f32 to vector<1x256xf32>
    %523 = arith.select %521, %516, %522 : vector<1x256xi1>, vector<1x256xf32>
    %524 = arith.addf %507, %523 : vector<1x256xf32>
    %c0_187 = arith.constant 0 : index
    %c131 = arith.constant 131 : index
    %525 = vector.load %arg8[%c0_187, %c131] : memref<1x512xf32, #tpu.memory_space<vmem>>, vector<1x256xf32>
    %c54 = arith.constant 54 : index
    %526 = memref.load %arg6[%c54] : memref<99xf32, #tpu.memory_space<smem>>
    %527 = vector.broadcast %526 : f32 to vector<1x256xf32>
    %528 = arith.mulf %525, %527 : vector<1x256xf32>
    %c0_188 = arith.constant 0 : index
    %c131_189 = arith.constant 131 : index
    %529 = vector.load %arg9[%c0_188, %c131_189] : memref<1x512xf32, #tpu.memory_space<vmem>>, vector<1x256xf32>
    %c55 = arith.constant 55 : index
    %530 = memref.load %arg6[%c55] : memref<99xf32, #tpu.memory_space<smem>>
    %531 = vector.broadcast %530 : f32 to vector<1x256xf32>
    %532 = arith.mulf %529, %531 : vector<1x256xf32>
    %533 = arith.addf %528, %532 : vector<1x256xf32>
    %c-3_i32_190 = arith.constant -3 : i32
    %534 = vector.broadcast %c-3_i32_190 : i32 to vector<1x256xi32>
    %535 = arith.cmpi sge, %63, %534 : vector<1x256xi32>
    %c13_i32_191 = arith.constant 13 : i32
    %536 = vector.broadcast %c13_i32_191 : i32 to vector<1x256xi32>
    %537 = arith.cmpi slt, %63, %536 : vector<1x256xi32>
    %538 = arith.andi %535, %537 : vector<1x256xi1>
    %cst_192 = arith.constant 0.000000e+00 : f32
    %539 = vector.broadcast %cst_192 : f32 to vector<1x256xf32>
    %540 = arith.select %538, %533, %539 : vector<1x256xi1>, vector<1x256xf32>
    %541 = arith.addf %524, %540 : vector<1x256xf32>
    %c0_193 = arith.constant 0 : index
    %c141 = arith.constant 141 : index
    %542 = vector.load %arg8[%c0_193, %c141] : memref<1x512xf32, #tpu.memory_space<vmem>>, vector<1x256xf32>
    %c56 = arith.constant 56 : index
    %543 = memref.load %arg6[%c56] : memref<99xf32, #tpu.memory_space<smem>>
    %544 = vector.broadcast %543 : f32 to vector<1x256xf32>
    %545 = arith.mulf %542, %544 : vector<1x256xf32>
    %c0_194 = arith.constant 0 : index
    %c141_195 = arith.constant 141 : index
    %546 = vector.load %arg9[%c0_194, %c141_195] : memref<1x512xf32, #tpu.memory_space<vmem>>, vector<1x256xf32>
    %c57 = arith.constant 57 : index
    %547 = memref.load %arg6[%c57] : memref<99xf32, #tpu.memory_space<smem>>
    %548 = vector.broadcast %547 : f32 to vector<1x256xf32>
    %549 = arith.mulf %546, %548 : vector<1x256xf32>
    %550 = arith.addf %545, %549 : vector<1x256xf32>
    %c3_i32_196 = arith.constant 3 : i32
    %551 = vector.broadcast %c3_i32_196 : i32 to vector<1x256xi32>
    %552 = arith.cmpi sge, %63, %551 : vector<1x256xi32>
    %c19_i32_197 = arith.constant 19 : i32
    %553 = vector.broadcast %c19_i32_197 : i32 to vector<1x256xi32>
    %554 = arith.cmpi slt, %63, %553 : vector<1x256xi32>
    %555 = arith.andi %552, %554 : vector<1x256xi1>
    %cst_198 = arith.constant 0.000000e+00 : f32
    %556 = vector.broadcast %cst_198 : f32 to vector<1x256xf32>
    %557 = arith.select %555, %550, %556 : vector<1x256xi1>, vector<1x256xf32>
    %558 = arith.addf %541, %557 : vector<1x256xf32>
    %c0_199 = arith.constant 0 : index
    %c142 = arith.constant 142 : index
    %559 = vector.load %arg8[%c0_199, %c142] : memref<1x512xf32, #tpu.memory_space<vmem>>, vector<1x256xf32>
    %c58 = arith.constant 58 : index
    %560 = memref.load %arg6[%c58] : memref<99xf32, #tpu.memory_space<smem>>
    %561 = vector.broadcast %560 : f32 to vector<1x256xf32>
    %562 = arith.mulf %559, %561 : vector<1x256xf32>
    %c0_200 = arith.constant 0 : index
    %c142_201 = arith.constant 142 : index
    %563 = vector.load %arg9[%c0_200, %c142_201] : memref<1x512xf32, #tpu.memory_space<vmem>>, vector<1x256xf32>
    %c59 = arith.constant 59 : index
    %564 = memref.load %arg6[%c59] : memref<99xf32, #tpu.memory_space<smem>>
    %565 = vector.broadcast %564 : f32 to vector<1x256xf32>
    %566 = arith.mulf %563, %565 : vector<1x256xf32>
    %567 = arith.addf %562, %566 : vector<1x256xf32>
    %c2_i32_202 = arith.constant 2 : i32
    %568 = vector.broadcast %c2_i32_202 : i32 to vector<1x256xi32>
    %569 = arith.cmpi sge, %63, %568 : vector<1x256xi32>
    %c18_i32_203 = arith.constant 18 : i32
    %570 = vector.broadcast %c18_i32_203 : i32 to vector<1x256xi32>
    %571 = arith.cmpi slt, %63, %570 : vector<1x256xi32>
    %572 = arith.andi %569, %571 : vector<1x256xi1>
    %cst_204 = arith.constant 0.000000e+00 : f32
    %573 = vector.broadcast %cst_204 : f32 to vector<1x256xf32>
    %574 = arith.select %572, %567, %573 : vector<1x256xi1>, vector<1x256xf32>
    %575 = arith.addf %558, %574 : vector<1x256xf32>
    %c0_205 = arith.constant 0 : index
    %c143 = arith.constant 143 : index
    %576 = vector.load %arg8[%c0_205, %c143] : memref<1x512xf32, #tpu.memory_space<vmem>>, vector<1x256xf32>
    %c60 = arith.constant 60 : index
    %577 = memref.load %arg6[%c60] : memref<99xf32, #tpu.memory_space<smem>>
    %578 = vector.broadcast %577 : f32 to vector<1x256xf32>
    %579 = arith.mulf %576, %578 : vector<1x256xf32>
    %c0_206 = arith.constant 0 : index
    %c143_207 = arith.constant 143 : index
    %580 = vector.load %arg9[%c0_206, %c143_207] : memref<1x512xf32, #tpu.memory_space<vmem>>, vector<1x256xf32>
    %c61 = arith.constant 61 : index
    %581 = memref.load %arg6[%c61] : memref<99xf32, #tpu.memory_space<smem>>
    %582 = vector.broadcast %581 : f32 to vector<1x256xf32>
    %583 = arith.mulf %580, %582 : vector<1x256xf32>
    %584 = arith.addf %579, %583 : vector<1x256xf32>
    %c1_i32_208 = arith.constant 1 : i32
    %585 = vector.broadcast %c1_i32_208 : i32 to vector<1x256xi32>
    %586 = arith.cmpi sge, %63, %585 : vector<1x256xi32>
    %c17_i32_209 = arith.constant 17 : i32
    %587 = vector.broadcast %c17_i32_209 : i32 to vector<1x256xi32>
    %588 = arith.cmpi slt, %63, %587 : vector<1x256xi32>
    %589 = arith.andi %586, %588 : vector<1x256xi1>
    %cst_210 = arith.constant 0.000000e+00 : f32
    %590 = vector.broadcast %cst_210 : f32 to vector<1x256xf32>
    %591 = arith.select %589, %584, %590 : vector<1x256xi1>, vector<1x256xf32>
    %592 = arith.addf %575, %591 : vector<1x256xf32>
    %c0_211 = arith.constant 0 : index
    %c144 = arith.constant 144 : index
    %593 = vector.load %arg8[%c0_211, %c144] : memref<1x512xf32, #tpu.memory_space<vmem>>, vector<1x256xf32>
    %c62 = arith.constant 62 : index
    %594 = memref.load %arg6[%c62] : memref<99xf32, #tpu.memory_space<smem>>
    %595 = vector.broadcast %594 : f32 to vector<1x256xf32>
    %596 = arith.mulf %593, %595 : vector<1x256xf32>
    %c0_212 = arith.constant 0 : index
    %c144_213 = arith.constant 144 : index
    %597 = vector.load %arg9[%c0_212, %c144_213] : memref<1x512xf32, #tpu.memory_space<vmem>>, vector<1x256xf32>
    %c63 = arith.constant 63 : index
    %598 = memref.load %arg6[%c63] : memref<99xf32, #tpu.memory_space<smem>>
    %599 = vector.broadcast %598 : f32 to vector<1x256xf32>
    %600 = arith.mulf %597, %599 : vector<1x256xf32>
    %601 = arith.addf %596, %600 : vector<1x256xf32>
    %c0_i32_214 = arith.constant 0 : i32
    %602 = vector.broadcast %c0_i32_214 : i32 to vector<1x256xi32>
    %603 = arith.cmpi sge, %63, %602 : vector<1x256xi32>
    %c16_i32_215 = arith.constant 16 : i32
    %604 = vector.broadcast %c16_i32_215 : i32 to vector<1x256xi32>
    %605 = arith.cmpi slt, %63, %604 : vector<1x256xi32>
    %606 = arith.andi %603, %605 : vector<1x256xi1>
    %cst_216 = arith.constant 0.000000e+00 : f32
    %607 = vector.broadcast %cst_216 : f32 to vector<1x256xf32>
    %608 = arith.select %606, %601, %607 : vector<1x256xi1>, vector<1x256xf32>
    %609 = arith.addf %592, %608 : vector<1x256xf32>
    %c0_217 = arith.constant 0 : index
    %c145 = arith.constant 145 : index
    %610 = vector.load %arg8[%c0_217, %c145] : memref<1x512xf32, #tpu.memory_space<vmem>>, vector<1x256xf32>
    %c64 = arith.constant 64 : index
    %611 = memref.load %arg6[%c64] : memref<99xf32, #tpu.memory_space<smem>>
    %612 = vector.broadcast %611 : f32 to vector<1x256xf32>
    %613 = arith.mulf %610, %612 : vector<1x256xf32>
    %c0_218 = arith.constant 0 : index
    %c145_219 = arith.constant 145 : index
    %614 = vector.load %arg9[%c0_218, %c145_219] : memref<1x512xf32, #tpu.memory_space<vmem>>, vector<1x256xf32>
    %c65 = arith.constant 65 : index
    %615 = memref.load %arg6[%c65] : memref<99xf32, #tpu.memory_space<smem>>
    %616 = vector.broadcast %615 : f32 to vector<1x256xf32>
    %617 = arith.mulf %614, %616 : vector<1x256xf32>
    %618 = arith.addf %613, %617 : vector<1x256xf32>
    %c-1_i32_220 = arith.constant -1 : i32
    %619 = vector.broadcast %c-1_i32_220 : i32 to vector<1x256xi32>
    %620 = arith.cmpi sge, %63, %619 : vector<1x256xi32>
    %c15_i32_221 = arith.constant 15 : i32
    %621 = vector.broadcast %c15_i32_221 : i32 to vector<1x256xi32>
    %622 = arith.cmpi slt, %63, %621 : vector<1x256xi32>
    %623 = arith.andi %620, %622 : vector<1x256xi1>
    %cst_222 = arith.constant 0.000000e+00 : f32
    %624 = vector.broadcast %cst_222 : f32 to vector<1x256xf32>
    %625 = arith.select %623, %618, %624 : vector<1x256xi1>, vector<1x256xf32>
    %626 = arith.addf %609, %625 : vector<1x256xf32>
    %c0_223 = arith.constant 0 : index
    %c146 = arith.constant 146 : index
    %627 = vector.load %arg8[%c0_223, %c146] : memref<1x512xf32, #tpu.memory_space<vmem>>, vector<1x256xf32>
    %c66 = arith.constant 66 : index
    %628 = memref.load %arg6[%c66] : memref<99xf32, #tpu.memory_space<smem>>
    %629 = vector.broadcast %628 : f32 to vector<1x256xf32>
    %630 = arith.mulf %627, %629 : vector<1x256xf32>
    %c0_224 = arith.constant 0 : index
    %c146_225 = arith.constant 146 : index
    %631 = vector.load %arg9[%c0_224, %c146_225] : memref<1x512xf32, #tpu.memory_space<vmem>>, vector<1x256xf32>
    %c67 = arith.constant 67 : index
    %632 = memref.load %arg6[%c67] : memref<99xf32, #tpu.memory_space<smem>>
    %633 = vector.broadcast %632 : f32 to vector<1x256xf32>
    %634 = arith.mulf %631, %633 : vector<1x256xf32>
    %635 = arith.addf %630, %634 : vector<1x256xf32>
    %c-2_i32_226 = arith.constant -2 : i32
    %636 = vector.broadcast %c-2_i32_226 : i32 to vector<1x256xi32>
    %637 = arith.cmpi sge, %63, %636 : vector<1x256xi32>
    %c14_i32_227 = arith.constant 14 : i32
    %638 = vector.broadcast %c14_i32_227 : i32 to vector<1x256xi32>
    %639 = arith.cmpi slt, %63, %638 : vector<1x256xi32>
    %640 = arith.andi %637, %639 : vector<1x256xi1>
    %cst_228 = arith.constant 0.000000e+00 : f32
    %641 = vector.broadcast %cst_228 : f32 to vector<1x256xf32>
    %642 = arith.select %640, %635, %641 : vector<1x256xi1>, vector<1x256xf32>
    %643 = arith.addf %626, %642 : vector<1x256xf32>
    %c0_229 = arith.constant 0 : index
    %c147 = arith.constant 147 : index
    %644 = vector.load %arg8[%c0_229, %c147] : memref<1x512xf32, #tpu.memory_space<vmem>>, vector<1x256xf32>
    %c68 = arith.constant 68 : index
    %645 = memref.load %arg6[%c68] : memref<99xf32, #tpu.memory_space<smem>>
    %646 = vector.broadcast %645 : f32 to vector<1x256xf32>
    %647 = arith.mulf %644, %646 : vector<1x256xf32>
    %c0_230 = arith.constant 0 : index
    %c147_231 = arith.constant 147 : index
    %648 = vector.load %arg9[%c0_230, %c147_231] : memref<1x512xf32, #tpu.memory_space<vmem>>, vector<1x256xf32>
    %c69 = arith.constant 69 : index
    %649 = memref.load %arg6[%c69] : memref<99xf32, #tpu.memory_space<smem>>
    %650 = vector.broadcast %649 : f32 to vector<1x256xf32>
    %651 = arith.mulf %648, %650 : vector<1x256xf32>
    %652 = arith.addf %647, %651 : vector<1x256xf32>
    %c-3_i32_232 = arith.constant -3 : i32
    %653 = vector.broadcast %c-3_i32_232 : i32 to vector<1x256xi32>
    %654 = arith.cmpi sge, %63, %653 : vector<1x256xi32>
    %c13_i32_233 = arith.constant 13 : i32
    %655 = vector.broadcast %c13_i32_233 : i32 to vector<1x256xi32>
    %656 = arith.cmpi slt, %63, %655 : vector<1x256xi32>
    %657 = arith.andi %654, %656 : vector<1x256xi1>
    %cst_234 = arith.constant 0.000000e+00 : f32
    %658 = vector.broadcast %cst_234 : f32 to vector<1x256xf32>
    %659 = arith.select %657, %652, %658 : vector<1x256xi1>, vector<1x256xf32>
    %660 = arith.addf %643, %659 : vector<1x256xf32>
    %c0_235 = arith.constant 0 : index
    %c157 = arith.constant 157 : index
    %661 = vector.load %arg8[%c0_235, %c157] : memref<1x512xf32, #tpu.memory_space<vmem>>, vector<1x256xf32>
    %c70 = arith.constant 70 : index
    %662 = memref.load %arg6[%c70] : memref<99xf32, #tpu.memory_space<smem>>
    %663 = vector.broadcast %662 : f32 to vector<1x256xf32>
    %664 = arith.mulf %661, %663 : vector<1x256xf32>
    %c0_236 = arith.constant 0 : index
    %c157_237 = arith.constant 157 : index
    %665 = vector.load %arg9[%c0_236, %c157_237] : memref<1x512xf32, #tpu.memory_space<vmem>>, vector<1x256xf32>
    %c71 = arith.constant 71 : index
    %666 = memref.load %arg6[%c71] : memref<99xf32, #tpu.memory_space<smem>>
    %667 = vector.broadcast %666 : f32 to vector<1x256xf32>
    %668 = arith.mulf %665, %667 : vector<1x256xf32>
    %669 = arith.addf %664, %668 : vector<1x256xf32>
    %c3_i32_238 = arith.constant 3 : i32
    %670 = vector.broadcast %c3_i32_238 : i32 to vector<1x256xi32>
    %671 = arith.cmpi sge, %63, %670 : vector<1x256xi32>
    %c19_i32_239 = arith.constant 19 : i32
    %672 = vector.broadcast %c19_i32_239 : i32 to vector<1x256xi32>
    %673 = arith.cmpi slt, %63, %672 : vector<1x256xi32>
    %674 = arith.andi %671, %673 : vector<1x256xi1>
    %cst_240 = arith.constant 0.000000e+00 : f32
    %675 = vector.broadcast %cst_240 : f32 to vector<1x256xf32>
    %676 = arith.select %674, %669, %675 : vector<1x256xi1>, vector<1x256xf32>
    %677 = arith.addf %660, %676 : vector<1x256xf32>
    %c0_241 = arith.constant 0 : index
    %c158 = arith.constant 158 : index
    %678 = vector.load %arg8[%c0_241, %c158] : memref<1x512xf32, #tpu.memory_space<vmem>>, vector<1x256xf32>
    %c72 = arith.constant 72 : index
    %679 = memref.load %arg6[%c72] : memref<99xf32, #tpu.memory_space<smem>>
    %680 = vector.broadcast %679 : f32 to vector<1x256xf32>
    %681 = arith.mulf %678, %680 : vector<1x256xf32>
    %c0_242 = arith.constant 0 : index
    %c158_243 = arith.constant 158 : index
    %682 = vector.load %arg9[%c0_242, %c158_243] : memref<1x512xf32, #tpu.memory_space<vmem>>, vector<1x256xf32>
    %c73 = arith.constant 73 : index
    %683 = memref.load %arg6[%c73] : memref<99xf32, #tpu.memory_space<smem>>
    %684 = vector.broadcast %683 : f32 to vector<1x256xf32>
    %685 = arith.mulf %682, %684 : vector<1x256xf32>
    %686 = arith.addf %681, %685 : vector<1x256xf32>
    %c2_i32_244 = arith.constant 2 : i32
    %687 = vector.broadcast %c2_i32_244 : i32 to vector<1x256xi32>
    %688 = arith.cmpi sge, %63, %687 : vector<1x256xi32>
    %c18_i32_245 = arith.constant 18 : i32
    %689 = vector.broadcast %c18_i32_245 : i32 to vector<1x256xi32>
    %690 = arith.cmpi slt, %63, %689 : vector<1x256xi32>
    %691 = arith.andi %688, %690 : vector<1x256xi1>
    %cst_246 = arith.constant 0.000000e+00 : f32
    %692 = vector.broadcast %cst_246 : f32 to vector<1x256xf32>
    %693 = arith.select %691, %686, %692 : vector<1x256xi1>, vector<1x256xf32>
    %694 = arith.addf %677, %693 : vector<1x256xf32>
    %c0_247 = arith.constant 0 : index
    %c159 = arith.constant 159 : index
    %695 = vector.load %arg8[%c0_247, %c159] : memref<1x512xf32, #tpu.memory_space<vmem>>, vector<1x256xf32>
    %c74 = arith.constant 74 : index
    %696 = memref.load %arg6[%c74] : memref<99xf32, #tpu.memory_space<smem>>
    %697 = vector.broadcast %696 : f32 to vector<1x256xf32>
    %698 = arith.mulf %695, %697 : vector<1x256xf32>
    %c0_248 = arith.constant 0 : index
    %c159_249 = arith.constant 159 : index
    %699 = vector.load %arg9[%c0_248, %c159_249] : memref<1x512xf32, #tpu.memory_space<vmem>>, vector<1x256xf32>
    %c75 = arith.constant 75 : index
    %700 = memref.load %arg6[%c75] : memref<99xf32, #tpu.memory_space<smem>>
    %701 = vector.broadcast %700 : f32 to vector<1x256xf32>
    %702 = arith.mulf %699, %701 : vector<1x256xf32>
    %703 = arith.addf %698, %702 : vector<1x256xf32>
    %c1_i32_250 = arith.constant 1 : i32
    %704 = vector.broadcast %c1_i32_250 : i32 to vector<1x256xi32>
    %705 = arith.cmpi sge, %63, %704 : vector<1x256xi32>
    %c17_i32_251 = arith.constant 17 : i32
    %706 = vector.broadcast %c17_i32_251 : i32 to vector<1x256xi32>
    %707 = arith.cmpi slt, %63, %706 : vector<1x256xi32>
    %708 = arith.andi %705, %707 : vector<1x256xi1>
    %cst_252 = arith.constant 0.000000e+00 : f32
    %709 = vector.broadcast %cst_252 : f32 to vector<1x256xf32>
    %710 = arith.select %708, %703, %709 : vector<1x256xi1>, vector<1x256xf32>
    %711 = arith.addf %694, %710 : vector<1x256xf32>
    %c0_253 = arith.constant 0 : index
    %c160 = arith.constant 160 : index
    %712 = vector.load %arg8[%c0_253, %c160] : memref<1x512xf32, #tpu.memory_space<vmem>>, vector<1x256xf32>
    %c76 = arith.constant 76 : index
    %713 = memref.load %arg6[%c76] : memref<99xf32, #tpu.memory_space<smem>>
    %714 = vector.broadcast %713 : f32 to vector<1x256xf32>
    %715 = arith.mulf %712, %714 : vector<1x256xf32>
    %c0_254 = arith.constant 0 : index
    %c160_255 = arith.constant 160 : index
    %716 = vector.load %arg9[%c0_254, %c160_255] : memref<1x512xf32, #tpu.memory_space<vmem>>, vector<1x256xf32>
    %c77_256 = arith.constant 77 : index
    %717 = memref.load %arg6[%c77_256] : memref<99xf32, #tpu.memory_space<smem>>
    %718 = vector.broadcast %717 : f32 to vector<1x256xf32>
    %719 = arith.mulf %716, %718 : vector<1x256xf32>
    %720 = arith.addf %715, %719 : vector<1x256xf32>
    %c0_i32_257 = arith.constant 0 : i32
    %721 = vector.broadcast %c0_i32_257 : i32 to vector<1x256xi32>
    %722 = arith.cmpi sge, %63, %721 : vector<1x256xi32>
    %c16_i32_258 = arith.constant 16 : i32
    %723 = vector.broadcast %c16_i32_258 : i32 to vector<1x256xi32>
    %724 = arith.cmpi slt, %63, %723 : vector<1x256xi32>
    %725 = arith.andi %722, %724 : vector<1x256xi1>
    %cst_259 = arith.constant 0.000000e+00 : f32
    %726 = vector.broadcast %cst_259 : f32 to vector<1x256xf32>
    %727 = arith.select %725, %720, %726 : vector<1x256xi1>, vector<1x256xf32>
    %728 = arith.addf %711, %727 : vector<1x256xf32>
    %c0_260 = arith.constant 0 : index
    %c161 = arith.constant 161 : index
    %729 = vector.load %arg8[%c0_260, %c161] : memref<1x512xf32, #tpu.memory_space<vmem>>, vector<1x256xf32>
    %c78_261 = arith.constant 78 : index
    %730 = memref.load %arg6[%c78_261] : memref<99xf32, #tpu.memory_space<smem>>
    %731 = vector.broadcast %730 : f32 to vector<1x256xf32>
    %732 = arith.mulf %729, %731 : vector<1x256xf32>
    %c0_262 = arith.constant 0 : index
    %c161_263 = arith.constant 161 : index
    %733 = vector.load %arg9[%c0_262, %c161_263] : memref<1x512xf32, #tpu.memory_space<vmem>>, vector<1x256xf32>
    %c79_264 = arith.constant 79 : index
    %734 = memref.load %arg6[%c79_264] : memref<99xf32, #tpu.memory_space<smem>>
    %735 = vector.broadcast %734 : f32 to vector<1x256xf32>
    %736 = arith.mulf %733, %735 : vector<1x256xf32>
    %737 = arith.addf %732, %736 : vector<1x256xf32>
    %c-1_i32_265 = arith.constant -1 : i32
    %738 = vector.broadcast %c-1_i32_265 : i32 to vector<1x256xi32>
    %739 = arith.cmpi sge, %63, %738 : vector<1x256xi32>
    %c15_i32_266 = arith.constant 15 : i32
    %740 = vector.broadcast %c15_i32_266 : i32 to vector<1x256xi32>
    %741 = arith.cmpi slt, %63, %740 : vector<1x256xi32>
    %742 = arith.andi %739, %741 : vector<1x256xi1>
    %cst_267 = arith.constant 0.000000e+00 : f32
    %743 = vector.broadcast %cst_267 : f32 to vector<1x256xf32>
    %744 = arith.select %742, %737, %743 : vector<1x256xi1>, vector<1x256xf32>
    %745 = arith.addf %728, %744 : vector<1x256xf32>
    %c0_268 = arith.constant 0 : index
    %c162 = arith.constant 162 : index
    %746 = vector.load %arg8[%c0_268, %c162] : memref<1x512xf32, #tpu.memory_space<vmem>>, vector<1x256xf32>
    %c80_269 = arith.constant 80 : index
    %747 = memref.load %arg6[%c80_269] : memref<99xf32, #tpu.memory_space<smem>>
    %748 = vector.broadcast %747 : f32 to vector<1x256xf32>
    %749 = arith.mulf %746, %748 : vector<1x256xf32>
    %c0_270 = arith.constant 0 : index
    %c162_271 = arith.constant 162 : index
    %750 = vector.load %arg9[%c0_270, %c162_271] : memref<1x512xf32, #tpu.memory_space<vmem>>, vector<1x256xf32>
    %c81_272 = arith.constant 81 : index
    %751 = memref.load %arg6[%c81_272] : memref<99xf32, #tpu.memory_space<smem>>
    %752 = vector.broadcast %751 : f32 to vector<1x256xf32>
    %753 = arith.mulf %750, %752 : vector<1x256xf32>
    %754 = arith.addf %749, %753 : vector<1x256xf32>
    %c-2_i32_273 = arith.constant -2 : i32
    %755 = vector.broadcast %c-2_i32_273 : i32 to vector<1x256xi32>
    %756 = arith.cmpi sge, %63, %755 : vector<1x256xi32>
    %c14_i32_274 = arith.constant 14 : i32
    %757 = vector.broadcast %c14_i32_274 : i32 to vector<1x256xi32>
    %758 = arith.cmpi slt, %63, %757 : vector<1x256xi32>
    %759 = arith.andi %756, %758 : vector<1x256xi1>
    %cst_275 = arith.constant 0.000000e+00 : f32
    %760 = vector.broadcast %cst_275 : f32 to vector<1x256xf32>
    %761 = arith.select %759, %754, %760 : vector<1x256xi1>, vector<1x256xf32>
    %762 = arith.addf %745, %761 : vector<1x256xf32>
    %c0_276 = arith.constant 0 : index
    %c163 = arith.constant 163 : index
    %763 = vector.load %arg8[%c0_276, %c163] : memref<1x512xf32, #tpu.memory_space<vmem>>, vector<1x256xf32>
    %c82_277 = arith.constant 82 : index
    %764 = memref.load %arg6[%c82_277] : memref<99xf32, #tpu.memory_space<smem>>
    %765 = vector.broadcast %764 : f32 to vector<1x256xf32>
    %766 = arith.mulf %763, %765 : vector<1x256xf32>
    %c0_278 = arith.constant 0 : index
    %c163_279 = arith.constant 163 : index
    %767 = vector.load %arg9[%c0_278, %c163_279] : memref<1x512xf32, #tpu.memory_space<vmem>>, vector<1x256xf32>
    %c83_280 = arith.constant 83 : index
    %768 = memref.load %arg6[%c83_280] : memref<99xf32, #tpu.memory_space<smem>>
    %769 = vector.broadcast %768 : f32 to vector<1x256xf32>
    %770 = arith.mulf %767, %769 : vector<1x256xf32>
    %771 = arith.addf %766, %770 : vector<1x256xf32>
    %c-3_i32_281 = arith.constant -3 : i32
    %772 = vector.broadcast %c-3_i32_281 : i32 to vector<1x256xi32>
    %773 = arith.cmpi sge, %63, %772 : vector<1x256xi32>
    %c13_i32_282 = arith.constant 13 : i32
    %774 = vector.broadcast %c13_i32_282 : i32 to vector<1x256xi32>
    %775 = arith.cmpi slt, %63, %774 : vector<1x256xi32>
    %776 = arith.andi %773, %775 : vector<1x256xi1>
    %cst_283 = arith.constant 0.000000e+00 : f32
    %777 = vector.broadcast %cst_283 : f32 to vector<1x256xf32>
    %778 = arith.select %776, %771, %777 : vector<1x256xi1>, vector<1x256xf32>
    %779 = arith.addf %762, %778 : vector<1x256xf32>
    %c0_284 = arith.constant 0 : index
    %c173 = arith.constant 173 : index
    %780 = vector.load %arg8[%c0_284, %c173] : memref<1x512xf32, #tpu.memory_space<vmem>>, vector<1x256xf32>
    %c84 = arith.constant 84 : index
    %781 = memref.load %arg6[%c84] : memref<99xf32, #tpu.memory_space<smem>>
    %782 = vector.broadcast %781 : f32 to vector<1x256xf32>
    %783 = arith.mulf %780, %782 : vector<1x256xf32>
    %c0_285 = arith.constant 0 : index
    %c173_286 = arith.constant 173 : index
    %784 = vector.load %arg9[%c0_285, %c173_286] : memref<1x512xf32, #tpu.memory_space<vmem>>, vector<1x256xf32>
    %c85 = arith.constant 85 : index
    %785 = memref.load %arg6[%c85] : memref<99xf32, #tpu.memory_space<smem>>
    %786 = vector.broadcast %785 : f32 to vector<1x256xf32>
    %787 = arith.mulf %784, %786 : vector<1x256xf32>
    %788 = arith.addf %783, %787 : vector<1x256xf32>
    %c3_i32_287 = arith.constant 3 : i32
    %789 = vector.broadcast %c3_i32_287 : i32 to vector<1x256xi32>
    %790 = arith.cmpi sge, %63, %789 : vector<1x256xi32>
    %c19_i32_288 = arith.constant 19 : i32
    %791 = vector.broadcast %c19_i32_288 : i32 to vector<1x256xi32>
    %792 = arith.cmpi slt, %63, %791 : vector<1x256xi32>
    %793 = arith.andi %790, %792 : vector<1x256xi1>
    %cst_289 = arith.constant 0.000000e+00 : f32
    %794 = vector.broadcast %cst_289 : f32 to vector<1x256xf32>
    %795 = arith.select %793, %788, %794 : vector<1x256xi1>, vector<1x256xf32>
    %796 = arith.addf %779, %795 : vector<1x256xf32>
    %c0_290 = arith.constant 0 : index
    %c174 = arith.constant 174 : index
    %797 = vector.load %arg8[%c0_290, %c174] : memref<1x512xf32, #tpu.memory_space<vmem>>, vector<1x256xf32>
    %c86 = arith.constant 86 : index
    %798 = memref.load %arg6[%c86] : memref<99xf32, #tpu.memory_space<smem>>
    %799 = vector.broadcast %798 : f32 to vector<1x256xf32>
    %800 = arith.mulf %797, %799 : vector<1x256xf32>
    %c0_291 = arith.constant 0 : index
    %c174_292 = arith.constant 174 : index
    %801 = vector.load %arg9[%c0_291, %c174_292] : memref<1x512xf32, #tpu.memory_space<vmem>>, vector<1x256xf32>
    %c87 = arith.constant 87 : index
    %802 = memref.load %arg6[%c87] : memref<99xf32, #tpu.memory_space<smem>>
    %803 = vector.broadcast %802 : f32 to vector<1x256xf32>
    %804 = arith.mulf %801, %803 : vector<1x256xf32>
    %805 = arith.addf %800, %804 : vector<1x256xf32>
    %c2_i32_293 = arith.constant 2 : i32
    %806 = vector.broadcast %c2_i32_293 : i32 to vector<1x256xi32>
    %807 = arith.cmpi sge, %63, %806 : vector<1x256xi32>
    %c18_i32_294 = arith.constant 18 : i32
    %808 = vector.broadcast %c18_i32_294 : i32 to vector<1x256xi32>
    %809 = arith.cmpi slt, %63, %808 : vector<1x256xi32>
    %810 = arith.andi %807, %809 : vector<1x256xi1>
    %cst_295 = arith.constant 0.000000e+00 : f32
    %811 = vector.broadcast %cst_295 : f32 to vector<1x256xf32>
    %812 = arith.select %810, %805, %811 : vector<1x256xi1>, vector<1x256xf32>
    %813 = arith.addf %796, %812 : vector<1x256xf32>
    %c0_296 = arith.constant 0 : index
    %c175 = arith.constant 175 : index
    %814 = vector.load %arg8[%c0_296, %c175] : memref<1x512xf32, #tpu.memory_space<vmem>>, vector<1x256xf32>
    %c88 = arith.constant 88 : index
    %815 = memref.load %arg6[%c88] : memref<99xf32, #tpu.memory_space<smem>>
    %816 = vector.broadcast %815 : f32 to vector<1x256xf32>
    %817 = arith.mulf %814, %816 : vector<1x256xf32>
    %c0_297 = arith.constant 0 : index
    %c175_298 = arith.constant 175 : index
    %818 = vector.load %arg9[%c0_297, %c175_298] : memref<1x512xf32, #tpu.memory_space<vmem>>, vector<1x256xf32>
    %c89 = arith.constant 89 : index
    %819 = memref.load %arg6[%c89] : memref<99xf32, #tpu.memory_space<smem>>
    %820 = vector.broadcast %819 : f32 to vector<1x256xf32>
    %821 = arith.mulf %818, %820 : vector<1x256xf32>
    %822 = arith.addf %817, %821 : vector<1x256xf32>
    %c1_i32_299 = arith.constant 1 : i32
    %823 = vector.broadcast %c1_i32_299 : i32 to vector<1x256xi32>
    %824 = arith.cmpi sge, %63, %823 : vector<1x256xi32>
    %c17_i32_300 = arith.constant 17 : i32
    %825 = vector.broadcast %c17_i32_300 : i32 to vector<1x256xi32>
    %826 = arith.cmpi slt, %63, %825 : vector<1x256xi32>
    %827 = arith.andi %824, %826 : vector<1x256xi1>
    %cst_301 = arith.constant 0.000000e+00 : f32
    %828 = vector.broadcast %cst_301 : f32 to vector<1x256xf32>
    %829 = arith.select %827, %822, %828 : vector<1x256xi1>, vector<1x256xf32>
    %830 = arith.addf %813, %829 : vector<1x256xf32>
    %c0_302 = arith.constant 0 : index
    %c176 = arith.constant 176 : index
    %831 = vector.load %arg8[%c0_302, %c176] : memref<1x512xf32, #tpu.memory_space<vmem>>, vector<1x256xf32>
    %c90 = arith.constant 90 : index
    %832 = memref.load %arg6[%c90] : memref<99xf32, #tpu.memory_space<smem>>
    %833 = vector.broadcast %832 : f32 to vector<1x256xf32>
    %834 = arith.mulf %831, %833 : vector<1x256xf32>
    %c0_303 = arith.constant 0 : index
    %c176_304 = arith.constant 176 : index
    %835 = vector.load %arg9[%c0_303, %c176_304] : memref<1x512xf32, #tpu.memory_space<vmem>>, vector<1x256xf32>
    %c91 = arith.constant 91 : index
    %836 = memref.load %arg6[%c91] : memref<99xf32, #tpu.memory_space<smem>>
    %837 = vector.broadcast %836 : f32 to vector<1x256xf32>
    %838 = arith.mulf %835, %837 : vector<1x256xf32>
    %839 = arith.addf %834, %838 : vector<1x256xf32>
    %c0_i32_305 = arith.constant 0 : i32
    %840 = vector.broadcast %c0_i32_305 : i32 to vector<1x256xi32>
    %841 = arith.cmpi sge, %63, %840 : vector<1x256xi32>
    %c16_i32_306 = arith.constant 16 : i32
    %842 = vector.broadcast %c16_i32_306 : i32 to vector<1x256xi32>
    %843 = arith.cmpi slt, %63, %842 : vector<1x256xi32>
    %844 = arith.andi %841, %843 : vector<1x256xi1>
    %cst_307 = arith.constant 0.000000e+00 : f32
    %845 = vector.broadcast %cst_307 : f32 to vector<1x256xf32>
    %846 = arith.select %844, %839, %845 : vector<1x256xi1>, vector<1x256xf32>
    %847 = arith.addf %830, %846 : vector<1x256xf32>
    %c0_308 = arith.constant 0 : index
    %c177 = arith.constant 177 : index
    %848 = vector.load %arg8[%c0_308, %c177] : memref<1x512xf32, #tpu.memory_space<vmem>>, vector<1x256xf32>
    %c92 = arith.constant 92 : index
    %849 = memref.load %arg6[%c92] : memref<99xf32, #tpu.memory_space<smem>>
    %850 = vector.broadcast %849 : f32 to vector<1x256xf32>
    %851 = arith.mulf %848, %850 : vector<1x256xf32>
    %c0_309 = arith.constant 0 : index
    %c177_310 = arith.constant 177 : index
    %852 = vector.load %arg9[%c0_309, %c177_310] : memref<1x512xf32, #tpu.memory_space<vmem>>, vector<1x256xf32>
    %c93_311 = arith.constant 93 : index
    %853 = memref.load %arg6[%c93_311] : memref<99xf32, #tpu.memory_space<smem>>
    %854 = vector.broadcast %853 : f32 to vector<1x256xf32>
    %855 = arith.mulf %852, %854 : vector<1x256xf32>
    %856 = arith.addf %851, %855 : vector<1x256xf32>
    %c-1_i32_312 = arith.constant -1 : i32
    %857 = vector.broadcast %c-1_i32_312 : i32 to vector<1x256xi32>
    %858 = arith.cmpi sge, %63, %857 : vector<1x256xi32>
    %c15_i32_313 = arith.constant 15 : i32
    %859 = vector.broadcast %c15_i32_313 : i32 to vector<1x256xi32>
    %860 = arith.cmpi slt, %63, %859 : vector<1x256xi32>
    %861 = arith.andi %858, %860 : vector<1x256xi1>
    %cst_314 = arith.constant 0.000000e+00 : f32
    %862 = vector.broadcast %cst_314 : f32 to vector<1x256xf32>
    %863 = arith.select %861, %856, %862 : vector<1x256xi1>, vector<1x256xf32>
    %864 = arith.addf %847, %863 : vector<1x256xf32>
    %c0_315 = arith.constant 0 : index
    %c178 = arith.constant 178 : index
    %865 = vector.load %arg8[%c0_315, %c178] : memref<1x512xf32, #tpu.memory_space<vmem>>, vector<1x256xf32>
    %c94_316 = arith.constant 94 : index
    %866 = memref.load %arg6[%c94_316] : memref<99xf32, #tpu.memory_space<smem>>
    %867 = vector.broadcast %866 : f32 to vector<1x256xf32>
    %868 = arith.mulf %865, %867 : vector<1x256xf32>
    %c0_317 = arith.constant 0 : index
    %c178_318 = arith.constant 178 : index
    %869 = vector.load %arg9[%c0_317, %c178_318] : memref<1x512xf32, #tpu.memory_space<vmem>>, vector<1x256xf32>
    %c95_319 = arith.constant 95 : index
    %870 = memref.load %arg6[%c95_319] : memref<99xf32, #tpu.memory_space<smem>>
    %871 = vector.broadcast %870 : f32 to vector<1x256xf32>
    %872 = arith.mulf %869, %871 : vector<1x256xf32>
    %873 = arith.addf %868, %872 : vector<1x256xf32>
    %c-2_i32_320 = arith.constant -2 : i32
    %874 = vector.broadcast %c-2_i32_320 : i32 to vector<1x256xi32>
    %875 = arith.cmpi sge, %63, %874 : vector<1x256xi32>
    %c14_i32_321 = arith.constant 14 : i32
    %876 = vector.broadcast %c14_i32_321 : i32 to vector<1x256xi32>
    %877 = arith.cmpi slt, %63, %876 : vector<1x256xi32>
    %878 = arith.andi %875, %877 : vector<1x256xi1>
    %cst_322 = arith.constant 0.000000e+00 : f32
    %879 = vector.broadcast %cst_322 : f32 to vector<1x256xf32>
    %880 = arith.select %878, %873, %879 : vector<1x256xi1>, vector<1x256xf32>
    %881 = arith.addf %864, %880 : vector<1x256xf32>
    %c0_323 = arith.constant 0 : index
    %c179 = arith.constant 179 : index
    %882 = vector.load %arg8[%c0_323, %c179] : memref<1x512xf32, #tpu.memory_space<vmem>>, vector<1x256xf32>
    %c96_324 = arith.constant 96 : index
    %883 = memref.load %arg6[%c96_324] : memref<99xf32, #tpu.memory_space<smem>>
    %884 = vector.broadcast %883 : f32 to vector<1x256xf32>
    %885 = arith.mulf %882, %884 : vector<1x256xf32>
    %c0_325 = arith.constant 0 : index
    %c179_326 = arith.constant 179 : index
    %886 = vector.load %arg9[%c0_325, %c179_326] : memref<1x512xf32, #tpu.memory_space<vmem>>, vector<1x256xf32>
    %c97_327 = arith.constant 97 : index
    %887 = memref.load %arg6[%c97_327] : memref<99xf32, #tpu.memory_space<smem>>
    %888 = vector.broadcast %887 : f32 to vector<1x256xf32>
    %889 = arith.mulf %886, %888 : vector<1x256xf32>
    %890 = arith.addf %885, %889 : vector<1x256xf32>
    %c-3_i32_328 = arith.constant -3 : i32
    %891 = vector.broadcast %c-3_i32_328 : i32 to vector<1x256xi32>
    %892 = arith.cmpi sge, %63, %891 : vector<1x256xi32>
    %c13_i32_329 = arith.constant 13 : i32
    %893 = vector.broadcast %c13_i32_329 : i32 to vector<1x256xi32>
    %894 = arith.cmpi slt, %63, %893 : vector<1x256xi32>
    %895 = arith.andi %892, %894 : vector<1x256xi1>
    %cst_330 = arith.constant 0.000000e+00 : f32
    %896 = vector.broadcast %cst_330 : f32 to vector<1x256xf32>
    %897 = arith.select %895, %890, %896 : vector<1x256xi1>, vector<1x256xf32>
    %898 = arith.addf %881, %897 : vector<1x256xf32>
    %899 = arith.negf %898 : vector<1x256xf32>
    %900 = math.exp %899 : vector<1x256xf32>
    %cst_331 = arith.constant 1.000000e+00 : f32
    %901 = vector.broadcast %cst_331 : f32 to vector<1x256xf32>
    %902 = arith.addf %901, %900 : vector<1x256xf32>
    %903 = arith.divf %901, %902 : vector<1x256xf32>
    %904 = vector.broadcast %903 : vector<1x256xf32> to vector<64x256xf32>
    %905 = arith.mulf %34, %904 : vector<64x256xf32>
    %c0_332 = arith.constant 0 : index
    %c0_333 = arith.constant 0 : index
    %c0_334 = arith.constant 0 : index
    %906 = vector.load %arg7[%c0_332, %c0_333, %c0_334] : memref<1x64x256xf32, #tpu.memory_space<vmem>>, vector<1x64x256xf32>
    %907 = vector.shape_cast %906 : vector<1x64x256xf32> to vector<64x256xf32>
    %908 = vector.shape_cast %905 : vector<64x256xf32> to vector<1x64x256xf32>
    tpu.vector_store %arg7[%c0_332, %c0_333, %c0_334], %908 {strides = array<i32>} : memref<1x64x256xf32, #tpu.memory_space<vmem>>, vector<1x64x256xf32>,
    return
  }
  func.func @transform_0(%arg0: i32) -> (i32, i32, i32) {
    %c0_i32 = arith.constant 0 : i32
    %c0_i32_0 = arith.constant 0 : i32
    %c0_i32_1 = arith.constant 0 : i32
    return %arg0, %c0_i32, %c0_i32_0 : i32, i32, i32
  }
  func.func @transform_1(%arg0: i32) -> (i32, i32) {
    %c0_i32 = arith.constant 0 : i32
    %c0_i32_0 = arith.constant 0 : i32
    %c0_i32_1 = arith.constant 0 : i32
    return %c0_i32, %c0_i32_0 : i32, i32
  }
  func.func @transform_2(%arg0: i32) -> (i32, i32) {
    %c0_i32 = arith.constant 0 : i32
    %c0_i32_0 = arith.constant 0 : i32
    %c0_i32_1 = arith.constant 0 : i32
    return %c0_i32, %c0_i32_0 : i32, i32
  }
  func.func @transform_3(%arg0: i32) -> (i32, i32) {
    %c0_i32 = arith.constant 0 : i32
    %c0_i32_0 = arith.constant 0 : i32
    %c0_i32_1 = arith.constant 0 : i32
    return %c0_i32, %c0_i32_0 : i32, i32
  }
  func.func @transform_4(%arg0: i32) -> (i32, i32) {
    %c0_i32 = arith.constant 0 : i32
    %c0_i32_0 = arith.constant 0 : i32
    %c0_i32_1 = arith.constant 0 : i32
    return %c0_i32, %c0_i32_0 : i32, i32
  }
  func.func @transform_5(%arg0: i32) -> i32 {
    %c0_i32 = arith.constant 0 : i32
    %c0_i32_0 = arith.constant 0 : i32
    return %c0_i32 : i32
  }
  func.func @transform_6(%arg0: i32) -> (i32, i32, i32) {
    %c0_i32 = arith.constant 0 : i32
    %c0_i32_0 = arith.constant 0 : i32
    %c0_i32_1 = arith.constant 0 : i32
    return %arg0, %c0_i32, %c0_i32_0 : i32, i32, i32
  }
}

</mosaic_0001>

<llo_original>
// kernel: _lambda_.1
$region0: #{_lambda_.1}
  #allocation0 [shape = 'u32[]', space=smem, size = 0x4, offset = 0x4, fixed_abs, tag = 'smem constant byte address 0x4 - core index']
  #allocation1 [shape = 'u32[144,128]{1,0:T(1,128)}', space=vmem, size = 0x12000, scoped, tag = 'internal scratch']
  #allocation2 [shape = 'f32[1,512]{1,0:T(1,128)}', space=vmem, size = 0x800, scoped, tag = 'scratch operand']
  #allocation3 [shape = 'f32[1,512]{1,0:T(1,128)}', space=vmem, size = 0x800, scoped, tag = 'scratch operand']
  %s0 = inlined_call_operand.vmem [shape: f32[2,64,256], index: 0, kind: input, shape index: {}]
  %s1 = inlined_call_operand.vmem [shape: f32[64,32], index: 1, kind: input, shape index: {}]
  %s2 = inlined_call_operand.vmem [shape: f32[1,32], index: 2, kind: input, shape index: {}]
  %s3 = inlined_call_operand.vmem [shape: f32[64,32], index: 3, kind: input, shape index: {}]
  %s4 = inlined_call_operand.vmem [shape: f32[64,1], index: 4, kind: input, shape index: {}]
  %s5 = inlined_call_operand.vmem [shape: f32[99], index: 5, kind: input, shape index: {}]
  %s6 = inlined_call_operand.vmem [shape: f32[2,64,256], index: 6, kind: output, shape index: {}]
  %s7 = sld [smem:[#allocation0]]
  $region61: #{_lambda_.1} parent=0
    _
  %s9 = ssub.s32 1, %s7
  %s10 = scalar_select 0, %s9, %s7
  $region1: #{_lambda_.1} parent=0
    #allocation4 [shape = 'u8[512]{0}', space=smem, size = 0x200, scoped, tag = 'input window, operand 5, single buffered']
    #allocation5 [shape = 's32[2]{0}', space=sflag, size = 0x8, scoped, tag = 'scoped memory for _lambda_.1']
    %11 = vsyncpa [#allocation5], 0
    loop: start=0, step=1, limit=4
    $region2: #{_lambda_.1} parent=1 // loop_pre_header
      _
    $region3: #{_lambda_.1} parent=1 // loop_header
      %s13 = sphi 0, %s17
      %p14 = scmp.ge.s32.totalorder %s13, 4
      %s23 = sphi 0, %s25
      %s26 = sphi 0, %s23
      %s27 = sphi 0, %s26
      %s43 = sphi 0, %s27
      %s47 = sphi 0, %s47
      %s49 = sphi 0, %s47
      %s50 = sphi 0, %s49
      %s64 = sphi 0, %s50
      %s68 = sphi 0, %s68
      %s70 = sphi 0, %s68
      %s71 = sphi 0, %s70
      %s85 = sphi 0, %s71
      %s89 = sphi 0, %s89
      %s91 = sphi 0, %s89
      %s92 = sphi 0, %s91
      %s106 = sphi 0, %s92
      %s110 = sphi 0, %s110
      %s112 = sphi 0, %s110
      %s113 = sphi 0, %s112
      %s127 = sphi 0, %s113
      %s131 = sphi 0, %s131
      %s133 = sphi 0, %s131
      %s134 = sphi 0, %s133
      %s148 = sphi 0, %s134
      %s154 = sphi 0, %s156
      %s157 = sphi 0, %s154
      %s158 = sphi 0, %s157
      %s174 = sphi 0, %s158
    $region4: #{_lambda_.1} parent=1 // loop_header_branch
      %16 = sbr.rel (%p14) target = $region8
    $region5: #{_lambda_.1} parent=1 // loop_body
      %s18 = ssub.s32 %s13, 1
      %s19 = ssub.s32 %s13, 2
      %s20 = sadd.s32 %s13, 1
      %s21 = ssub.s32 %s13, %s20
      %p22 = scmp.eq.s32.totalorder %s21, 0
      %s24 = sadd.s32 %s23, 1
      %s25 = scalar_select %p22, %s23, %s24
      %p28 = pneg %p22
      %p29 = scmp.eq.s32.totalorder %s13, 1
      %p30 = por %p28, %p29
      %p31 = scmp.ne.s32.totalorder %s23, %s26
      %p32 = scmp.eq.s32.totalorder %s13, 0
      %p33 = por %p31, %p32
      %p34 = scmp.ne.s32.totalorder %s23, %s26
      %p35 = scmp.eq.s32.totalorder %s18, 1
      %p36 = por %p34, %p35
      %p37 = scmp.ne.s32.totalorder %s26, %s27
      %p38 = scmp.eq.s32.totalorder %s18, 0
      %p39 = por %p37, %p38
      %p40 = scmp.ne.s32.totalorder %s26, %s27
      %p41 = scmp.eq.s32.totalorder %s19, 1
      %p42 = por %p40, %p41
      %p44 = scmp.ne.s32.totalorder %s27, %s43
      %p45 = scmp.eq.s32.totalorder %s19, 0
      %p46 = por %p44, %p45
      %s48 = sadd.s32 %s47, 1
      %p51 = scmp.eq.s32.totalorder %s13, 1
      %p52 = scmp.ne.s32.totalorder %s47, %s49
      %p53 = scmp.eq.s32.totalorder %s13, 0
      %p54 = por %p52, %p53
      %p55 = scmp.ne.s32.totalorder %s47, %s49
      %p56 = scmp.eq.s32.totalorder %s18, 1
      %p57 = por %p55, %p56
      %p58 = scmp.ne.s32.totalorder %s49, %s50
      %p59 = scmp.eq.s32.totalorder %s18, 0
      %p60 = por %p58, %p59
      %p61 = scmp.ne.s32.totalorder %s49, %s50
      %p62 = scmp.eq.s32.totalorder %s19, 1
      %p63 = por %p61, %p62
      %p65 = scmp.ne.s32.totalorder %s50, %s64
      %p66 = scmp.eq.s32.totalorder %s19, 0
      %p67 = por %p65, %p66
      %s69 = sadd.s32 %s68, 1
      %p72 = scmp.eq.s32.totalorder %s13, 1
      %p73 = scmp.ne.s32.totalorder %s68, %s70
      %p74 = scmp.eq.s32.totalorder %s13, 0
      %p75 = por %p73, %p74
      %p76 = scmp.ne.s32.totalorder %s68, %s70
      %p77 = scmp.eq.s32.totalorder %s18, 1
      %p78 = por %p76, %p77
      %p79 = scmp.ne.s32.totalorder %s70, %s71
      %p80 = scmp.eq.s32.totalorder %s18, 0
      %p81 = por %p79, %p80
      %p82 = scmp.ne.s32.totalorder %s70, %s71
      %p83 = scmp.eq.s32.totalorder %s19, 1
      %p84 = por %p82, %p83
      %p86 = scmp.ne.s32.totalorder %s71, %s85
      %p87 = scmp.eq.s32.totalorder %s19, 0
      %p88 = por %p86, %p87
      %s90 = sadd.s32 %s89, 1
      %p93 = scmp.eq.s32.totalorder %s13, 1
      %p94 = scmp.ne.s32.totalorder %s89, %s91
      %p95 = scmp.eq.s32.totalorder %s13, 0
      %p96 = por %p94, %p95
      %p97 = scmp.ne.s32.totalorder %s89, %s91
      %p98 = scmp.eq.s32.totalorder %s18, 1
      %p99 = por %p97, %p98
      %p100 = scmp.ne.s32.totalorder %s91, %s92
      %p101 = scmp.eq.s32.totalorder %s18, 0
      %p102 = por %p100, %p101
      %p103 = scmp.ne.s32.totalorder %s91, %s92
      %p104 = scmp.eq.s32.totalorder %s19, 1
      %p105 = por %p103, %p104
      %p107 = scmp.ne.s32.totalorder %s92, %s106
      %p108 = scmp.eq.s32.totalorder %s19, 0
      %p109 = por %p107, %p108
      %s111 = sadd.s32 %s110, 1
      %p114 = scmp.eq.s32.totalorder %s13, 1
      %p115 = scmp.ne.s32.totalorder %s110, %s112
      %p116 = scmp.eq.s32.totalorder %s13, 0
      %p117 = por %p115, %p116
      %p118 = scmp.ne.s32.totalorder %s110, %s112
      %p119 = scmp.eq.s32.totalorder %s18, 1
      %p120 = por %p118, %p119
      %p121 = scmp.ne.s32.totalorder %s112, %s113
      %p122 = scmp.eq.s32.totalorder %s18, 0
      %p123 = por %p121, %p122
      %p124 = scmp.ne.s32.totalorder %s112, %s113
      %p125 = scmp.eq.s32.totalorder %s19, 1
      %p126 = por %p124, %p125
      %p128 = scmp.ne.s32.totalorder %s113, %s127
      %p129 = scmp.eq.s32.totalorder %s19, 0
      %p130 = por %p128, %p129
      %s132 = sadd.s32 %s131, 1
      %p135 = scmp.eq.s32.totalorder %s13, 1
      %p136 = scmp.ne.s32.totalorder %s131, %s133
      %p137 = scmp.eq.s32.totalorder %s13, 0
      %p138 = por %p136, %p137
      %p139 = scmp.ne.s32.totalorder %s131, %s133
      %p140 = scmp.eq.s32.totalorder %s18, 1
      %p141 = por %p139, %p140
      %p142 = scmp.ne.s32.totalorder %s133, %s134
      %p143 = scmp.eq.s32.totalorder %s18, 0
      %p144 = por %p142, %p143
      %p145 = scmp.ne.s32.totalorder %s133, %s134
      %p146 = scmp.eq.s32.totalorder %s19, 1
      %p147 = por %p145, %p146
      %p149 = scmp.ne.s32.totalorder %s134, %s148
      %p150 = scmp.eq.s32.totalorder %s19, 0
      %p151 = por %p149, %p150
      %s152 = ssub.s32 %s13, %s20
      %p153 = scmp.eq.s32.totalorder %s152, 0
      %s155 = sadd.s32 %s154, 1
      %s156 = scalar_select %p153, %s154, %s155
      %p159 = pneg %p153
      %p160 = scmp.eq.s32.totalorder %s13, 1
      %p161 = por %p159, %p160
      %p162 = scmp.ne.s32.totalorder %s154, %s157
      %p163 = scmp.eq.s32.totalorder %s13, 0
      %p164 = por %p162, %p163
      %p165 = scmp.ne.s32.totalorder %s154, %s157
      %p166 = scmp.eq.s32.totalorder %s18, 1
      %p167 = por %p165, %p166
      %p168 = scmp.ne.s32.totalorder %s157, %s158
      %p169 = scmp.eq.s32.totalorder %s18, 0
      %p170 = por %p168, %p169
      %p171 = scmp.ne.s32.totalorder %s157, %s158
      %p172 = scmp.eq.s32.totalorder %s19, 1
      %p173 = por %p171, %p172
      %p175 = scmp.ne.s32.totalorder %s158, %s174
      %p176 = scmp.eq.s32.totalorder %s19, 0
      %p177 = por %p175, %p176
      %p178 = scmp.le.s32.totalorder 1, %s13
      %p179 = scmp.lt.s32.totalorder %s13, 3
      %p180 = pnand %p178, %p179
      %p181 = pneg %p180
      // Predicated region
      $region9: #{_lambda_.1} parent=5 // pred_check
        _
      $region10: #{_lambda_.1} parent=5 // pred_check_branch
        %183 = sbr.rel (%p180) target = $region12
      $region11: #{_lambda_.1} parent=5 // pred_region
        %s184 = ssub.s32 %s13, 1
        // Predicated region
        $region13: #{_lambda_.1} parent=11 // pred_check
          %p185 = pneg %p60
        $region14: #{_lambda_.1} parent=11 // pred_check_branch
          %187 = sbr.rel (%p185) target = $region16
        $region15: #{_lambda_.1} parent=11 // pred_region
          _
        $region16: #{_lambda_.1} parent=11 // pred_fallthru
          _
        // Predicated region
        $region17: #{_lambda_.1} parent=11 // pred_check
          %p188 = pneg %p81
        $region18: #{_lambda_.1} parent=11 // pred_check_branch
          %190 = sbr.rel (%p188) target = $region20
        $region19: #{_lambda_.1} parent=11 // pred_region
          _
        $region20: #{_lambda_.1} parent=11 // pred_fallthru
          _
        // Predicated region
        $region21: #{_lambda_.1} parent=11 // pred_check
          %p191 = pneg %p102
        $region22: #{_lambda_.1} parent=11 // pred_check_branch
          %193 = sbr.rel (%p191) target = $region24
        $region23: #{_lambda_.1} parent=11 // pred_region
          _
        $region24: #{_lambda_.1} parent=11 // pred_fallthru
          _
        // Predicated region
        $region25: #{_lambda_.1} parent=11 // pred_check
          %p194 = pneg %p123
        $region26: #{_lambda_.1} parent=11 // pred_check_branch
          %196 = sbr.rel (%p194) target = $region28
        $region27: #{_lambda_.1} parent=11 // pred_region
          _
        $region28: #{_lambda_.1} parent=11 // pred_fallthru
          _
        // Predicated region
        $region29: #{_lambda_.1} parent=11 // pred_check
          %p197 = pneg %p144
        $region30: #{_lambda_.1} parent=11 // pred_check_branch
          %199 = sbr.rel (%p197) target = $region32
        $region31: #{_lambda_.1} parent=11 // pred_region
          %s201 = ssub.s32 16, 16
          %202 = vsyncadd [#allocation5], %s201
          %s204 = sshll.u32 %s5, 4
          %s205 = int_to_ptr.vmem [resolvable:$true] %s204
          %207 = dma.vmem_to_smem %s205, 16, [#allocation4], [#allocation5]
        $region32: #{_lambda_.1} parent=11 // pred_fallthru
          _
      $region12: #{_lambda_.1} parent=5 // pred_fallthru
        _
      %p208 = scmp.lt.s32.totalorder %s13, 2
      // Predicated region
      $region33: #{_lambda_.1} parent=5 // pred_check
        %p209 = pneg %p208
      $region34: #{_lambda_.1} parent=5 // pred_check_branch
        %211 = sbr.rel (%p209) target = $region36
      $region35: #{_lambda_.1} parent=5 // pred_region
        // Predicated region
        $region37: #{_lambda_.1} parent=35 // pred_check
          %p212 = pneg %p33
        $region38: #{_lambda_.1} parent=35 // pred_check_branch
          %214 = sbr.rel (%p212) target = $region40
        $region39: #{_lambda_.1} parent=35 // pred_region
          %p215 = scmp.lt.s32.totalorder %s13, 1
          %s216 = scalar_select %p215, %s13, 1
          %s217 = smul.addr %s216, 16
          %s218 = smul.addr %s217, 8
          %s219 = scalar_lea.vmem %s0, %s218
        $region40: #{_lambda_.1} parent=35 // pred_fallthru
          _
      $region36: #{_lambda_.1} parent=5 // pred_fallthru
        _
      %p220 = scmp.le.s32.totalorder 1, %s13
      %p221 = scmp.lt.s32.totalorder %s13, 3
      %p222 = pnand %p220, %p221
      %p223 = pneg %p222
      // Predicated region
      $region41: #{_lambda_.1} parent=5 // pred_check
        _
      $region42: #{_lambda_.1} parent=5 // pred_check_branch
        %225 = sbr.rel (%p222) target = $region44
      $region43: #{_lambda_.1} parent=5 // pred_region
        %s226 = ssub.s32 %s13, 1
        // Predicated region
        $region45: #{_lambda_.1} parent=43 // pred_check
          %p227 = pneg %p144
        $region46: #{_lambda_.1} parent=43 // pred_check_branch
          %229 = sbr.rel (%p227) target = $region48
        $region47: #{_lambda_.1} parent=43 // pred_region
          %230 = dma.done [#allocation5], 16
        $region48: #{_lambda_.1} parent=43 // pred_fallthru
          _
        %231 = sfence
        %p232 = scmp.lt.s32.totalorder %s18, 1
        %s233 = scalar_select %p232, %s18, 1
        %s234 = smul.addr %s233, 16
        %s235 = smul.addr %s234, 8
        %s236 = scalar_lea.vmem %s0, %s235
        %p237 = pneg %p39
        %p238 = pneg %p36
        %p239 = pneg %p60
        %p240 = pneg %p57
        %p241 = pneg %p81
        %p242 = pneg %p78
        %p243 = pneg %p102
        %p244 = pneg %p99
        %p245 = pneg %p123
        %p246 = pneg %p120
        %p247 = pneg %p144
        %p248 = pneg %p141
        %p249 = pneg %p170
        %p250 = pneg %p167
        %p251 = scmp.lt.s32.totalorder %s18, 1
        %s252 = scalar_select %p251, %s18, 1
        %s253 = smul.addr %s252, 16
        %s254 = smul.addr %s253, 8
        %s255 = scalar_lea.vmem %s6, %s254
        %p256 = scmp.lt.s32.totalorder %s18, 1
        %s257 = scalar_select %p256, %s18, 1
        %s258 = smul.addr %s257, 16
        %s259 = smul.addr %s258, 8
        %s260 = scalar_lea.vmem %s0, %s259
        %p261 = scmp.lt.s32.totalorder %s18, 1
        %s262 = scalar_select %p261, %s18, 1
        %s263 = smul.addr %s262, 16
        %s264 = smul.addr %s263, 8
        %s265 = scalar_lea.vmem %s6, %s264
        %v266 = vld [vmem:[%s260] sm:$0xff]
        %v267 = vld [vmem:[%s260 + $0x8] sm:$0xff]
        %v268 = vld [vmem:[%s260 + $0x10] sm:$0xff]
        %v269 = vld [vmem:[%s260 + $0x18] sm:$0xff]
        %v270 = vld [vmem:[%s260 + $0x20] sm:$0xff]
        %v271 = vld [vmem:[%s260 + $0x28] sm:$0xff]
        %v272 = vld [vmem:[%s260 + $0x30] sm:$0xff]
        %v273 = vld [vmem:[%s260 + $0x38] sm:$0xff]
        %v274 = vld [vmem:[%s260 + $0x40] sm:$0xff]
        %v275 = vld [vmem:[%s260 + $0x48] sm:$0xff]
        %v276 = vld [vmem:[%s260 + $0x50] sm:$0xff]
        %v277 = vld [vmem:[%s260 + $0x58] sm:$0xff]
        %v278 = vld [vmem:[%s260 + $0x60] sm:$0xff]
        %v279 = vld [vmem:[%s260 + $0x68] sm:$0xff]
        %v280 = vld [vmem:[%s260 + $0x70] sm:$0xff]
        %v281 = vld [vmem:[%s260 + $0x78] sm:$0xff]
        %v282 = vmax.f32 %v266, %v267
        %283 = vmax.xlane.f32.xlu0 %v282
        %v284 = vpop.xlane.xlu0 %283
        %v285 = vmax.f32 %v268, %v269
        %286 = vmax.xlane.f32.xlu0 %v285
        %v287 = vpop.xlane.xlu0 %286
        %v288 = vmax.f32 %v270, %v271
        %289 = vmax.xlane.f32.xlu0 %v288
        %v290 = vpop.xlane.xlu0 %289
        %v291 = vmax.f32 %v272, %v273
        %292 = vmax.xlane.f32.xlu0 %v291
        %v293 = vpop.xlane.xlu0 %292
        %v294 = vmax.f32 %v274, %v275
        %295 = vmax.xlane.f32.xlu0 %v294
        %v296 = vpop.xlane.xlu0 %295
        %v297 = vmax.f32 %v276, %v277
        %298 = vmax.xlane.f32.xlu0 %v297
        %v299 = vpop.xlane.xlu0 %298
        %v300 = vmax.f32 %v278, %v279
        %301 = vmax.xlane.f32.xlu0 %v300
        %v302 = vpop.xlane.xlu0 %301
        %v303 = vmax.f32 %v280, %v281
        %304 = vmax.xlane.f32.xlu0 %v303
        %v305 = vpop.xlane.xlu0 %304
        %v306 = vld [vmem:[%s1] sm:$0xff]
        %v307 = vld [vmem:[%s1 + $0x8] sm:$0xff]
        %v308 = vld [vmem:[%s1 + $0x10] sm:$0xff]
        %v309 = vld [vmem:[%s1 + $0x18] sm:$0xff]
        %v310 = vld [vmem:[%s1 + $0x20] sm:$0xff]
        %v311 = vld [vmem:[%s1 + $0x28] sm:$0xff]
        %v312 = vld [vmem:[%s1 + $0x30] sm:$0xff]
        %v313 = vld [vmem:[%s1 + $0x38] sm:$0xff]
        %v314 = vmul.f32 %v306, %v284
        %v315 = vmul.f32 %v307, %v287
        %v316 = vmul.f32 %v308, %v290
        %v317 = vmul.f32 %v309, %v293
        %v318 = vmul.f32 %v310, %v296
        %v319 = vmul.f32 %v311, %v299
        %v320 = vmul.f32 %v312, %v302
        %v321 = vmul.f32 %v313, %v305
        %vm322 = vcmask 261120
        %v323 = vsel %vm322, %v314, 0.0
        %v324 = vsel %vm322, %v315, 0.0
        %v325 = vadd.f32 %v323, %v324
        %v326 = vsel %vm322, %v316, 0.0
        %v327 = vadd.f32 %v325, %v326
        %v328 = vsel %vm322, %v317, 0.0
        %v329 = vadd.f32 %v327, %v328
        %v330 = vsel %vm322, %v318, 0.0
        %v331 = vadd.f32 %v329, %v330
        %v332 = vsel %vm322, %v319, 0.0
        %v333 = vadd.f32 %v331, %v332
        %v334 = vsel %vm322, %v320, 0.0
        %v335 = vadd.f32 %v333, %v334
        %v336 = vsel %vm322, %v321, 0.0
        %v337 = vadd.f32 %v335, %v336
        %v338 = vrot.slane %v337, 4
        %v339 = vadd.f32 %v337, %v338
        %v340 = vrot.slane %v339, 2
        %v341 = vadd.f32 %v339, %v340
        %v342 = vrot.slane %v341, 1
        %v343 = vadd.f32 %v341, %v342
        %v344 = vld [vmem:[%s2] sm:$0x1]
        %v345 = vadd.f32 %v343, %v344
        %v346 = vmax.f32 %v345, 0.0
        %v347 = vld [vmem:[%s3] sm:$0xff]
        %v348 = vld [vmem:[%s3 + $0x8] sm:$0xff]
        %v349 = vld [vmem:[%s3 + $0x10] sm:$0xff]
        %v350 = vld [vmem:[%s3 + $0x18] sm:$0xff]
        %v351 = vld [vmem:[%s3 + $0x20] sm:$0xff]
        %v352 = vld [vmem:[%s3 + $0x28] sm:$0xff]
        %v353 = vld [vmem:[%s3 + $0x30] sm:$0xff]
        %v354 = vld [vmem:[%s3 + $0x38] sm:$0xff]
        %v355 = vlaneseq
        %v356 = vshrl.u32 %v355, 7
        %v357 = vsub.s32 0, %v356
        %v358 = vrot.slane %v346, %v357
        %v359 = vmul.f32 %v347, %v358
        %v360 = vmul.f32 %v348, %v358
        %v361 = vmul.f32 %v349, %v358
        %v362 = vmul.f32 %v350, %v358
        %v363 = vmul.f32 %v351, %v358
        %v364 = vmul.f32 %v352, %v358
        %v365 = vmul.f32 %v353, %v358
        %v366 = vmul.f32 %v354, %v358
        %v367 = vsel %vm322, %v359, 0.0
        %368 = vadd.xlane.f32.xlu0 %v367
        %v369 = vpop.xlane.xlu0 %368
        %v370 = vsel %vm322, %v360, 0.0
        %371 = vadd.xlane.f32.xlu0 %v370
        %v372 = vpop.xlane.xlu0 %371
        %v373 = vsel %vm322, %v361, 0.0
        %374 = vadd.xlane.f32.xlu0 %v373
        %v375 = vpop.xlane.xlu0 %374
        %v376 = vsel %vm322, %v362, 0.0
        %377 = vadd.xlane.f32.xlu0 %v376
        %v378 = vpop.xlane.xlu0 %377
        %v379 = vsel %vm322, %v363, 0.0
        %380 = vadd.xlane.f32.xlu0 %v379
        %v381 = vpop.xlane.xlu0 %380
        %v382 = vsel %vm322, %v364, 0.0
        %383 = vadd.xlane.f32.xlu0 %v382
        %v384 = vpop.xlane.xlu0 %383
        %v385 = vsel %vm322, %v365, 0.0
        %386 = vadd.xlane.f32.xlu0 %v385
        %v387 = vpop.xlane.xlu0 %386
        %v388 = vsel %vm322, %v366, 0.0
        %389 = vadd.xlane.f32.xlu0 %v388
        %v390 = vpop.xlane.xlu0 %389
        %v391 = vld [vmem:[%s4] sm:$0xff]
        %v392 = vld [vmem:[%s4 + $0x8] sm:$0xff]
        %v393 = vld [vmem:[%s4 + $0x10] sm:$0xff]
        %v394 = vld [vmem:[%s4 + $0x18] sm:$0xff]
        %v395 = vld [vmem:[%s4 + $0x20] sm:$0xff]
        %v396 = vld [vmem:[%s4 + $0x28] sm:$0xff]
        %v397 = vld [vmem:[%s4 + $0x30] sm:$0xff]
        %v398 = vld [vmem:[%s4 + $0x38] sm:$0xff]
        %v399 = vadd.f32 %v369, %v391
        %v400 = vadd.f32 %v372, %v392
        %v401 = vadd.f32 %v375, %v393
        %v402 = vadd.f32 %v378, %v394
        %v403 = vadd.f32 %v381, %v395
        %v404 = vadd.f32 %v384, %v396
        %v405 = vadd.f32 %v387, %v397
        %v406 = vadd.f32 %v390, %v398
        %v407 = vxor.u32 %v399, 2147483648
        %v408 = vxor.u32 %v400, 2147483648
        %v409 = vxor.u32 %v401, 2147483648
        %v410 = vxor.u32 %v402, 2147483648
        %v411 = vxor.u32 %v403, 2147483648
        %v412 = vxor.u32 %v404, 2147483648
        %v413 = vxor.u32 %v405, 2147483648
        %v414 = vxor.u32 %v406, 2147483648
        %v415 = vmul.f32 %v407, 1.442695
        %v416 = vpow.pop %v415
        %v417 = vmul.f32 %v408, 1.442695
        %v418 = vpow.pop %v417
        %v419 = vmul.f32 %v409, 1.442695
        %v420 = vpow.pop %v419
        %v421 = vmul.f32 %v410, 1.442695
        %v422 = vpow.pop %v421
        %v423 = vmul.f32 %v411, 1.442695
        %v424 = vpow.pop %v423
        %v425 = vmul.f32 %v412, 1.442695
        %v426 = vpow.pop %v425
        %v427 = vmul.f32 %v413, 1.442695
        %v428 = vpow.pop %v427
        %v429 = vmul.f32 %v414, 1.442695
        %v430 = vpow.pop %v429
        %v431 = vadd.f32 %v416, 1.0
        %v432 = vadd.f32 %v418, 1.0
        %v433 = vadd.f32 %v420, 1.0
        %v434 = vadd.f32 %v422, 1.0
        %v435 = vadd.f32 %v424, 1.0
        %v436 = vadd.f32 %v426, 1.0
        %v437 = vadd.f32 %v428, 1.0
        %v438 = vadd.f32 %v430, 1.0
        %v439 = vrcp.pop %v431
        %v440 = vmul.f32 1.0, %v439
        %v441 = vrcp.pop %v432
        %v442 = vmul.f32 1.0, %v441
        %v443 = vrcp.pop %v433
        %v444 = vmul.f32 1.0, %v443
        %v445 = vrcp.pop %v434
        %v446 = vmul.f32 1.0, %v445
        %v447 = vrcp.pop %v435
        %v448 = vmul.f32 1.0, %v447
        %v449 = vrcp.pop %v436
        %v450 = vmul.f32 1.0, %v449
        %v451 = vrcp.pop %v437
        %v452 = vmul.f32 1.0, %v451
        %v453 = vrcp.pop %v438
        %v454 = vmul.f32 1.0, %v453
        %v455 = vadd.f32 %v440, %v440
        %v456 = vadd.f32 %v442, %v442
        %v457 = vadd.f32 %v444, %v444
        %v458 = vadd.f32 %v446, %v446
        %v459 = vadd.f32 %v448, %v448
        %v460 = vadd.f32 %v450, %v450
        %v461 = vadd.f32 %v452, %v452
        %v462 = vadd.f32 %v454, %v454
        %v463 = vxor.u32 %v455, 2147483648
        %v464 = vxor.u32 %v456, 2147483648
        %v465 = vxor.u32 %v457, 2147483648
        %v466 = vxor.u32 %v458, 2147483648
        %v467 = vxor.u32 %v459, 2147483648
        %v468 = vxor.u32 %v460, 2147483648
        %v469 = vxor.u32 %v461, 2147483648
        %v470 = vxor.u32 %v462, 2147483648
        %v471 = vmul.f32 %v463, 1.442695
        %v472 = vpow.pop %v471
        %v473 = vmul.f32 %v464, 1.442695
        %v474 = vpow.pop %v473
        %v475 = vmul.f32 %v465, 1.442695
        %v476 = vpow.pop %v475
        %v477 = vmul.f32 %v466, 1.442695
        %v478 = vpow.pop %v477
        %v479 = vmul.f32 %v467, 1.442695
        %v480 = vpow.pop %v479
        %v481 = vmul.f32 %v468, 1.442695
        %v482 = vpow.pop %v481
        %v483 = vmul.f32 %v469, 1.442695
        %v484 = vpow.pop %v483
        %v485 = vmul.f32 %v470, 1.442695
        %v486 = vpow.pop %v485
        %v487 = vadd.f32 %v472, 1.0
        %v488 = vadd.f32 %v474, 1.0
        %v489 = vadd.f32 %v476, 1.0
        %v490 = vadd.f32 %v478, 1.0
        %v491 = vadd.f32 %v480, 1.0
        %v492 = vadd.f32 %v482, 1.0
        %v493 = vadd.f32 %v484, 1.0
        %v494 = vadd.f32 %v486, 1.0
        %v495 = vrcp.pop %v487
        %v496 = vmul.f32 1.0, %v495
        %v497 = vrcp.pop %v488
        %v498 = vmul.f32 1.0, %v497
        %v499 = vrcp.pop %v489
        %v500 = vmul.f32 1.0, %v499
        %v501 = vrcp.pop %v490
        %v502 = vmul.f32 1.0, %v501
        %v503 = vrcp.pop %v491
        %v504 = vmul.f32 1.0, %v503
        %v505 = vrcp.pop %v492
        %v506 = vmul.f32 1.0, %v505
        %v507 = vrcp.pop %v493
        %v508 = vmul.f32 1.0, %v507
        %v509 = vrcp.pop %v494
        %v510 = vmul.f32 1.0, %v509
        %512 = vset.pattern.permute.xlu0 0
        %513 = vperm.xlu0 %512, %v496
        %v514 = vpop.permute.xlu0 %513
        %517 = vset.pattern.permute.xlu0 0
        %518 = vperm.xlu0 %517, %v498
        %v519 = vpop.permute.xlu0 %518
        %522 = vset.pattern.permute.xlu0 0
        %523 = vperm.xlu0 %522, %v500
        %v524 = vpop.permute.xlu0 %523
        %527 = vset.pattern.permute.xlu0 0
        %528 = vperm.xlu0 %527, %v502
        %v529 = vpop.permute.xlu0 %528
        %532 = vset.pattern.permute.xlu0 0
        %533 = vperm.xlu0 %532, %v504
        %v534 = vpop.permute.xlu0 %533
        %537 = vset.pattern.permute.xlu0 0
        %538 = vperm.xlu0 %537, %v506
        %v539 = vpop.permute.xlu0 %538
        %542 = vset.pattern.permute.xlu0 0
        %543 = vperm.xlu0 %542, %v508
        %v544 = vpop.permute.xlu0 %543
        %547 = vset.pattern.permute.xlu0 0
        %548 = vperm.xlu0 %547, %v510
        %v549 = vpop.permute.xlu0 %548
        %v551 = vmul.f32 %v266, %v514
        %v552 = vmul.f32 %v267, %v514
        %v553 = vmul.f32 %v268, %v519
        %v554 = vmul.f32 %v269, %v519
        %v555 = vmul.f32 %v270, %v524
        %v556 = vmul.f32 %v271, %v524
        %v557 = vmul.f32 %v272, %v529
        %v558 = vmul.f32 %v273, %v529
        %v559 = vmul.f32 %v274, %v534
        %v560 = vmul.f32 %v275, %v534
        %v561 = vmul.f32 %v276, %v539
        %v562 = vmul.f32 %v277, %v539
        %v563 = vmul.f32 %v278, %v544
        %v564 = vmul.f32 %v279, %v544
        %v565 = vmul.f32 %v280, %v549
        %v566 = vmul.f32 %v281, %v549
        %v567 = vmax.f32 %v551, %v555
        %v568 = vmax.f32 %v553, %v557
        %v569 = vmax.f32 %v567, %v559
        %v570 = vmax.f32 %v568, %v561
        %v571 = vmax.f32 %v569, %v563
        %v572 = vmax.f32 %v570, %v565
        %v573 = vmax.f32 %v571, %v572
        %v574 = vrot.slane %v573, 4
        %v575 = vmax.f32 %v573, %v574
        %v576 = vrot.slane %v575, 2
        %v577 = vmax.f32 %v575, %v576
        %v578 = vrot.slane %v577, 1
        %v579 = vmax.f32 %v577, %v578
        %v580 = vmax.f32 %v552, %v556
        %v581 = vmax.f32 %v554, %v558
        %v582 = vmax.f32 %v580, %v560
        %v583 = vmax.f32 %v581, %v562
        %v584 = vmax.f32 %v582, %v564
        %v585 = vmax.f32 %v583, %v566
        %v586 = vmax.f32 %v584, %v585
        %v587 = vrot.slane %v586, 4
        %v588 = vmax.f32 %v586, %v587
        %v589 = vrot.slane %v588, 2
        %v590 = vmax.f32 %v588, %v589
        %v591 = vrot.slane %v590, 1
        %v592 = vmax.f32 %v590, %v591
        %v593 = vadd.f32 %v551, %v553
        %v594 = vadd.f32 %v593, %v555
        %v595 = vadd.f32 %v594, %v557
        %v596 = vadd.f32 %v595, %v559
        %v597 = vadd.f32 %v596, %v561
        %v598 = vadd.f32 %v597, %v563
        %v599 = vadd.f32 %v598, %v565
        %v600 = vrot.slane %v599, 4
        %v601 = vadd.f32 %v599, %v600
        %v602 = vrot.slane %v601, 2
        %v603 = vadd.f32 %v601, %v602
        %v604 = vrot.slane %v603, 1
        %v605 = vadd.f32 %v603, %v604
        %v606 = vadd.f32 %v552, %v554
        %v607 = vadd.f32 %v606, %v556
        %v608 = vadd.f32 %v607, %v558
        %v609 = vadd.f32 %v608, %v560
        %v610 = vadd.f32 %v609, %v562
        %v611 = vadd.f32 %v610, %v564
        %v612 = vadd.f32 %v611, %v566
        %v613 = vrot.slane %v612, 4
        %v614 = vadd.f32 %v612, %v613
        %v615 = vrot.slane %v614, 2
        %v616 = vadd.f32 %v614, %v615
        %v617 = vrot.slane %v616, 1
        %v618 = vadd.f32 %v616, %v617
        %v619 = vrcp.pop 64.0
        %v620 = vmul.f32 %v605, %v619
        %v621 = vmul.f32 %v618, %v619
        %v622 = vlaneseq
        %vm623 = vcmp.ge.s32.totalorder %v622, 0
        %vm624 = vcmp.lt.s32.totalorder %v622, 512
        %vm625 = vmand %vm623, %vm624
        %626 = vst.msk [vmem:[#allocation2] sm:$0xf] %vm625, 0.0
        %627 = vst.msk [vmem:[#allocation3] sm:$0xf] %vm625, 0.0
        %v630 = vcombine.low %v579, %v592
        %v632 = vunpack.c.l.s4 1966171168
        %v633 = vunpack.c.0.s8 %v632
        %v634 = vlaneseq
        %v635 = vshrl.u32 %v634, 7
        %v636 = vsub.s32 %v633, %v635
        %v637 = vrot.slane %v630, %v636
        %v639 = vunpack.c.l.s4 1966171168
        %v640 = vunpack.c.0.s8 %v639
        %v641 = vlaneseq
        %v642 = vshrl.u32 %v641, 7
        %v643 = vsub.s32 %v640, %v642
        %v644 = vrot.slane %v637, %v643
        %vm646 = vcmp.lt.s32.totalorder %v622, 256
        %vm647 = vmand %vm623, %vm646
        %648 = vst.msk [vmem:[#allocation2 + $0x1] sm:$0x3] %vm647, %v644
        %v651 = vcombine.low %v620, %v621
        %v653 = vunpack.c.l.s4 1966171168
        %v654 = vunpack.c.0.s8 %v653
        %v655 = vlaneseq
        %v656 = vshrl.u32 %v655, 7
        %v657 = vsub.s32 %v654, %v656
        %v658 = vrot.slane %v651, %v657
        %v660 = vunpack.c.l.s4 1966171168
        %v661 = vunpack.c.0.s8 %v660
        %v662 = vlaneseq
        %v663 = vshrl.u32 %v662, 7
        %v664 = vsub.s32 %v661, %v663
        %v665 = vrot.slane %v658, %v664
        %667 = vst.msk [vmem:[#allocation3 + $0x1] sm:$0x3] %vm647, %v665
        %v668 = vlaneseq
        %v669 = vand.u32 %v668, 127
        %v670 = vadd.s32 %v669, 128
        %vm671 = vcmp.lt.s32.totalorder %v669, 0
        %v672 = vsub.s32 0, %v669
        %v673 = vsel %vm671, %v672, %v669
        %v674 = vshrl.u32 %v673, 4
        %v675 = vand.u32 %v673, 15
        %v676 = vsub.s32 0, %v675
        %v677 = vsel %vm671, %v676, %v675
        %vm678 = vcmp.lt.s32.totalorder %v670, 0
        %v679 = vsub.s32 0, %v670
        %v680 = vsel %vm678, %v679, %v670
        %v681 = vshrl.u32 %v680, 4
        %v682 = vand.u32 %v680, 15
        %v683 = vsub.s32 0, %v682
        %v684 = vsel %vm678, %v683, %v682
        %vm685 = vcmp.ne.s32.totalorder %v677, 0
        %vm686 = vcmp.ne.s32.totalorder %v684, 0
        %vm687 = vcmp.lt.s32.totalorder %v677, 0
        %vm688 = vcmp.lt.s32.totalorder %v684, 0
        %vm689 = vmand %vm687, %vm685
        %vm690 = vmand %vm688, %vm686
        %v691 = vadd.s32 %v677, 16
        %v692 = vadd.s32 %v684, 16
        %v693 = vsel %vm689, %v691, %v677
        %v694 = vsel %vm690, %v692, %v684
        %s695 = sld [smem:[#allocation4 + $0x62]]
        %v696 = vstv %s695
        %v697 = vld [vmem:[#allocation2] sm:$0x7]
        %s698 = sld [smem:[#allocation4]]
        %v699 = vstv %s698
        %v700 = vmul.f32 %v697, %v699
        %v701 = vld [vmem:[#allocation3] sm:$0x7]
        %s702 = sld [smem:[#allocation4 + $0x1]]
        %v703 = vstv %s702
        %v704 = vmul.f32 %v701, %v703
        %v705 = vadd.f32 %v700, %v704
        %vm706 = vcmp.ge.s32.totalorder %v693, 3
        %vm707 = vcmp.ge.s32.totalorder %v694, 3
        %vm708 = vcmp.lt.s32.totalorder %v693, 19
        %vm709 = vcmp.lt.s32.totalorder %v694, 19
        %vm710 = vmand %vm706, %vm708
        %vm711 = vmand %vm707, %vm709
        %v713 = vlaneseq
        %v714 = vshrl.u32 %v713, 7
        %v715 = vsub.s32 0, %v714
        %v716 = vrot.slane %v705, %v715
        %v717 = vlaneseq
        %v718 = vshrl.u32 %v717, 7
        %v719 = vsub.s32 1, %v718
        %v720 = vrot.slane %v705, %v719
        %v721 = vlaneseq
        %v722 = vshrl.u32 %v721, 7
        %v723 = vsub.s32 2, %v722
        %v724 = vrot.slane %v705, %v723
        %725 = vrot.lane.b32.xlu0 %v716, 51
        %v726 = vpop.permute.xlu0 %725
        %727 = vrot.lane.b32.xlu0 %v720, 51
        %v728 = vpop.permute.xlu0 %727
        %729 = vrot.lane.b32.xlu0 %v724, 51
        %v730 = vpop.permute.xlu0 %729
        %vm731 = vcmask 416768
        %v732 = vsel %vm731, %v726, %v728
        %v733 = vsel %vm731, %v728, %v730
        %v736 = vsel %vm710, %v732, 0.0
        %v737 = vsel %vm711, %v733, 0.0
        %v738 = vadd.f32 %v696, %v736
        %v739 = vadd.f32 %v696, %v737
        %s740 = sld [smem:[#allocation4 + $0x2]]
        %v741 = vstv %s740
        %v742 = vmul.f32 %v697, %v741
        %s743 = sld [smem:[#allocation4 + $0x3]]
        %v744 = vstv %s743
        %v745 = vmul.f32 %v701, %v744
        %v746 = vadd.f32 %v742, %v745
        %vm747 = vcmp.ge.s32.totalorder %v693, 2
        %vm748 = vcmp.ge.s32.totalorder %v694, 2
        %vm749 = vcmp.lt.s32.totalorder %v693, 18
        %vm750 = vcmp.lt.s32.totalorder %v694, 18
        %vm751 = vmand %vm747, %vm749
        %vm752 = vmand %vm748, %vm750
        %v754 = vlaneseq
        %v755 = vshrl.u32 %v754, 7
        %v756 = vsub.s32 0, %v755
        %v757 = vrot.slane %v746, %v756
        %v758 = vlaneseq
        %v759 = vshrl.u32 %v758, 7
        %v760 = vsub.s32 1, %v759
        %v761 = vrot.slane %v746, %v760
        %v762 = vlaneseq
        %v763 = vshrl.u32 %v762, 7
        %v764 = vsub.s32 2, %v763
        %v765 = vrot.slane %v746, %v764
        %766 = vrot.lane.b32.xlu0 %v757, 50
        %v767 = vpop.permute.xlu0 %766
        %768 = vrot.lane.b32.xlu0 %v761, 50
        %v769 = vpop.permute.xlu0 %768
        %770 = vrot.lane.b32.xlu0 %v765, 50
        %v771 = vpop.permute.xlu0 %770
        %vm772 = vcmask 408576
        %v773 = vsel %vm772, %v767, %v769
        %v774 = vsel %vm772, %v769, %v771
        %v777 = vsel %vm751, %v773, 0.0
        %v778 = vsel %vm752, %v774, 0.0
        %v779 = vadd.f32 %v738, %v777
        %v780 = vadd.f32 %v739, %v778
        %s781 = sld [smem:[#allocation4 + $0x4]]
        %v782 = vstv %s781
        %v783 = vmul.f32 %v697, %v782
        %s784 = sld [smem:[#allocation4 + $0x5]]
        %v785 = vstv %s784
        %v786 = vmul.f32 %v701, %v785
        %v787 = vadd.f32 %v783, %v786
        %vm788 = vcmp.ge.s32.totalorder %v693, 1
        %vm789 = vcmp.ge.s32.totalorder %v694, 1
        %vm790 = vcmp.lt.s32.totalorder %v693, 17
        %vm791 = vcmp.lt.s32.totalorder %v694, 17
        %vm792 = vmand %vm788, %vm790
        %vm793 = vmand %vm789, %vm791
        %v795 = vlaneseq
        %v796 = vshrl.u32 %v795, 7
        %v797 = vsub.s32 0, %v796
        %v798 = vrot.slane %v787, %v797
        %v799 = vlaneseq
        %v800 = vshrl.u32 %v799, 7
        %v801 = vsub.s32 1, %v800
        %v802 = vrot.slane %v787, %v801
        %v803 = vlaneseq
        %v804 = vshrl.u32 %v803, 7
        %v805 = vsub.s32 2, %v804
        %v806 = vrot.slane %v787, %v805
        %807 = vrot.lane.b32.xlu0 %v798, 49
        %v808 = vpop.permute.xlu0 %807
        %809 = vrot.lane.b32.xlu0 %v802, 49
        %v810 = vpop.permute.xlu0 %809
        %811 = vrot.lane.b32.xlu0 %v806, 49
        %v812 = vpop.permute.xlu0 %811
        %vm813 = vcmask 400384
        %v814 = vsel %vm813, %v808, %v810
        %v815 = vsel %vm813, %v810, %v812
        %v818 = vsel %vm792, %v814, 0.0
        %v819 = vsel %vm793, %v815, 0.0
        %v820 = vadd.f32 %v779, %v818
        %v821 = vadd.f32 %v780, %v819
        %s822 = sld [smem:[#allocation4 + $0x6]]
        %v823 = vstv %s822
        %v824 = vmul.f32 %v697, %v823
        %s825 = sld [smem:[#allocation4 + $0x7]]
        %v826 = vstv %s825
        %v827 = vmul.f32 %v701, %v826
        %v828 = vadd.f32 %v824, %v827
        %vm829 = vcmp.ge.s32.totalorder %v693, 0
        %vm830 = vcmp.ge.s32.totalorder %v694, 0
        %vm831 = vcmp.lt.s32.totalorder %v693, 16
        %vm832 = vcmp.lt.s32.totalorder %v694, 16
        %vm833 = vmand %vm829, %vm831
        %vm834 = vmand %vm830, %vm832
        %v836 = vlaneseq
        %v837 = vshrl.u32 %v836, 7
        %v838 = vsub.s32 0, %v837
        %v839 = vrot.slane %v828, %v838
        %v840 = vlaneseq
        %v841 = vshrl.u32 %v840, 7
        %v842 = vsub.s32 1, %v841
        %v843 = vrot.slane %v828, %v842
        %v844 = vlaneseq
        %v845 = vshrl.u32 %v844, 7
        %v846 = vsub.s32 2, %v845
        %v847 = vrot.slane %v828, %v846
        %848 = vrot.lane.b32.xlu0 %v839, 48
        %v849 = vpop.permute.xlu0 %848
        %850 = vrot.lane.b32.xlu0 %v843, 48
        %v851 = vpop.permute.xlu0 %850
        %852 = vrot.lane.b32.xlu0 %v847, 48
        %v853 = vpop.permute.xlu0 %852
        %vm854 = vcmask 392192
        %v855 = vsel %vm854, %v849, %v851
        %v856 = vsel %vm854, %v851, %v853
        %v859 = vsel %vm833, %v855, 0.0
        %v860 = vsel %vm834, %v856, 0.0
        %v861 = vadd.f32 %v820, %v859
        %v862 = vadd.f32 %v821, %v860
        %s863 = sld [smem:[#allocation4 + $0x8]]
        %v864 = vstv %s863
        %v865 = vmul.f32 %v697, %v864
        %s866 = sld [smem:[#allocation4 + $0x9]]
        %v867 = vstv %s866
        %v868 = vmul.f32 %v701, %v867
        %v869 = vadd.f32 %v865, %v868
        %vm870 = vcmp.ge.s32.totalorder %v693, 4294967295
        %vm871 = vcmp.ge.s32.totalorder %v694, 4294967295
        %vm872 = vcmp.lt.s32.totalorder %v693, 15
        %vm873 = vcmp.lt.s32.totalorder %v694, 15
        %vm874 = vmand %vm870, %vm872
        %vm875 = vmand %vm871, %vm873
        %v877 = vlaneseq
        %v878 = vshrl.u32 %v877, 7
        %v879 = vsub.s32 0, %v878
        %v880 = vrot.slane %v869, %v879
        %v881 = vlaneseq
        %v882 = vshrl.u32 %v881, 7
        %v883 = vsub.s32 1, %v882
        %v884 = vrot.slane %v869, %v883
        %v885 = vlaneseq
        %v886 = vshrl.u32 %v885, 7
        %v887 = vsub.s32 2, %v886
        %v888 = vrot.slane %v869, %v887
        %889 = vrot.lane.b32.xlu0 %v880, 47
        %v890 = vpop.permute.xlu0 %889
        %891 = vrot.lane.b32.xlu0 %v884, 47
        %v892 = vpop.permute.xlu0 %891
        %893 = vrot.lane.b32.xlu0 %v888, 47
        %v894 = vpop.permute.xlu0 %893
        %vm895 = vcmask 384000
        %v896 = vsel %vm895, %v890, %v892
        %v897 = vsel %vm895, %v892, %v894
        %v900 = vsel %vm874, %v896, 0.0
        %v901 = vsel %vm875, %v897, 0.0
        %v902 = vadd.f32 %v861, %v900
        %v903 = vadd.f32 %v862, %v901
        %s904 = sld [smem:[#allocation4 + $0xa]]
        %v905 = vstv %s904
        %v906 = vmul.f32 %v697, %v905
        %s907 = sld [smem:[#allocation4 + $0xb]]
        %v908 = vstv %s907
        %v909 = vmul.f32 %v701, %v908
        %v910 = vadd.f32 %v906, %v909
        %vm911 = vcmp.ge.s32.totalorder %v693, 4294967294
        %vm912 = vcmp.ge.s32.totalorder %v694, 4294967294
        %vm913 = vcmp.lt.s32.totalorder %v693, 14
        %vm914 = vcmp.lt.s32.totalorder %v694, 14
        %vm915 = vmand %vm911, %vm913
        %vm916 = vmand %vm912, %vm914
        %v918 = vlaneseq
        %v919 = vshrl.u32 %v918, 7
        %v920 = vsub.s32 0, %v919
        %v921 = vrot.slane %v910, %v920
        %v922 = vlaneseq
        %v923 = vshrl.u32 %v922, 7
        %v924 = vsub.s32 1, %v923
        %v925 = vrot.slane %v910, %v924
        %v926 = vlaneseq
        %v927 = vshrl.u32 %v926, 7
        %v928 = vsub.s32 2, %v927
        %v929 = vrot.slane %v910, %v928
        %930 = vrot.lane.b32.xlu0 %v921, 46
        %v931 = vpop.permute.xlu0 %930
        %932 = vrot.lane.b32.xlu0 %v925, 46
        %v933 = vpop.permute.xlu0 %932
        %934 = vrot.lane.b32.xlu0 %v929, 46
        %v935 = vpop.permute.xlu0 %934
        %vm936 = vcmask 375808
        %v937 = vsel %vm936, %v931, %v933
        %v938 = vsel %vm936, %v933, %v935
        %v941 = vsel %vm915, %v937, 0.0
        %v942 = vsel %vm916, %v938, 0.0
        %v943 = vadd.f32 %v902, %v941
        %v944 = vadd.f32 %v903, %v942
        %s945 = sld [smem:[#allocation4 + $0xc]]
        %v946 = vstv %s945
        %v947 = vmul.f32 %v697, %v946
        %s948 = sld [smem:[#allocation4 + $0xd]]
        %v949 = vstv %s948
        %v950 = vmul.f32 %v701, %v949
        %v951 = vadd.f32 %v947, %v950
        %vm952 = vcmp.ge.s32.totalorder %v693, 4294967293
        %vm953 = vcmp.ge.s32.totalorder %v694, 4294967293
        %vm954 = vcmp.lt.s32.totalorder %v693, 13
        %vm955 = vcmp.lt.s32.totalorder %v694, 13
        %vm956 = vmand %vm952, %vm954
        %vm957 = vmand %vm953, %vm955
        %v959 = vlaneseq
        %v960 = vshrl.u32 %v959, 7
        %v961 = vsub.s32 0, %v960
        %v962 = vrot.slane %v951, %v961
        %v963 = vlaneseq
        %v964 = vshrl.u32 %v963, 7
        %v965 = vsub.s32 1, %v964
        %v966 = vrot.slane %v951, %v965
        %v967 = vlaneseq
        %v968 = vshrl.u32 %v967, 7
        %v969 = vsub.s32 2, %v968
        %v970 = vrot.slane %v951, %v969
        %971 = vrot.lane.b32.xlu0 %v962, 45
        %v972 = vpop.permute.xlu0 %971
        %973 = vrot.lane.b32.xlu0 %v966, 45
        %v974 = vpop.permute.xlu0 %973
        %975 = vrot.lane.b32.xlu0 %v970, 45
        %v976 = vpop.permute.xlu0 %975
        %vm977 = vcmask 367616
        %v978 = vsel %vm977, %v972, %v974
        %v979 = vsel %vm977, %v974, %v976
        %v982 = vsel %vm956, %v978, 0.0
        %v983 = vsel %vm957, %v979, 0.0
        %v984 = vadd.f32 %v943, %v982
        %v985 = vadd.f32 %v944, %v983
        %s986 = sld [smem:[#allocation4 + $0xe]]
        %v987 = vstv %s986
        %v988 = vmul.f32 %v697, %v987
        %s989 = sld [smem:[#allocation4 + $0xf]]
        %v990 = vstv %s989
        %v991 = vmul.f32 %v701, %v990
        %v992 = vadd.f32 %v988, %v991
        %v994 = vlaneseq
        %v995 = vshrl.u32 %v994, 7
        %v996 = vsub.s32 0, %v995
        %v997 = vrot.slane %v992, %v996
        %v998 = vlaneseq
        %v999 = vshrl.u32 %v998, 7
        %v1000 = vsub.s32 1, %v999
        %v1001 = vrot.slane %v992, %v1000
        %v1002 = vlaneseq
        %v1003 = vshrl.u32 %v1002, 7
        %v1004 = vsub.s32 2, %v1003
        %v1005 = vrot.slane %v992, %v1004
        %1006 = vrot.lane.b32.xlu0 %v997, 35
        %v1007 = vpop.permute.xlu0 %1006
        %1008 = vrot.lane.b32.xlu0 %v1001, 35
        %v1009 = vpop.permute.xlu0 %1008
        %1010 = vrot.lane.b32.xlu0 %v1005, 35
        %v1011 = vpop.permute.xlu0 %1010
        %vm1012 = vcmask 285696
        %v1013 = vsel %vm1012, %v1007, %v1009
        %v1014 = vsel %vm1012, %v1009, %v1011
        %v1017 = vsel %vm710, %v1013, 0.0
        %v1018 = vsel %vm711, %v1014, 0.0
        %v1019 = vadd.f32 %v984, %v1017
        %v1020 = vadd.f32 %v985, %v1018
        %s1021 = sld [smem:[#allocation4 + $0x10]]
        %v1022 = vstv %s1021
        %v1023 = vmul.f32 %v697, %v1022
        %s1024 = sld [smem:[#allocation4 + $0x11]]
        %v1025 = vstv %s1024
        %v1026 = vmul.f32 %v701, %v1025
        %v1027 = vadd.f32 %v1023, %v1026
        %v1029 = vlaneseq
        %v1030 = vshrl.u32 %v1029, 7
        %v1031 = vsub.s32 0, %v1030
        %v1032 = vrot.slane %v1027, %v1031
        %v1033 = vlaneseq
        %v1034 = vshrl.u32 %v1033, 7
        %v1035 = vsub.s32 1, %v1034
        %v1036 = vrot.slane %v1027, %v1035
        %v1037 = vlaneseq
        %v1038 = vshrl.u32 %v1037, 7
        %v1039 = vsub.s32 2, %v1038
        %v1040 = vrot.slane %v1027, %v1039
        %1041 = vrot.lane.b32.xlu0 %v1032, 34
        %v1042 = vpop.permute.xlu0 %1041
        %1043 = vrot.lane.b32.xlu0 %v1036, 34
        %v1044 = vpop.permute.xlu0 %1043
        %1045 = vrot.lane.b32.xlu0 %v1040, 34
        %v1046 = vpop.permute.xlu0 %1045
        %vm1047 = vcmask 277504
        %v1048 = vsel %vm1047, %v1042, %v1044
        %v1049 = vsel %vm1047, %v1044, %v1046
        %v1052 = vsel %vm751, %v1048, 0.0
        %v1053 = vsel %vm752, %v1049, 0.0
        %v1054 = vadd.f32 %v1019, %v1052
        %v1055 = vadd.f32 %v1020, %v1053
        %s1056 = sld [smem:[#allocation4 + $0x12]]
        %v1057 = vstv %s1056
        %v1058 = vmul.f32 %v697, %v1057
        %s1059 = sld [smem:[#allocation4 + $0x13]]
        %v1060 = vstv %s1059
        %v1061 = vmul.f32 %v701, %v1060
        %v1062 = vadd.f32 %v1058, %v1061
        %v1064 = vlaneseq
        %v1065 = vshrl.u32 %v1064, 7
        %v1066 = vsub.s32 0, %v1065
        %v1067 = vrot.slane %v1062, %v1066
        %v1068 = vlaneseq
        %v1069 = vshrl.u32 %v1068, 7
        %v1070 = vsub.s32 1, %v1069
        %v1071 = vrot.slane %v1062, %v1070
        %v1072 = vlaneseq
        %v1073 = vshrl.u32 %v1072, 7
        %v1074 = vsub.s32 2, %v1073
        %v1075 = vrot.slane %v1062, %v1074
        %1076 = vrot.lane.b32.xlu0 %v1067, 33
        %v1077 = vpop.permute.xlu0 %1076
        %1078 = vrot.lane.b32.xlu0 %v1071, 33
        %v1079 = vpop.permute.xlu0 %1078
        %1080 = vrot.lane.b32.xlu0 %v1075, 33
        %v1081 = vpop.permute.xlu0 %1080
        %vm1082 = vcmask 269312
        %v1083 = vsel %vm1082, %v1077, %v1079
        %v1084 = vsel %vm1082, %v1079, %v1081
        %v1087 = vsel %vm792, %v1083, 0.0
        %v1088 = vsel %vm793, %v1084, 0.0
        %v1089 = vadd.f32 %v1054, %v1087
        %v1090 = vadd.f32 %v1055, %v1088
        %s1091 = sld [smem:[#allocation4 + $0x14]]
        %v1092 = vstv %s1091
        %v1093 = vmul.f32 %v697, %v1092
        %s1094 = sld [smem:[#allocation4 + $0x15]]
        %v1095 = vstv %s1094
        %v1096 = vmul.f32 %v701, %v1095
        %v1097 = vadd.f32 %v1093, %v1096
        %v1099 = vlaneseq
        %v1100 = vshrl.u32 %v1099, 7
        %v1101 = vsub.s32 0, %v1100
        %v1102 = vrot.slane %v1097, %v1101
        %v1103 = vlaneseq
        %v1104 = vshrl.u32 %v1103, 7
        %v1105 = vsub.s32 1, %v1104
        %v1106 = vrot.slane %v1097, %v1105
        %v1107 = vlaneseq
        %v1108 = vshrl.u32 %v1107, 7
        %v1109 = vsub.s32 2, %v1108
        %v1110 = vrot.slane %v1097, %v1109
        %1111 = vrot.lane.b32.xlu0 %v1102, 32
        %v1112 = vpop.permute.xlu0 %1111
        %1113 = vrot.lane.b32.xlu0 %v1106, 32
        %v1114 = vpop.permute.xlu0 %1113
        %1115 = vrot.lane.b32.xlu0 %v1110, 32
        %v1116 = vpop.permute.xlu0 %1115
        %v1117 = vsel %vm322, %v1112, %v1114
        %v1118 = vsel %vm322, %v1114, %v1116
        %v1121 = vsel %vm833, %v1117, 0.0
        %v1122 = vsel %vm834, %v1118, 0.0
        %v1123 = vadd.f32 %v1089, %v1121
        %v1124 = vadd.f32 %v1090, %v1122
        %s1125 = sld [smem:[#allocation4 + $0x16]]
        %v1126 = vstv %s1125
        %v1127 = vmul.f32 %v697, %v1126
        %s1128 = sld [smem:[#allocation4 + $0x17]]
        %v1129 = vstv %s1128
        %v1130 = vmul.f32 %v701, %v1129
        %v1131 = vadd.f32 %v1127, %v1130
        %v1133 = vlaneseq
        %v1134 = vshrl.u32 %v1133, 7
        %v1135 = vsub.s32 0, %v1134
        %v1136 = vrot.slane %v1131, %v1135
        %v1137 = vlaneseq
        %v1138 = vshrl.u32 %v1137, 7
        %v1139 = vsub.s32 1, %v1138
        %v1140 = vrot.slane %v1131, %v1139
        %v1141 = vlaneseq
        %v1142 = vshrl.u32 %v1141, 7
        %v1143 = vsub.s32 2, %v1142
        %v1144 = vrot.slane %v1131, %v1143
        %1145 = vrot.lane.b32.xlu0 %v1136, 31
        %v1146 = vpop.permute.xlu0 %1145
        %1147 = vrot.lane.b32.xlu0 %v1140, 31
        %v1148 = vpop.permute.xlu0 %1147
        %1149 = vrot.lane.b32.xlu0 %v1144, 31
        %v1150 = vpop.permute.xlu0 %1149
        %vm1151 = vcmask 252928
        %v1152 = vsel %vm1151, %v1146, %v1148
        %v1153 = vsel %vm1151, %v1148, %v1150
        %v1156 = vsel %vm874, %v1152, 0.0
        %v1157 = vsel %vm875, %v1153, 0.0
        %v1158 = vadd.f32 %v1123, %v1156
        %v1159 = vadd.f32 %v1124, %v1157
        %s1160 = sld [smem:[#allocation4 + $0x18]]
        %v1161 = vstv %s1160
        %v1162 = vmul.f32 %v697, %v1161
        %s1163 = sld [smem:[#allocation4 + $0x19]]
        %v1164 = vstv %s1163
        %v1165 = vmul.f32 %v701, %v1164
        %v1166 = vadd.f32 %v1162, %v1165
        %v1168 = vlaneseq
        %v1169 = vshrl.u32 %v1168, 7
        %v1170 = vsub.s32 0, %v1169
        %v1171 = vrot.slane %v1166, %v1170
        %v1172 = vlaneseq
        %v1173 = vshrl.u32 %v1172, 7
        %v1174 = vsub.s32 1, %v1173
        %v1175 = vrot.slane %v1166, %v1174
        %v1176 = vlaneseq
        %v1177 = vshrl.u32 %v1176, 7
        %v1178 = vsub.s32 2, %v1177
        %v1179 = vrot.slane %v1166, %v1178
        %1180 = vrot.lane.b32.xlu0 %v1171, 30
        %v1181 = vpop.permute.xlu0 %1180
        %1182 = vrot.lane.b32.xlu0 %v1175, 30
        %v1183 = vpop.permute.xlu0 %1182
        %1184 = vrot.lane.b32.xlu0 %v1179, 30
        %v1185 = vpop.permute.xlu0 %1184
        %vm1186 = vcmask 244736
        %v1187 = vsel %vm1186, %v1181, %v1183
        %v1188 = vsel %vm1186, %v1183, %v1185
        %v1191 = vsel %vm915, %v1187, 0.0
        %v1192 = vsel %vm916, %v1188, 0.0
        %v1193 = vadd.f32 %v1158, %v1191
        %v1194 = vadd.f32 %v1159, %v1192
        %s1195 = sld [smem:[#allocation4 + $0x1a]]
        %v1196 = vstv %s1195
        %v1197 = vmul.f32 %v697, %v1196
        %s1198 = sld [smem:[#allocation4 + $0x1b]]
        %v1199 = vstv %s1198
        %v1200 = vmul.f32 %v701, %v1199
        %v1201 = vadd.f32 %v1197, %v1200
        %v1203 = vlaneseq
        %v1204 = vshrl.u32 %v1203, 7
        %v1205 = vsub.s32 0, %v1204
        %v1206 = vrot.slane %v1201, %v1205
        %v1207 = vlaneseq
        %v1208 = vshrl.u32 %v1207, 7
        %v1209 = vsub.s32 1, %v1208
        %v1210 = vrot.slane %v1201, %v1209
        %v1211 = vlaneseq
        %v1212 = vshrl.u32 %v1211, 7
        %v1213 = vsub.s32 2, %v1212
        %v1214 = vrot.slane %v1201, %v1213
        %1215 = vrot.lane.b32.xlu0 %v1206, 29
        %v1216 = vpop.permute.xlu0 %1215
        %1217 = vrot.lane.b32.xlu0 %v1210, 29
        %v1218 = vpop.permute.xlu0 %1217
        %1219 = vrot.lane.b32.xlu0 %v1214, 29
        %v1220 = vpop.permute.xlu0 %1219
        %vm1221 = vcmask 236544
        %v1222 = vsel %vm1221, %v1216, %v1218
        %v1223 = vsel %vm1221, %v1218, %v1220
        %v1226 = vsel %vm956, %v1222, 0.0
        %v1227 = vsel %vm957, %v1223, 0.0
        %v1228 = vadd.f32 %v1193, %v1226
        %v1229 = vadd.f32 %v1194, %v1227
        %s1230 = sld [smem:[#allocation4 + $0x1c]]
        %v1231 = vstv %s1230
        %v1232 = vmul.f32 %v697, %v1231
        %s1233 = sld [smem:[#allocation4 + $0x1d]]
        %v1234 = vstv %s1233
        %v1235 = vmul.f32 %v701, %v1234
        %v1236 = vadd.f32 %v1232, %v1235
        %v1238 = vlaneseq
        %v1239 = vshrl.u32 %v1238, 7
        %v1240 = vsub.s32 0, %v1239
        %v1241 = vrot.slane %v1236, %v1240
        %v1242 = vlaneseq
        %v1243 = vshrl.u32 %v1242, 7
        %v1244 = vsub.s32 1, %v1243
        %v1245 = vrot.slane %v1236, %v1244
        %v1246 = vlaneseq
        %v1247 = vshrl.u32 %v1246, 7
        %v1248 = vsub.s32 2, %v1247
        %v1249 = vrot.slane %v1236, %v1248
        %1250 = vrot.lane.b32.xlu0 %v1241, 19
        %v1251 = vpop.permute.xlu0 %1250
        %1252 = vrot.lane.b32.xlu0 %v1245, 19
        %v1253 = vpop.permute.xlu0 %1252
        %1254 = vrot.lane.b32.xlu0 %v1249, 19
        %v1255 = vpop.permute.xlu0 %1254
        %vm1256 = vcmask 154624
        %v1257 = vsel %vm1256, %v1251, %v1253
        %v1258 = vsel %vm1256, %v1253, %v1255
        %v1261 = vsel %vm710, %v1257, 0.0
        %v1262 = vsel %vm711, %v1258, 0.0
        %v1263 = vadd.f32 %v1228, %v1261
        %v1264 = vadd.f32 %v1229, %v1262
        %s1265 = sld [smem:[#allocation4 + $0x1e]]
        %v1266 = vstv %s1265
        %v1267 = vmul.f32 %v697, %v1266
        %s1268 = sld [smem:[#allocation4 + $0x1f]]
        %v1269 = vstv %s1268
        %v1270 = vmul.f32 %v701, %v1269
        %v1271 = vadd.f32 %v1267, %v1270
        %v1273 = vlaneseq
        %v1274 = vshrl.u32 %v1273, 7
        %v1275 = vsub.s32 0, %v1274
        %v1276 = vrot.slane %v1271, %v1275
        %v1277 = vlaneseq
        %v1278 = vshrl.u32 %v1277, 7
        %v1279 = vsub.s32 1, %v1278
        %v1280 = vrot.slane %v1271, %v1279
        %v1281 = vlaneseq
        %v1282 = vshrl.u32 %v1281, 7
        %v1283 = vsub.s32 2, %v1282
        %v1284 = vrot.slane %v1271, %v1283
        %1285 = vrot.lane.b32.xlu0 %v1276, 18
        %v1286 = vpop.permute.xlu0 %1285
        %1287 = vrot.lane.b32.xlu0 %v1280, 18
        %v1288 = vpop.permute.xlu0 %1287
        %1289 = vrot.lane.b32.xlu0 %v1284, 18
        %v1290 = vpop.permute.xlu0 %1289
        %vm1291 = vcmask 146432
        %v1292 = vsel %vm1291, %v1286, %v1288
        %v1293 = vsel %vm1291, %v1288, %v1290
        %v1296 = vsel %vm751, %v1292, 0.0
        %v1297 = vsel %vm752, %v1293, 0.0
        %v1298 = vadd.f32 %v1263, %v1296
        %v1299 = vadd.f32 %v1264, %v1297
        %s1300 = sld [smem:[#allocation4 + $0x20]]
        %v1301 = vstv %s1300
        %v1302 = vmul.f32 %v697, %v1301
        %s1303 = sld [smem:[#allocation4 + $0x21]]
        %v1304 = vstv %s1303
        %v1305 = vmul.f32 %v701, %v1304
        %v1306 = vadd.f32 %v1302, %v1305
        %v1308 = vlaneseq
        %v1309 = vshrl.u32 %v1308, 7
        %v1310 = vsub.s32 0, %v1309
        %v1311 = vrot.slane %v1306, %v1310
        %v1312 = vlaneseq
        %v1313 = vshrl.u32 %v1312, 7
        %v1314 = vsub.s32 1, %v1313
        %v1315 = vrot.slane %v1306, %v1314
        %v1316 = vlaneseq
        %v1317 = vshrl.u32 %v1316, 7
        %v1318 = vsub.s32 2, %v1317
        %v1319 = vrot.slane %v1306, %v1318
        %1320 = vrot.lane.b32.xlu0 %v1311, 17
        %v1321 = vpop.permute.xlu0 %1320
        %1322 = vrot.lane.b32.xlu0 %v1315, 17
        %v1323 = vpop.permute.xlu0 %1322
        %1324 = vrot.lane.b32.xlu0 %v1319, 17
        %v1325 = vpop.permute.xlu0 %1324
        %vm1326 = vcmask 138240
        %v1327 = vsel %vm1326, %v1321, %v1323
        %v1328 = vsel %vm1326, %v1323, %v1325
        %v1331 = vsel %vm792, %v1327, 0.0
        %v1332 = vsel %vm793, %v1328, 0.0
        %v1333 = vadd.f32 %v1298, %v1331
        %v1334 = vadd.f32 %v1299, %v1332
        %s1335 = sld [smem:[#allocation4 + $0x22]]
        %v1336 = vstv %s1335
        %v1337 = vmul.f32 %v697, %v1336
        %s1338 = sld [smem:[#allocation4 + $0x23]]
        %v1339 = vstv %s1338
        %v1340 = vmul.f32 %v701, %v1339
        %v1341 = vadd.f32 %v1337, %v1340
        %v1343 = vlaneseq
        %v1344 = vshrl.u32 %v1343, 7
        %v1345 = vsub.s32 0, %v1344
        %v1346 = vrot.slane %v1341, %v1345
        %v1347 = vlaneseq
        %v1348 = vshrl.u32 %v1347, 7
        %v1349 = vsub.s32 1, %v1348
        %v1350 = vrot.slane %v1341, %v1349
        %v1351 = vlaneseq
        %v1352 = vshrl.u32 %v1351, 7
        %v1353 = vsub.s32 2, %v1352
        %v1354 = vrot.slane %v1341, %v1353
        %1355 = vrot.lane.b32.xlu0 %v1346, 16
        %v1356 = vpop.permute.xlu0 %1355
        %1357 = vrot.lane.b32.xlu0 %v1350, 16
        %v1358 = vpop.permute.xlu0 %1357
        %1359 = vrot.lane.b32.xlu0 %v1354, 16
        %v1360 = vpop.permute.xlu0 %1359
        %vm1361 = vcmask 130048
        %v1362 = vsel %vm1361, %v1356, %v1358
        %v1363 = vsel %vm1361, %v1358, %v1360
        %v1366 = vsel %vm833, %v1362, 0.0
        %v1367 = vsel %vm834, %v1363, 0.0
        %v1368 = vadd.f32 %v1333, %v1366
        %v1369 = vadd.f32 %v1334, %v1367
        %s1370 = sld [smem:[#allocation4 + $0x24]]
        %v1371 = vstv %s1370
        %v1372 = vmul.f32 %v697, %v1371
        %s1373 = sld [smem:[#allocation4 + $0x25]]
        %v1374 = vstv %s1373
        %v1375 = vmul.f32 %v701, %v1374
        %v1376 = vadd.f32 %v1372, %v1375
        %v1378 = vlaneseq
        %v1379 = vshrl.u32 %v1378, 7
        %v1380 = vsub.s32 0, %v1379
        %v1381 = vrot.slane %v1376, %v1380
        %v1382 = vlaneseq
        %v1383 = vshrl.u32 %v1382, 7
        %v1384 = vsub.s32 1, %v1383
        %v1385 = vrot.slane %v1376, %v1384
        %v1386 = vlaneseq
        %v1387 = vshrl.u32 %v1386, 7
        %v1388 = vsub.s32 2, %v1387
        %v1389 = vrot.slane %v1376, %v1388
        %1390 = vrot.lane.b32.xlu0 %v1381, 15
        %v1391 = vpop.permute.xlu0 %1390
        %1392 = vrot.lane.b32.xlu0 %v1385, 15
        %v1393 = vpop.permute.xlu0 %1392
        %1394 = vrot.lane.b32.xlu0 %v1389, 15
        %v1395 = vpop.permute.xlu0 %1394
        %vm1396 = vcmask 121856
        %v1397 = vsel %vm1396, %v1391, %v1393
        %v1398 = vsel %vm1396, %v1393, %v1395
        %v1401 = vsel %vm874, %v1397, 0.0
        %v1402 = vsel %vm875, %v1398, 0.0
        %v1403 = vadd.f32 %v1368, %v1401
        %v1404 = vadd.f32 %v1369, %v1402
        %s1405 = sld [smem:[#allocation4 + $0x26]]
        %v1406 = vstv %s1405
        %v1407 = vmul.f32 %v697, %v1406
        %s1408 = sld [smem:[#allocation4 + $0x27]]
        %v1409 = vstv %s1408
        %v1410 = vmul.f32 %v701, %v1409
        %v1411 = vadd.f32 %v1407, %v1410
        %v1413 = vlaneseq
        %v1414 = vshrl.u32 %v1413, 7
        %v1415 = vsub.s32 0, %v1414
        %v1416 = vrot.slane %v1411, %v1415
        %v1417 = vlaneseq
        %v1418 = vshrl.u32 %v1417, 7
        %v1419 = vsub.s32 1, %v1418
        %v1420 = vrot.slane %v1411, %v1419
        %v1421 = vlaneseq
        %v1422 = vshrl.u32 %v1421, 7
        %v1423 = vsub.s32 2, %v1422
        %v1424 = vrot.slane %v1411, %v1423
        %1425 = vrot.lane.b32.xlu0 %v1416, 14
        %v1426 = vpop.permute.xlu0 %1425
        %1427 = vrot.lane.b32.xlu0 %v1420, 14
        %v1428 = vpop.permute.xlu0 %1427
        %1429 = vrot.lane.b32.xlu0 %v1424, 14
        %v1430 = vpop.permute.xlu0 %1429
        %vm1431 = vcmask 113664
        %v1432 = vsel %vm1431, %v1426, %v1428
        %v1433 = vsel %vm1431, %v1428, %v1430
        %v1436 = vsel %vm915, %v1432, 0.0
        %v1437 = vsel %vm916, %v1433, 0.0
        %v1438 = vadd.f32 %v1403, %v1436
        %v1439 = vadd.f32 %v1404, %v1437
        %s1440 = sld [smem:[#allocation4 + $0x28]]
        %v1441 = vstv %s1440
        %v1442 = vmul.f32 %v697, %v1441
        %s1443 = sld [smem:[#allocation4 + $0x29]]
        %v1444 = vstv %s1443
        %v1445 = vmul.f32 %v701, %v1444
        %v1446 = vadd.f32 %v1442, %v1445
        %v1448 = vlaneseq
        %v1449 = vshrl.u32 %v1448, 7
        %v1450 = vsub.s32 0, %v1449
        %v1451 = vrot.slane %v1446, %v1450
        %v1452 = vlaneseq
        %v1453 = vshrl.u32 %v1452, 7
        %v1454 = vsub.s32 1, %v1453
        %v1455 = vrot.slane %v1446, %v1454
        %v1456 = vlaneseq
        %v1457 = vshrl.u32 %v1456, 7
        %v1458 = vsub.s32 2, %v1457
        %v1459 = vrot.slane %v1446, %v1458
        %1460 = vrot.lane.b32.xlu0 %v1451, 13
        %v1461 = vpop.permute.xlu0 %1460
        %1462 = vrot.lane.b32.xlu0 %v1455, 13
        %v1463 = vpop.permute.xlu0 %1462
        %1464 = vrot.lane.b32.xlu0 %v1459, 13
        %v1465 = vpop.permute.xlu0 %1464
        %vm1466 = vcmask 105472
        %v1467 = vsel %vm1466, %v1461, %v1463
        %v1468 = vsel %vm1466, %v1463, %v1465
        %v1471 = vsel %vm956, %v1467, 0.0
        %v1472 = vsel %vm957, %v1468, 0.0
        %v1473 = vadd.f32 %v1438, %v1471
        %v1474 = vadd.f32 %v1439, %v1472
        %s1475 = sld [smem:[#allocation4 + $0x2a]]
        %v1476 = vstv %s1475
        %v1477 = vmul.f32 %v697, %v1476
        %s1478 = sld [smem:[#allocation4 + $0x2b]]
        %v1479 = vstv %s1478
        %v1480 = vmul.f32 %v701, %v1479
        %v1481 = vadd.f32 %v1477, %v1480
        %v1483 = vlaneseq
        %v1484 = vshrl.u32 %v1483, 7
        %v1485 = vsub.s32 0, %v1484
        %v1486 = vrot.slane %v1481, %v1485
        %v1487 = vlaneseq
        %v1488 = vshrl.u32 %v1487, 7
        %v1489 = vsub.s32 1, %v1488
        %v1490 = vrot.slane %v1481, %v1489
        %v1491 = vlaneseq
        %v1492 = vshrl.u32 %v1491, 7
        %v1493 = vsub.s32 2, %v1492
        %v1494 = vrot.slane %v1481, %v1493
        %1495 = vrot.lane.b32.xlu0 %v1486, 3
        %v1496 = vpop.permute.xlu0 %1495
        %1497 = vrot.lane.b32.xlu0 %v1490, 3
        %v1498 = vpop.permute.xlu0 %1497
        %1499 = vrot.lane.b32.xlu0 %v1494, 3
        %v1500 = vpop.permute.xlu0 %1499
        %vm1501 = vcmask 23552
        %v1502 = vsel %vm1501, %v1496, %v1498
        %v1503 = vsel %vm1501, %v1498, %v1500
        %v1506 = vsel %vm710, %v1502, 0.0
        %v1507 = vsel %vm711, %v1503, 0.0
        %v1508 = vadd.f32 %v1473, %v1506
        %v1509 = vadd.f32 %v1474, %v1507
        %s1510 = sld [smem:[#allocation4 + $0x2c]]
        %v1511 = vstv %s1510
        %v1512 = vmul.f32 %v697, %v1511
        %s1513 = sld [smem:[#allocation4 + $0x2d]]
        %v1514 = vstv %s1513
        %v1515 = vmul.f32 %v701, %v1514
        %v1516 = vadd.f32 %v1512, %v1515
        %v1518 = vlaneseq
        %v1519 = vshrl.u32 %v1518, 7
        %v1520 = vsub.s32 0, %v1519
        %v1521 = vrot.slane %v1516, %v1520
        %v1522 = vlaneseq
        %v1523 = vshrl.u32 %v1522, 7
        %v1524 = vsub.s32 1, %v1523
        %v1525 = vrot.slane %v1516, %v1524
        %v1526 = vlaneseq
        %v1527 = vshrl.u32 %v1526, 7
        %v1528 = vsub.s32 2, %v1527
        %v1529 = vrot.slane %v1516, %v1528
        %1530 = vrot.lane.b32.xlu0 %v1521, 2
        %v1531 = vpop.permute.xlu0 %1530
        %1532 = vrot.lane.b32.xlu0 %v1525, 2
        %v1533 = vpop.permute.xlu0 %1532
        %1534 = vrot.lane.b32.xlu0 %v1529, 2
        %v1535 = vpop.permute.xlu0 %1534
        %vm1536 = vcmask 15360
        %v1537 = vsel %vm1536, %v1531, %v1533
        %v1538 = vsel %vm1536, %v1533, %v1535
        %v1541 = vsel %vm751, %v1537, 0.0
        %v1542 = vsel %vm752, %v1538, 0.0
        %v1543 = vadd.f32 %v1508, %v1541
        %v1544 = vadd.f32 %v1509, %v1542
        %s1545 = sld [smem:[#allocation4 + $0x2e]]
        %v1546 = vstv %s1545
        %v1547 = vmul.f32 %v697, %v1546
        %s1548 = sld [smem:[#allocation4 + $0x2f]]
        %v1549 = vstv %s1548
        %v1550 = vmul.f32 %v701, %v1549
        %v1551 = vadd.f32 %v1547, %v1550
        %v1553 = vlaneseq
        %v1554 = vshrl.u32 %v1553, 7
        %v1555 = vsub.s32 0, %v1554
        %v1556 = vrot.slane %v1551, %v1555
        %v1557 = vlaneseq
        %v1558 = vshrl.u32 %v1557, 7
        %v1559 = vsub.s32 1, %v1558
        %v1560 = vrot.slane %v1551, %v1559
        %v1561 = vlaneseq
        %v1562 = vshrl.u32 %v1561, 7
        %v1563 = vsub.s32 2, %v1562
        %v1564 = vrot.slane %v1551, %v1563
        %1565 = vrot.lane.b32.xlu0 %v1556, 1
        %v1566 = vpop.permute.xlu0 %1565
        %1567 = vrot.lane.b32.xlu0 %v1560, 1
        %v1568 = vpop.permute.xlu0 %1567
        %1569 = vrot.lane.b32.xlu0 %v1564, 1
        %v1570 = vpop.permute.xlu0 %1569
        %vm1571 = vcmask 7168
        %v1572 = vsel %vm1571, %v1566, %v1568
        %v1573 = vsel %vm1571, %v1568, %v1570
        %v1576 = vsel %vm792, %v1572, 0.0
        %v1577 = vsel %vm793, %v1573, 0.0
        %v1578 = vadd.f32 %v1543, %v1576
        %v1579 = vadd.f32 %v1544, %v1577
        %v1580 = vld [vmem:[#allocation2 + $0x1] sm:$0x3]
        %s1581 = sld [smem:[#allocation4 + $0x30]]
        %v1582 = vstv %s1581
        %v1583 = vmul.f32 %v1580, %v1582
        %v1584 = vld [vmem:[#allocation3 + $0x1] sm:$0x3]
        %s1585 = sld [smem:[#allocation4 + $0x31]]
        %v1586 = vstv %s1585
        %v1587 = vmul.f32 %v1584, %v1586
        %v1588 = vadd.f32 %v1583, %v1587
        %v1590 = vlaneseq
        %v1591 = vshrl.u32 %v1590, 7
        %v1592 = vsub.s32 0, %v1591
        %v1593 = vrot.slane %v1588, %v1592
        %v1594 = vlaneseq
        %v1595 = vshrl.u32 %v1594, 7
        %v1596 = vsub.s32 1, %v1595
        %v1597 = vrot.slane %v1588, %v1596
        %v1600 = vsel %vm833, %v1593, 0.0
        %v1601 = vsel %vm834, %v1597, 0.0
        %v1602 = vadd.f32 %v1578, %v1600
        %v1603 = vadd.f32 %v1579, %v1601
        %v1604 = vld [vmem:[#allocation2 + $0x1] sm:$0x7]
        %s1605 = sld [smem:[#allocation4 + $0x32]]
        %v1606 = vstv %s1605
        %v1607 = vmul.f32 %v1604, %v1606
        %v1608 = vld [vmem:[#allocation3 + $0x1] sm:$0x7]
        %s1609 = sld [smem:[#allocation4 + $0x33]]
        %v1610 = vstv %s1609
        %v1611 = vmul.f32 %v1608, %v1610
        %v1612 = vadd.f32 %v1607, %v1611
        %v1614 = vlaneseq
        %v1615 = vshrl.u32 %v1614, 7
        %v1616 = vsub.s32 0, %v1615
        %v1617 = vrot.slane %v1612, %v1616
        %v1618 = vlaneseq
        %v1619 = vshrl.u32 %v1618, 7
        %v1620 = vsub.s32 1, %v1619
        %v1621 = vrot.slane %v1612, %v1620
        %v1622 = vlaneseq
        %v1623 = vshrl.u32 %v1622, 7
        %v1624 = vsub.s32 2, %v1623
        %v1625 = vrot.slane %v1612, %v1624
        %1626 = vrot.lane.b32.xlu0 %v1617, 127
        %v1627 = vpop.permute.xlu0 %1626
        %1628 = vrot.lane.b32.xlu0 %v1621, 127
        %v1629 = vpop.permute.xlu0 %1628
        %1630 = vrot.lane.b32.xlu0 %v1625, 127
        %v1631 = vpop.permute.xlu0 %1630
        %vm1632 = vcmask 1039360
        %v1633 = vsel %vm1632, %v1627, %v1629
        %v1634 = vsel %vm1632, %v1629, %v1631
        %v1637 = vsel %vm874, %v1633, 0.0
        %v1638 = vsel %vm875, %v1634, 0.0
        %v1639 = vadd.f32 %v1602, %v1637
        %v1640 = vadd.f32 %v1603, %v1638
        %s1641 = sld [smem:[#allocation4 + $0x34]]
        %v1642 = vstv %s1641
        %v1643 = vmul.f32 %v1604, %v1642
        %s1644 = sld [smem:[#allocation4 + $0x35]]
        %v1645 = vstv %s1644
        %v1646 = vmul.f32 %v1608, %v1645
        %v1647 = vadd.f32 %v1643, %v1646
        %v1649 = vlaneseq
        %v1650 = vshrl.u32 %v1649, 7
        %v1651 = vsub.s32 0, %v1650
        %v1652 = vrot.slane %v1647, %v1651
        %v1653 = vlaneseq
        %v1654 = vshrl.u32 %v1653, 7
        %v1655 = vsub.s32 1, %v1654
        %v1656 = vrot.slane %v1647, %v1655
        %v1657 = vlaneseq
        %v1658 = vshrl.u32 %v1657, 7
        %v1659 = vsub.s32 2, %v1658
        %v1660 = vrot.slane %v1647, %v1659
        %1661 = vrot.lane.b32.xlu0 %v1652, 126
        %v1662 = vpop.permute.xlu0 %1661
        %1663 = vrot.lane.b32.xlu0 %v1656, 126
        %v1664 = vpop.permute.xlu0 %1663
        %1665 = vrot.lane.b32.xlu0 %v1660, 126
        %v1666 = vpop.permute.xlu0 %1665
        %vm1667 = vcmask 1031168
        %v1668 = vsel %vm1667, %v1662, %v1664
        %v1669 = vsel %vm1667, %v1664, %v1666
        %v1672 = vsel %vm915, %v1668, 0.0
        %v1673 = vsel %vm916, %v1669, 0.0
        %v1674 = vadd.f32 %v1639, %v1672
        %v1675 = vadd.f32 %v1640, %v1673
        %s1676 = sld [smem:[#allocation4 + $0x36]]
        %v1677 = vstv %s1676
        %v1678 = vmul.f32 %v1604, %v1677
        %s1679 = sld [smem:[#allocation4 + $0x37]]
        %v1680 = vstv %s1679
        %v1681 = vmul.f32 %v1608, %v1680
        %v1682 = vadd.f32 %v1678, %v1681
        %v1684 = vlaneseq
        %v1685 = vshrl.u32 %v1684, 7
        %v1686 = vsub.s32 0, %v1685
        %v1687 = vrot.slane %v1682, %v1686
        %v1688 = vlaneseq
        %v1689 = vshrl.u32 %v1688, 7
        %v1690 = vsub.s32 1, %v1689
        %v1691 = vrot.slane %v1682, %v1690
        %v1692 = vlaneseq
        %v1693 = vshrl.u32 %v1692, 7
        %v1694 = vsub.s32 2, %v1693
        %v1695 = vrot.slane %v1682, %v1694
        %1696 = vrot.lane.b32.xlu0 %v1687, 125
        %v1697 = vpop.permute.xlu0 %1696
        %1698 = vrot.lane.b32.xlu0 %v1691, 125
        %v1699 = vpop.permute.xlu0 %1698
        %1700 = vrot.lane.b32.xlu0 %v1695, 125
        %v1701 = vpop.permute.xlu0 %1700
        %vm1702 = vcmask 1022976
        %v1703 = vsel %vm1702, %v1697, %v1699
        %v1704 = vsel %vm1702, %v1699, %v1701
        %v1707 = vsel %vm956, %v1703, 0.0
        %v1708 = vsel %vm957, %v1704, 0.0
        %v1709 = vadd.f32 %v1674, %v1707
        %v1710 = vadd.f32 %v1675, %v1708
        %s1711 = sld [smem:[#allocation4 + $0x38]]
        %v1712 = vstv %s1711
        %v1713 = vmul.f32 %v1604, %v1712
        %s1714 = sld [smem:[#allocation4 + $0x39]]
        %v1715 = vstv %s1714
        %v1716 = vmul.f32 %v1608, %v1715
        %v1717 = vadd.f32 %v1713, %v1716
        %v1719 = vlaneseq
        %v1720 = vshrl.u32 %v1719, 7
        %v1721 = vsub.s32 0, %v1720
        %v1722 = vrot.slane %v1717, %v1721
        %v1723 = vlaneseq
        %v1724 = vshrl.u32 %v1723, 7
        %v1725 = vsub.s32 1, %v1724
        %v1726 = vrot.slane %v1717, %v1725
        %v1727 = vlaneseq
        %v1728 = vshrl.u32 %v1727, 7
        %v1729 = vsub.s32 2, %v1728
        %v1730 = vrot.slane %v1717, %v1729
        %1731 = vrot.lane.b32.xlu0 %v1722, 115
        %v1732 = vpop.permute.xlu0 %1731
        %1733 = vrot.lane.b32.xlu0 %v1726, 115
        %v1734 = vpop.permute.xlu0 %1733
        %1735 = vrot.lane.b32.xlu0 %v1730, 115
        %v1736 = vpop.permute.xlu0 %1735
        %vm1737 = vcmask 941056
        %v1738 = vsel %vm1737, %v1732, %v1734
        %v1739 = vsel %vm1737, %v1734, %v1736
        %v1742 = vsel %vm710, %v1738, 0.0
        %v1743 = vsel %vm711, %v1739, 0.0
        %v1744 = vadd.f32 %v1709, %v1742
        %v1745 = vadd.f32 %v1710, %v1743
        %s1746 = sld [smem:[#allocation4 + $0x3a]]
        %v1747 = vstv %s1746
        %v1748 = vmul.f32 %v1604, %v1747
        %s1749 = sld [smem:[#allocation4 + $0x3b]]
        %v1750 = vstv %s1749
        %v1751 = vmul.f32 %v1608, %v1750
        %v1752 = vadd.f32 %v1748, %v1751
        %v1754 = vlaneseq
        %v1755 = vshrl.u32 %v1754, 7
        %v1756 = vsub.s32 0, %v1755
        %v1757 = vrot.slane %v1752, %v1756
        %v1758 = vlaneseq
        %v1759 = vshrl.u32 %v1758, 7
        %v1760 = vsub.s32 1, %v1759
        %v1761 = vrot.slane %v1752, %v1760
        %v1762 = vlaneseq
        %v1763 = vshrl.u32 %v1762, 7
        %v1764 = vsub.s32 2, %v1763
        %v1765 = vrot.slane %v1752, %v1764
        %1766 = vrot.lane.b32.xlu0 %v1757, 114
        %v1767 = vpop.permute.xlu0 %1766
        %1768 = vrot.lane.b32.xlu0 %v1761, 114
        %v1769 = vpop.permute.xlu0 %1768
        %1770 = vrot.lane.b32.xlu0 %v1765, 114
        %v1771 = vpop.permute.xlu0 %1770
        %vm1772 = vcmask 932864
        %v1773 = vsel %vm1772, %v1767, %v1769
        %v1774 = vsel %vm1772, %v1769, %v1771
        %v1777 = vsel %vm751, %v1773, 0.0
        %v1778 = vsel %vm752, %v1774, 0.0
        %v1779 = vadd.f32 %v1744, %v1777
        %v1780 = vadd.f32 %v1745, %v1778
        %s1781 = sld [smem:[#allocation4 + $0x3c]]
        %v1782 = vstv %s1781
        %v1783 = vmul.f32 %v1604, %v1782
        %s1784 = sld [smem:[#allocation4 + $0x3d]]
        %v1785 = vstv %s1784
        %v1786 = vmul.f32 %v1608, %v1785
        %v1787 = vadd.f32 %v1783, %v1786
        %v1789 = vlaneseq
        %v1790 = vshrl.u32 %v1789, 7
        %v1791 = vsub.s32 0, %v1790
        %v1792 = vrot.slane %v1787, %v1791
        %v1793 = vlaneseq
        %v1794 = vshrl.u32 %v1793, 7
        %v1795 = vsub.s32 1, %v1794
        %v1796 = vrot.slane %v1787, %v1795
        %v1797 = vlaneseq
        %v1798 = vshrl.u32 %v1797, 7
        %v1799 = vsub.s32 2, %v1798
        %v1800 = vrot.slane %v1787, %v1799
        %1801 = vrot.lane.b32.xlu0 %v1792, 113
        %v1802 = vpop.permute.xlu0 %1801
        %1803 = vrot.lane.b32.xlu0 %v1796, 113
        %v1804 = vpop.permute.xlu0 %1803
        %1805 = vrot.lane.b32.xlu0 %v1800, 113
        %v1806 = vpop.permute.xlu0 %1805
        %vm1807 = vcmask 924672
        %v1808 = vsel %vm1807, %v1802, %v1804
        %v1809 = vsel %vm1807, %v1804, %v1806
        %v1812 = vsel %vm792, %v1808, 0.0
        %v1813 = vsel %vm793, %v1809, 0.0
        %v1814 = vadd.f32 %v1779, %v1812
        %v1815 = vadd.f32 %v1780, %v1813
        %s1816 = sld [smem:[#allocation4 + $0x3e]]
        %v1817 = vstv %s1816
        %v1818 = vmul.f32 %v1604, %v1817
        %s1819 = sld [smem:[#allocation4 + $0x3f]]
        %v1820 = vstv %s1819
        %v1821 = vmul.f32 %v1608, %v1820
        %v1822 = vadd.f32 %v1818, %v1821
        %v1824 = vlaneseq
        %v1825 = vshrl.u32 %v1824, 7
        %v1826 = vsub.s32 0, %v1825
        %v1827 = vrot.slane %v1822, %v1826
        %v1828 = vlaneseq
        %v1829 = vshrl.u32 %v1828, 7
        %v1830 = vsub.s32 1, %v1829
        %v1831 = vrot.slane %v1822, %v1830
        %v1832 = vlaneseq
        %v1833 = vshrl.u32 %v1832, 7
        %v1834 = vsub.s32 2, %v1833
        %v1835 = vrot.slane %v1822, %v1834
        %1836 = vrot.lane.b32.xlu0 %v1827, 112
        %v1837 = vpop.permute.xlu0 %1836
        %1838 = vrot.lane.b32.xlu0 %v1831, 112
        %v1839 = vpop.permute.xlu0 %1838
        %1840 = vrot.lane.b32.xlu0 %v1835, 112
        %v1841 = vpop.permute.xlu0 %1840
        %vm1842 = vcmask 916480
        %v1843 = vsel %vm1842, %v1837, %v1839
        %v1844 = vsel %vm1842, %v1839, %v1841
        %v1847 = vsel %vm833, %v1843, 0.0
        %v1848 = vsel %vm834, %v1844, 0.0
        %v1849 = vadd.f32 %v1814, %v1847
        %v1850 = vadd.f32 %v1815, %v1848
        %s1851 = sld [smem:[#allocation4 + $0x40]]
        %v1852 = vstv %s1851
        %v1853 = vmul.f32 %v1604, %v1852
        %s1854 = sld [smem:[#allocation4 + $0x41]]
        %v1855 = vstv %s1854
        %v1856 = vmul.f32 %v1608, %v1855
        %v1857 = vadd.f32 %v1853, %v1856
        %v1859 = vlaneseq
        %v1860 = vshrl.u32 %v1859, 7
        %v1861 = vsub.s32 0, %v1860
        %v1862 = vrot.slane %v1857, %v1861
        %v1863 = vlaneseq
        %v1864 = vshrl.u32 %v1863, 7
        %v1865 = vsub.s32 1, %v1864
        %v1866 = vrot.slane %v1857, %v1865
        %v1867 = vlaneseq
        %v1868 = vshrl.u32 %v1867, 7
        %v1869 = vsub.s32 2, %v1868
        %v1870 = vrot.slane %v1857, %v1869
        %1871 = vrot.lane.b32.xlu0 %v1862, 111
        %v1872 = vpop.permute.xlu0 %1871
        %1873 = vrot.lane.b32.xlu0 %v1866, 111
        %v1874 = vpop.permute.xlu0 %1873
        %1875 = vrot.lane.b32.xlu0 %v1870, 111
        %v1876 = vpop.permute.xlu0 %1875
        %vm1877 = vcmask 908288
        %v1878 = vsel %vm1877, %v1872, %v1874
        %v1879 = vsel %vm1877, %v1874, %v1876
        %v1882 = vsel %vm874, %v1878, 0.0
        %v1883 = vsel %vm875, %v1879, 0.0
        %v1884 = vadd.f32 %v1849, %v1882
        %v1885 = vadd.f32 %v1850, %v1883
        %s1886 = sld [smem:[#allocation4 + $0x42]]
        %v1887 = vstv %s1886
        %v1888 = vmul.f32 %v1604, %v1887
        %s1889 = sld [smem:[#allocation4 + $0x43]]
        %v1890 = vstv %s1889
        %v1891 = vmul.f32 %v1608, %v1890
        %v1892 = vadd.f32 %v1888, %v1891
        %v1894 = vlaneseq
        %v1895 = vshrl.u32 %v1894, 7
        %v1896 = vsub.s32 0, %v1895
        %v1897 = vrot.slane %v1892, %v1896
        %v1898 = vlaneseq
        %v1899 = vshrl.u32 %v1898, 7
        %v1900 = vsub.s32 1, %v1899
        %v1901 = vrot.slane %v1892, %v1900
        %v1902 = vlaneseq
        %v1903 = vshrl.u32 %v1902, 7
        %v1904 = vsub.s32 2, %v1903
        %v1905 = vrot.slane %v1892, %v1904
        %1906 = vrot.lane.b32.xlu0 %v1897, 110
        %v1907 = vpop.permute.xlu0 %1906
        %1908 = vrot.lane.b32.xlu0 %v1901, 110
        %v1909 = vpop.permute.xlu0 %1908
        %1910 = vrot.lane.b32.xlu0 %v1905, 110
        %v1911 = vpop.permute.xlu0 %1910
        %vm1912 = vcmask 900096
        %v1913 = vsel %vm1912, %v1907, %v1909
        %v1914 = vsel %vm1912, %v1909, %v1911
        %v1917 = vsel %vm915, %v1913, 0.0
        %v1918 = vsel %vm916, %v1914, 0.0
        %v1919 = vadd.f32 %v1884, %v1917
        %v1920 = vadd.f32 %v1885, %v1918
        %s1921 = sld [smem:[#allocation4 + $0x44]]
        %v1922 = vstv %s1921
        %v1923 = vmul.f32 %v1604, %v1922
        %s1924 = sld [smem:[#allocation4 + $0x45]]
        %v1925 = vstv %s1924
        %v1926 = vmul.f32 %v1608, %v1925
        %v1927 = vadd.f32 %v1923, %v1926
        %v1929 = vlaneseq
        %v1930 = vshrl.u32 %v1929, 7
        %v1931 = vsub.s32 0, %v1930
        %v1932 = vrot.slane %v1927, %v1931
        %v1933 = vlaneseq
        %v1934 = vshrl.u32 %v1933, 7
        %v1935 = vsub.s32 1, %v1934
        %v1936 = vrot.slane %v1927, %v1935
        %v1937 = vlaneseq
        %v1938 = vshrl.u32 %v1937, 7
        %v1939 = vsub.s32 2, %v1938
        %v1940 = vrot.slane %v1927, %v1939
        %1941 = vrot.lane.b32.xlu0 %v1932, 109
        %v1942 = vpop.permute.xlu0 %1941
        %1943 = vrot.lane.b32.xlu0 %v1936, 109
        %v1944 = vpop.permute.xlu0 %1943
        %1945 = vrot.lane.b32.xlu0 %v1940, 109
        %v1946 = vpop.permute.xlu0 %1945
        %vm1947 = vcmask 891904
        %v1948 = vsel %vm1947, %v1942, %v1944
        %v1949 = vsel %vm1947, %v1944, %v1946
        %v1952 = vsel %vm956, %v1948, 0.0
        %v1953 = vsel %vm957, %v1949, 0.0
        %v1954 = vadd.f32 %v1919, %v1952
        %v1955 = vadd.f32 %v1920, %v1953
        %s1956 = sld [smem:[#allocation4 + $0x46]]
        %v1957 = vstv %s1956
        %v1958 = vmul.f32 %v1604, %v1957
        %s1959 = sld [smem:[#allocation4 + $0x47]]
        %v1960 = vstv %s1959
        %v1961 = vmul.f32 %v1608, %v1960
        %v1962 = vadd.f32 %v1958, %v1961
        %v1964 = vlaneseq
        %v1965 = vshrl.u32 %v1964, 7
        %v1966 = vsub.s32 0, %v1965
        %v1967 = vrot.slane %v1962, %v1966
        %v1968 = vlaneseq
        %v1969 = vshrl.u32 %v1968, 7
        %v1970 = vsub.s32 1, %v1969
        %v1971 = vrot.slane %v1962, %v1970
        %v1972 = vlaneseq
        %v1973 = vshrl.u32 %v1972, 7
        %v1974 = vsub.s32 2, %v1973
        %v1975 = vrot.slane %v1962, %v1974
        %1976 = vrot.lane.b32.xlu0 %v1967, 99
        %v1977 = vpop.permute.xlu0 %1976
        %1978 = vrot.lane.b32.xlu0 %v1971, 99
        %v1979 = vpop.permute.xlu0 %1978
        %1980 = vrot.lane.b32.xlu0 %v1975, 99
        %v1981 = vpop.permute.xlu0 %1980
        %vm1982 = vcmask 809984
        %v1983 = vsel %vm1982, %v1977, %v1979
        %v1984 = vsel %vm1982, %v1979, %v1981
        %v1987 = vsel %vm710, %v1983, 0.0
        %v1988 = vsel %vm711, %v1984, 0.0
        %v1989 = vadd.f32 %v1954, %v1987
        %v1990 = vadd.f32 %v1955, %v1988
        %s1991 = sld [smem:[#allocation4 + $0x48]]
        %v1992 = vstv %s1991
        %v1993 = vmul.f32 %v1604, %v1992
        %s1994 = sld [smem:[#allocation4 + $0x49]]
        %v1995 = vstv %s1994
        %v1996 = vmul.f32 %v1608, %v1995
        %v1997 = vadd.f32 %v1993, %v1996
        %v1999 = vlaneseq
        %v2000 = vshrl.u32 %v1999, 7
        %v2001 = vsub.s32 0, %v2000
        %v2002 = vrot.slane %v1997, %v2001
        %v2003 = vlaneseq
        %v2004 = vshrl.u32 %v2003, 7
        %v2005 = vsub.s32 1, %v2004
        %v2006 = vrot.slane %v1997, %v2005
        %v2007 = vlaneseq
        %v2008 = vshrl.u32 %v2007, 7
        %v2009 = vsub.s32 2, %v2008
        %v2010 = vrot.slane %v1997, %v2009
        %2011 = vrot.lane.b32.xlu0 %v2002, 98
        %v2012 = vpop.permute.xlu0 %2011
        %2013 = vrot.lane.b32.xlu0 %v2006, 98
        %v2014 = vpop.permute.xlu0 %2013
        %2015 = vrot.lane.b32.xlu0 %v2010, 98
        %v2016 = vpop.permute.xlu0 %2015
        %vm2017 = vcmask 801792
        %v2018 = vsel %vm2017, %v2012, %v2014
        %v2019 = vsel %vm2017, %v2014, %v2016
        %v2022 = vsel %vm751, %v2018, 0.0
        %v2023 = vsel %vm752, %v2019, 0.0
        %v2024 = vadd.f32 %v1989, %v2022
        %v2025 = vadd.f32 %v1990, %v2023
        %s2026 = sld [smem:[#allocation4 + $0x4a]]
        %v2027 = vstv %s2026
        %v2028 = vmul.f32 %v1604, %v2027
        %s2029 = sld [smem:[#allocation4 + $0x4b]]
        %v2030 = vstv %s2029
        %v2031 = vmul.f32 %v1608, %v2030
        %v2032 = vadd.f32 %v2028, %v2031
        %v2034 = vlaneseq
        %v2035 = vshrl.u32 %v2034, 7
        %v2036 = vsub.s32 0, %v2035
        %v2037 = vrot.slane %v2032, %v2036
        %v2038 = vlaneseq
        %v2039 = vshrl.u32 %v2038, 7
        %v2040 = vsub.s32 1, %v2039
        %v2041 = vrot.slane %v2032, %v2040
        %v2042 = vlaneseq
        %v2043 = vshrl.u32 %v2042, 7
        %v2044 = vsub.s32 2, %v2043
        %v2045 = vrot.slane %v2032, %v2044
        %2046 = vrot.lane.b32.xlu0 %v2037, 97
        %v2047 = vpop.permute.xlu0 %2046
        %2048 = vrot.lane.b32.xlu0 %v2041, 97
        %v2049 = vpop.permute.xlu0 %2048
        %2050 = vrot.lane.b32.xlu0 %v2045, 97
        %v2051 = vpop.permute.xlu0 %2050
        %vm2052 = vcmask 793600
        %v2053 = vsel %vm2052, %v2047, %v2049
        %v2054 = vsel %vm2052, %v2049, %v2051
        %v2057 = vsel %vm792, %v2053, 0.0
        %v2058 = vsel %vm793, %v2054, 0.0
        %v2059 = vadd.f32 %v2024, %v2057
        %v2060 = vadd.f32 %v2025, %v2058
        %s2061 = sld [smem:[#allocation4 + $0x4c]]
        %v2062 = vstv %s2061
        %v2063 = vmul.f32 %v1604, %v2062
        %s2064 = sld [smem:[#allocation4 + $0x4d]]
        %v2065 = vstv %s2064
        %v2066 = vmul.f32 %v1608, %v2065
        %v2067 = vadd.f32 %v2063, %v2066
        %v2069 = vlaneseq
        %v2070 = vshrl.u32 %v2069, 7
        %v2071 = vsub.s32 0, %v2070
        %v2072 = vrot.slane %v2067, %v2071
        %v2073 = vlaneseq
        %v2074 = vshrl.u32 %v2073, 7
        %v2075 = vsub.s32 1, %v2074
        %v2076 = vrot.slane %v2067, %v2075
        %v2077 = vlaneseq
        %v2078 = vshrl.u32 %v2077, 7
        %v2079 = vsub.s32 2, %v2078
        %v2080 = vrot.slane %v2067, %v2079
        %2081 = vrot.lane.b32.xlu0 %v2072, 96
        %v2082 = vpop.permute.xlu0 %2081
        %2083 = vrot.lane.b32.xlu0 %v2076, 96
        %v2084 = vpop.permute.xlu0 %2083
        %2085 = vrot.lane.b32.xlu0 %v2080, 96
        %v2086 = vpop.permute.xlu0 %2085
        %vm2087 = vcmask 785408
        %v2088 = vsel %vm2087, %v2082, %v2084
        %v2089 = vsel %vm2087, %v2084, %v2086
        %v2092 = vsel %vm833, %v2088, 0.0
        %v2093 = vsel %vm834, %v2089, 0.0
        %v2094 = vadd.f32 %v2059, %v2092
        %v2095 = vadd.f32 %v2060, %v2093
        %s2096 = sld [smem:[#allocation4 + $0x4e]]
        %v2097 = vstv %s2096
        %v2098 = vmul.f32 %v1604, %v2097
        %s2099 = sld [smem:[#allocation4 + $0x4f]]
        %v2100 = vstv %s2099
        %v2101 = vmul.f32 %v1608, %v2100
        %v2102 = vadd.f32 %v2098, %v2101
        %v2104 = vlaneseq
        %v2105 = vshrl.u32 %v2104, 7
        %v2106 = vsub.s32 0, %v2105
        %v2107 = vrot.slane %v2102, %v2106
        %v2108 = vlaneseq
        %v2109 = vshrl.u32 %v2108, 7
        %v2110 = vsub.s32 1, %v2109
        %v2111 = vrot.slane %v2102, %v2110
        %v2112 = vlaneseq
        %v2113 = vshrl.u32 %v2112, 7
        %v2114 = vsub.s32 2, %v2113
        %v2115 = vrot.slane %v2102, %v2114
        %2116 = vrot.lane.b32.xlu0 %v2107, 95
        %v2117 = vpop.permute.xlu0 %2116
        %2118 = vrot.lane.b32.xlu0 %v2111, 95
        %v2119 = vpop.permute.xlu0 %2118
        %2120 = vrot.lane.b32.xlu0 %v2115, 95
        %v2121 = vpop.permute.xlu0 %2120
        %vm2122 = vcmask 777216
        %v2123 = vsel %vm2122, %v2117, %v2119
        %v2124 = vsel %vm2122, %v2119, %v2121
        %v2127 = vsel %vm874, %v2123, 0.0
        %v2128 = vsel %vm875, %v2124, 0.0
        %v2129 = vadd.f32 %v2094, %v2127
        %v2130 = vadd.f32 %v2095, %v2128
        %s2131 = sld [smem:[#allocation4 + $0x50]]
        %v2132 = vstv %s2131
        %v2133 = vmul.f32 %v1604, %v2132
        %s2134 = sld [smem:[#allocation4 + $0x51]]
        %v2135 = vstv %s2134
        %v2136 = vmul.f32 %v1608, %v2135
        %v2137 = vadd.f32 %v2133, %v2136
        %v2139 = vlaneseq
        %v2140 = vshrl.u32 %v2139, 7
        %v2141 = vsub.s32 0, %v2140
        %v2142 = vrot.slane %v2137, %v2141
        %v2143 = vlaneseq
        %v2144 = vshrl.u32 %v2143, 7
        %v2145 = vsub.s32 1, %v2144
        %v2146 = vrot.slane %v2137, %v2145
        %v2147 = vlaneseq
        %v2148 = vshrl.u32 %v2147, 7
        %v2149 = vsub.s32 2, %v2148
        %v2150 = vrot.slane %v2137, %v2149
        %2151 = vrot.lane.b32.xlu0 %v2142, 94
        %v2152 = vpop.permute.xlu0 %2151
        %2153 = vrot.lane.b32.xlu0 %v2146, 94
        %v2154 = vpop.permute.xlu0 %2153
        %2155 = vrot.lane.b32.xlu0 %v2150, 94
        %v2156 = vpop.permute.xlu0 %2155
        %vm2157 = vcmask 769024
        %v2158 = vsel %vm2157, %v2152, %v2154
        %v2159 = vsel %vm2157, %v2154, %v2156
        %v2162 = vsel %vm915, %v2158, 0.0
        %v2163 = vsel %vm916, %v2159, 0.0
        %v2164 = vadd.f32 %v2129, %v2162
        %v2165 = vadd.f32 %v2130, %v2163
        %s2166 = sld [smem:[#allocation4 + $0x52]]
        %v2167 = vstv %s2166
        %v2168 = vmul.f32 %v1604, %v2167
        %s2169 = sld [smem:[#allocation4 + $0x53]]
        %v2170 = vstv %s2169
        %v2171 = vmul.f32 %v1608, %v2170
        %v2172 = vadd.f32 %v2168, %v2171
        %v2174 = vlaneseq
        %v2175 = vshrl.u32 %v2174, 7
        %v2176 = vsub.s32 0, %v2175
        %v2177 = vrot.slane %v2172, %v2176
        %v2178 = vlaneseq
        %v2179 = vshrl.u32 %v2178, 7
        %v2180 = vsub.s32 1, %v2179
        %v2181 = vrot.slane %v2172, %v2180
        %v2182 = vlaneseq
        %v2183 = vshrl.u32 %v2182, 7
        %v2184 = vsub.s32 2, %v2183
        %v2185 = vrot.slane %v2172, %v2184
        %2186 = vrot.lane.b32.xlu0 %v2177, 93
        %v2187 = vpop.permute.xlu0 %2186
        %2188 = vrot.lane.b32.xlu0 %v2181, 93
        %v2189 = vpop.permute.xlu0 %2188
        %2190 = vrot.lane.b32.xlu0 %v2185, 93
        %v2191 = vpop.permute.xlu0 %2190
        %vm2192 = vcmask 760832
        %v2193 = vsel %vm2192, %v2187, %v2189
        %v2194 = vsel %vm2192, %v2189, %v2191
        %v2197 = vsel %vm956, %v2193, 0.0
        %v2198 = vsel %vm957, %v2194, 0.0
        %v2199 = vadd.f32 %v2164, %v2197
        %v2200 = vadd.f32 %v2165, %v2198
        %s2201 = sld [smem:[#allocation4 + $0x54]]
        %v2202 = vstv %s2201
        %v2203 = vmul.f32 %v1604, %v2202
        %s2204 = sld [smem:[#allocation4 + $0x55]]
        %v2205 = vstv %s2204
        %v2206 = vmul.f32 %v1608, %v2205
        %v2207 = vadd.f32 %v2203, %v2206
        %v2209 = vlaneseq
        %v2210 = vshrl.u32 %v2209, 7
        %v2211 = vsub.s32 0, %v2210
        %v2212 = vrot.slane %v2207, %v2211
        %v2213 = vlaneseq
        %v2214 = vshrl.u32 %v2213, 7
        %v2215 = vsub.s32 1, %v2214
        %v2216 = vrot.slane %v2207, %v2215
        %v2217 = vlaneseq
        %v2218 = vshrl.u32 %v2217, 7
        %v2219 = vsub.s32 2, %v2218
        %v2220 = vrot.slane %v2207, %v2219
        %2221 = vrot.lane.b32.xlu0 %v2212, 83
        %v2222 = vpop.permute.xlu0 %2221
        %2223 = vrot.lane.b32.xlu0 %v2216, 83
        %v2224 = vpop.permute.xlu0 %2223
        %2225 = vrot.lane.b32.xlu0 %v2220, 83
        %v2226 = vpop.permute.xlu0 %2225
        %vm2227 = vcmask 678912
        %v2228 = vsel %vm2227, %v2222, %v2224
        %v2229 = vsel %vm2227, %v2224, %v2226
        %v2232 = vsel %vm710, %v2228, 0.0
        %v2233 = vsel %vm711, %v2229, 0.0
        %v2234 = vadd.f32 %v2199, %v2232
        %v2235 = vadd.f32 %v2200, %v2233
        %s2236 = sld [smem:[#allocation4 + $0x56]]
        %v2237 = vstv %s2236
        %v2238 = vmul.f32 %v1604, %v2237
        %s2239 = sld [smem:[#allocation4 + $0x57]]
        %v2240 = vstv %s2239
        %v2241 = vmul.f32 %v1608, %v2240
        %v2242 = vadd.f32 %v2238, %v2241
        %v2244 = vlaneseq
        %v2245 = vshrl.u32 %v2244, 7
        %v2246 = vsub.s32 0, %v2245
        %v2247 = vrot.slane %v2242, %v2246
        %v2248 = vlaneseq
        %v2249 = vshrl.u32 %v2248, 7
        %v2250 = vsub.s32 1, %v2249
        %v2251 = vrot.slane %v2242, %v2250
        %v2252 = vlaneseq
        %v2253 = vshrl.u32 %v2252, 7
        %v2254 = vsub.s32 2, %v2253
        %v2255 = vrot.slane %v2242, %v2254
        %2256 = vrot.lane.b32.xlu0 %v2247, 82
        %v2257 = vpop.permute.xlu0 %2256
        %2258 = vrot.lane.b32.xlu0 %v2251, 82
        %v2259 = vpop.permute.xlu0 %2258
        %2260 = vrot.lane.b32.xlu0 %v2255, 82
        %v2261 = vpop.permute.xlu0 %2260
        %vm2262 = vcmask 670720
        %v2263 = vsel %vm2262, %v2257, %v2259
        %v2264 = vsel %vm2262, %v2259, %v2261
        %v2267 = vsel %vm751, %v2263, 0.0
        %v2268 = vsel %vm752, %v2264, 0.0
        %v2269 = vadd.f32 %v2234, %v2267
        %v2270 = vadd.f32 %v2235, %v2268
        %s2271 = sld [smem:[#allocation4 + $0x58]]
        %v2272 = vstv %s2271
        %v2273 = vmul.f32 %v1604, %v2272
        %s2274 = sld [smem:[#allocation4 + $0x59]]
        %v2275 = vstv %s2274
        %v2276 = vmul.f32 %v1608, %v2275
        %v2277 = vadd.f32 %v2273, %v2276
        %v2279 = vlaneseq
        %v2280 = vshrl.u32 %v2279, 7
        %v2281 = vsub.s32 0, %v2280
        %v2282 = vrot.slane %v2277, %v2281
        %v2283 = vlaneseq
        %v2284 = vshrl.u32 %v2283, 7
        %v2285 = vsub.s32 1, %v2284
        %v2286 = vrot.slane %v2277, %v2285
        %v2287 = vlaneseq
        %v2288 = vshrl.u32 %v2287, 7
        %v2289 = vsub.s32 2, %v2288
        %v2290 = vrot.slane %v2277, %v2289
        %2291 = vrot.lane.b32.xlu0 %v2282, 81
        %v2292 = vpop.permute.xlu0 %2291
        %2293 = vrot.lane.b32.xlu0 %v2286, 81
        %v2294 = vpop.permute.xlu0 %2293
        %2295 = vrot.lane.b32.xlu0 %v2290, 81
        %v2296 = vpop.permute.xlu0 %2295
        %vm2297 = vcmask 662528
        %v2298 = vsel %vm2297, %v2292, %v2294
        %v2299 = vsel %vm2297, %v2294, %v2296
        %v2302 = vsel %vm792, %v2298, 0.0
        %v2303 = vsel %vm793, %v2299, 0.0
        %v2304 = vadd.f32 %v2269, %v2302
        %v2305 = vadd.f32 %v2270, %v2303
        %s2306 = sld [smem:[#allocation4 + $0x5a]]
        %v2307 = vstv %s2306
        %v2308 = vmul.f32 %v1604, %v2307
        %s2309 = sld [smem:[#allocation4 + $0x5b]]
        %v2310 = vstv %s2309
        %v2311 = vmul.f32 %v1608, %v2310
        %v2312 = vadd.f32 %v2308, %v2311
        %v2314 = vlaneseq
        %v2315 = vshrl.u32 %v2314, 7
        %v2316 = vsub.s32 0, %v2315
        %v2317 = vrot.slane %v2312, %v2316
        %v2318 = vlaneseq
        %v2319 = vshrl.u32 %v2318, 7
        %v2320 = vsub.s32 1, %v2319
        %v2321 = vrot.slane %v2312, %v2320
        %v2322 = vlaneseq
        %v2323 = vshrl.u32 %v2322, 7
        %v2324 = vsub.s32 2, %v2323
        %v2325 = vrot.slane %v2312, %v2324
        %2326 = vrot.lane.b32.xlu0 %v2317, 80
        %v2327 = vpop.permute.xlu0 %2326
        %2328 = vrot.lane.b32.xlu0 %v2321, 80
        %v2329 = vpop.permute.xlu0 %2328
        %2330 = vrot.lane.b32.xlu0 %v2325, 80
        %v2331 = vpop.permute.xlu0 %2330
        %vm2332 = vcmask 654336
        %v2333 = vsel %vm2332, %v2327, %v2329
        %v2334 = vsel %vm2332, %v2329, %v2331
        %v2337 = vsel %vm833, %v2333, 0.0
        %v2338 = vsel %vm834, %v2334, 0.0
        %v2339 = vadd.f32 %v2304, %v2337
        %v2340 = vadd.f32 %v2305, %v2338
        %s2341 = sld [smem:[#allocation4 + $0x5c]]
        %v2342 = vstv %s2341
        %v2343 = vmul.f32 %v1604, %v2342
        %s2344 = sld [smem:[#allocation4 + $0x5d]]
        %v2345 = vstv %s2344
        %v2346 = vmul.f32 %v1608, %v2345
        %v2347 = vadd.f32 %v2343, %v2346
        %v2349 = vlaneseq
        %v2350 = vshrl.u32 %v2349, 7
        %v2351 = vsub.s32 0, %v2350
        %v2352 = vrot.slane %v2347, %v2351
        %v2353 = vlaneseq
        %v2354 = vshrl.u32 %v2353, 7
        %v2355 = vsub.s32 1, %v2354
        %v2356 = vrot.slane %v2347, %v2355
        %v2357 = vlaneseq
        %v2358 = vshrl.u32 %v2357, 7
        %v2359 = vsub.s32 2, %v2358
        %v2360 = vrot.slane %v2347, %v2359
        %2361 = vrot.lane.b32.xlu0 %v2352, 79
        %v2362 = vpop.permute.xlu0 %2361
        %2363 = vrot.lane.b32.xlu0 %v2356, 79
        %v2364 = vpop.permute.xlu0 %2363
        %2365 = vrot.lane.b32.xlu0 %v2360, 79
        %v2366 = vpop.permute.xlu0 %2365
        %vm2367 = vcmask 646144
        %v2368 = vsel %vm2367, %v2362, %v2364
        %v2369 = vsel %vm2367, %v2364, %v2366
        %v2372 = vsel %vm874, %v2368, 0.0
        %v2373 = vsel %vm875, %v2369, 0.0
        %v2374 = vadd.f32 %v2339, %v2372
        %v2375 = vadd.f32 %v2340, %v2373
        %s2376 = sld [smem:[#allocation4 + $0x5e]]
        %v2377 = vstv %s2376
        %v2378 = vmul.f32 %v1604, %v2377
        %s2379 = sld [smem:[#allocation4 + $0x5f]]
        %v2380 = vstv %s2379
        %v2381 = vmul.f32 %v1608, %v2380
        %v2382 = vadd.f32 %v2378, %v2381
        %v2384 = vlaneseq
        %v2385 = vshrl.u32 %v2384, 7
        %v2386 = vsub.s32 0, %v2385
        %v2387 = vrot.slane %v2382, %v2386
        %v2388 = vlaneseq
        %v2389 = vshrl.u32 %v2388, 7
        %v2390 = vsub.s32 1, %v2389
        %v2391 = vrot.slane %v2382, %v2390
        %v2392 = vlaneseq
        %v2393 = vshrl.u32 %v2392, 7
        %v2394 = vsub.s32 2, %v2393
        %v2395 = vrot.slane %v2382, %v2394
        %2396 = vrot.lane.b32.xlu0 %v2387, 78
        %v2397 = vpop.permute.xlu0 %2396
        %2398 = vrot.lane.b32.xlu0 %v2391, 78
        %v2399 = vpop.permute.xlu0 %2398
        %2400 = vrot.lane.b32.xlu0 %v2395, 78
        %v2401 = vpop.permute.xlu0 %2400
        %vm2402 = vcmask 637952
        %v2403 = vsel %vm2402, %v2397, %v2399
        %v2404 = vsel %vm2402, %v2399, %v2401
        %v2407 = vsel %vm915, %v2403, 0.0
        %v2408 = vsel %vm916, %v2404, 0.0
        %v2409 = vadd.f32 %v2374, %v2407
        %v2410 = vadd.f32 %v2375, %v2408
        %s2411 = sld [smem:[#allocation4 + $0x60]]
        %v2412 = vstv %s2411
        %v2413 = vmul.f32 %v1604, %v2412
        %s2414 = sld [smem:[#allocation4 + $0x61]]
        %v2415 = vstv %s2414
        %v2416 = vmul.f32 %v1608, %v2415
        %v2417 = vadd.f32 %v2413, %v2416
        %v2419 = vlaneseq
        %v2420 = vshrl.u32 %v2419, 7
        %v2421 = vsub.s32 0, %v2420
        %v2422 = vrot.slane %v2417, %v2421
        %v2423 = vlaneseq
        %v2424 = vshrl.u32 %v2423, 7
        %v2425 = vsub.s32 1, %v2424
        %v2426 = vrot.slane %v2417, %v2425
        %v2427 = vlaneseq
        %v2428 = vshrl.u32 %v2427, 7
        %v2429 = vsub.s32 2, %v2428
        %v2430 = vrot.slane %v2417, %v2429
        %2431 = vrot.lane.b32.xlu0 %v2422, 77
        %v2432 = vpop.permute.xlu0 %2431
        %2433 = vrot.lane.b32.xlu0 %v2426, 77
        %v2434 = vpop.permute.xlu0 %2433
        %2435 = vrot.lane.b32.xlu0 %v2430, 77
        %v2436 = vpop.permute.xlu0 %2435
        %vm2437 = vcmask 629760
        %v2438 = vsel %vm2437, %v2432, %v2434
        %v2439 = vsel %vm2437, %v2434, %v2436
        %v2442 = vsel %vm956, %v2438, 0.0
        %v2443 = vsel %vm957, %v2439, 0.0
        %v2444 = vadd.f32 %v2409, %v2442
        %v2445 = vadd.f32 %v2410, %v2443
        %v2446 = vxor.u32 %v2444, 2147483648
        %v2447 = vxor.u32 %v2445, 2147483648
        %v2448 = vmul.f32 %v2446, 1.442695
        %v2449 = vpow.pop %v2448
        %v2450 = vmul.f32 %v2447, 1.442695
        %v2451 = vpow.pop %v2450
        %v2452 = vadd.f32 %v2449, 1.0
        %v2453 = vadd.f32 %v2451, 1.0
        %v2454 = vrcp.pop %v2452
        %v2455 = vmul.f32 1.0, %v2454
        %v2456 = vrcp.pop %v2453
        %v2457 = vmul.f32 1.0, %v2456
        %v2458 = vlaneseq
        %v2459 = vshrl.u32 %v2458, 7
        %v2460 = vsub.s32 0, %v2459
        %v2461 = vrot.slane %v2455, %v2460
        %v2462 = vlaneseq
        %v2463 = vshrl.u32 %v2462, 7
        %v2464 = vsub.s32 0, %v2463
        %v2465 = vrot.slane %v2457, %v2464
        %v2466 = vmul.f32 %v551, %v2461
        %v2467 = vmul.f32 %v552, %v2465
        %v2468 = vmul.f32 %v553, %v2461
        %v2469 = vmul.f32 %v554, %v2465
        %v2470 = vmul.f32 %v555, %v2461
        %v2471 = vmul.f32 %v556, %v2465
        %v2472 = vmul.f32 %v557, %v2461
        %v2473 = vmul.f32 %v558, %v2465
        %v2474 = vmul.f32 %v559, %v2461
        %v2475 = vmul.f32 %v560, %v2465
        %v2476 = vmul.f32 %v561, %v2461
        %v2477 = vmul.f32 %v562, %v2465
        %v2478 = vmul.f32 %v563, %v2461
        %v2479 = vmul.f32 %v564, %v2465
        %v2480 = vmul.f32 %v565, %v2461
        %v2481 = vmul.f32 %v566, %v2465
        %2482 = vst [vmem:[%s265] sm:$0xff] %v2466
        %2483 = vst [vmem:[%s265 + $0x8] sm:$0xff] %v2467
        %2484 = vst [vmem:[%s265 + $0x10] sm:$0xff] %v2468
        %2485 = vst [vmem:[%s265 + $0x18] sm:$0xff] %v2469
        %2486 = vst [vmem:[%s265 + $0x20] sm:$0xff] %v2470
        %2487 = vst [vmem:[%s265 + $0x28] sm:$0xff] %v2471
        %2488 = vst [vmem:[%s265 + $0x30] sm:$0xff] %v2472
        %2489 = vst [vmem:[%s265 + $0x38] sm:$0xff] %v2473
        %2490 = vst [vmem:[%s265 + $0x40] sm:$0xff] %v2474
        %2491 = vst [vmem:[%s265 + $0x48] sm:$0xff] %v2475
        %2492 = vst [vmem:[%s265 + $0x50] sm:$0xff] %v2476
        %2493 = vst [vmem:[%s265 + $0x58] sm:$0xff] %v2477
        %2494 = vst [vmem:[%s265 + $0x60] sm:$0xff] %v2478
        %2495 = vst [vmem:[%s265 + $0x68] sm:$0xff] %v2479
        %2496 = vst [vmem:[%s265 + $0x70] sm:$0xff] %v2480
        %2497 = vst [vmem:[%s265 + $0x78] sm:$0xff] %v2481
        %p2498 = scmp.lt.s32.totalorder %s18, 1
        %s2499 = scalar_select %p2498, %s18, 1
        %s2500 = smul.addr %s2499, 16
        %s2501 = smul.addr %s2500, 8
        %s2502 = scalar_lea.vmem %s6, %s2501
        // Predicated region
        $region49: #{_lambda_.1} parent=43 // pred_check
          %p2503 = pneg %p167
        $region50: #{_lambda_.1} parent=43 // pred_check_branch
          %2505 = sbr.rel (%p2503) target = $region52
        $region51: #{_lambda_.1} parent=43 // pred_region
          _
        $region52: #{_lambda_.1} parent=43 // pred_fallthru
          _
      $region44: #{_lambda_.1} parent=5 // pred_fallthru
        _
      %p2506 = scmp.le.s32.totalorder 2, %s13
      // Predicated region
      $region53: #{_lambda_.1} parent=5 // pred_check
        %p2507 = pneg %p2506
      $region54: #{_lambda_.1} parent=5 // pred_check_branch
        %2509 = sbr.rel (%p2507) target = $region56
      $region55: #{_lambda_.1} parent=5 // pred_region
        %s2510 = ssub.s32 %s13, 2
        // Predicated region
        $region57: #{_lambda_.1} parent=55 // pred_check
          %p2511 = pneg %p173
        $region58: #{_lambda_.1} parent=55 // pred_check_branch
          %2513 = sbr.rel (%p2511) target = $region60
        $region59: #{_lambda_.1} parent=55 // pred_region
          %p2514 = scmp.lt.s32.totalorder %s19, 1
          %s2515 = scalar_select %p2514, %s19, 1
          %s2516 = smul.addr %s2515, 16
          %s2517 = smul.addr %s2516, 8
          %s2518 = scalar_lea.vmem %s6, %s2517
        $region60: #{_lambda_.1} parent=55 // pred_fallthru
          _
      $region56: #{_lambda_.1} parent=5 // pred_fallthru
        _
    $region6: #{_lambda_.1} parent=1 // loop_footer
      %s17 = sadd.s32 1, %s13
    $region7: #{_lambda_.1} parent=1 // loop_footer_branch
      %12 = sbr.rel target = $region3
    $region8: #{_lambda_.1} parent=1 // loop_exit
      _
    %2519 = vsyncpa [#allocation5], 1
    %s2520 = scalar_lea.sflag [#allocation5], 1
    %2521 = vsyncpa %s2520, 1

</llo_original>
